<compile_context>
chip_gen: v6e
topology: v6e:2x2x1
jax: 0.10.0
libtpu: 0.0.40
codegen_flags: <defaults>
</compile_context>

<pallas_src>
import functools

import jax
import jax.numpy as jnp
from jax.experimental import pallas as pl
from jax.experimental.pallas import tpu as pltpu

LANE = 128
SUBLANE_BF16 = 16


def _round_up(x, m):
    return ((x + m - 1) // m) * m


def _elu(x):
    # ELU(alpha=1). exp argument clamped to <= 0 so the discarded branch cannot overflow.
    return jnp.where(x > 0, x, jnp.exp(jnp.minimum(x, 0.0)) - 1.0)


# ----------------------------------------------------------------------------- kernel
def residual_ensemble_kernel(x_ref, wi_ref, bi_ref, wb_ref, bb_ref, wo_ref, bo_ref,
                             o_ref, *, num_blocks, num_members, inv_members,
                             compute_dtype):
    x = x_ref[...]                                                    # (tb, D_in) compute_dtype

    # Ensemble sum accumulated in registers; single store at the end.
    acc = jnp.zeros(o_ref.shape, jnp.float32)

    for m in range(num_members):                                      # statically unrolled
        # initial_layer: bf16 operands, f32 MXU accumulation
        h = jnp.dot(x, wi_ref[m], preferred_element_type=jnp.float32) + bi_ref[m]

        # residual blocks (activation = ELU, dropout = identity), statically unrolled
        for blk in range(num_blocks):
            t = _elu(h)
            t = jnp.dot(t.astype(compute_dtype), wb_ref[m, 2 * blk],
                        preferred_element_type=jnp.float32) + bb_ref[m, 2 * blk]
            t = _elu(t)
            t = jnp.dot(t.astype(compute_dtype), wb_ref[m, 2 * blk + 1],
                        preferred_element_type=jnp.float32) + bb_ref[m, 2 * blk + 1]
            h = h + t

        # output head (lane-dense padded feature axis)
        acc = acc + (jnp.dot(h.astype(compute_dtype), wo_ref[m],
                             preferred_element_type=jnp.float32) + bo_ref[m])

    # ensemble mean: 1/M fused into the single output store
    o_ref[...] = acc * inv_members


# --------------------------------------------------------------------- parameter setup
def init_params(key, in_features, out_features, hidden_features, num_blocks, ncomponents):
    """PyTorch-convention parameters (weights shaped (out, in)), stacked over members."""
    def linear(k, fan_in, fan_out):
        kw, kb = jax.random.split(k)
        bound = 1.0 / jnp.sqrt(jnp.float32(fan_in))
        w = jax.random.uniform(kw, (fan_out, fan_in), jnp.float32, -bound, bound)
        b = jax.random.uniform(kb, (fan_out,), jnp.float32, -bound, bound)
        return w, b

    wi, bi, wb, bb, wo, bo = [], [], [], [], [], []
    for km in jax.random.split(key, ncomponents):
        k_init, k_out, *k_blk = jax.random.split(km, 2 + 2 * num_blocks)
        w, b = linear(k_init, in_features, hidden_features)
        wi.append(w); bi.append(b)
        wbs, bbs = [], []
        for blk in range(num_blocks):
            w0, b0 = linear(k_blk[2 * blk], hidden_features, hidden_features)
            # zero_initialization=True: second linear of each block ~ U(-1e-3, 1e-3)
            kw1, kb1 = jax.random.split(k_blk[2 * blk + 1])
            w1 = jax.random.uniform(kw1, (hidden_features, hidden_features), jnp.float32, -1e-3, 1e-3)
            b1 = jax.random.uniform(kb1, (hidden_features,), jnp.float32, -1e-3, 1e-3)
            wbs += [w0, w1]; bbs += [b0, b1]
        wb.append(jnp.stack(wbs)); bb.append(jnp.stack(bbs))
        w, b = linear(k_out, hidden_features, out_features)
        wo.append(w); bo.append(b)

    return dict(w_init=jnp.stack(wi), b_init=jnp.stack(bi),
                w_blocks=jnp.stack(wb), b_blocks=jnp.stack(bb),
                w_out=jnp.stack(wo), b_out=jnp.stack(bo))


def pack_params(params, compute_dtype=jnp.bfloat16):
    """One-time repack (hoisted out of the forward): transpose weights to (in, out),
    cast matmul operands to compute_dtype, zero-pad hidden and output feature axes
    to multiples of 128 (lane-dense; exact semantics since ELU(0)=0)."""
    M, out_features, H = params["w_out"].shape
    h_pad = _round_up(H, LANE)
    d_out_pad = _round_up(out_features, LANE)
    ph = h_pad - H
    po = d_out_pad - out_features

    # initial layer: (M, D_in, H_pad)
    w_init = jnp.transpose(params["w_init"], (0, 2, 1))
    w_init = jnp.pad(w_init, ((0, 0), (0, 0), (0, ph))).astype(compute_dtype)
    b_init = jnp.pad(params["b_init"], ((0, 0), (0, ph)))[:, None, :].astype(jnp.float32)

    # residual blocks: (M, 2*nb, H_pad, H_pad)
    w_blocks = jnp.transpose(params["w_blocks"], (0, 1, 3, 2))
    w_blocks = jnp.pad(w_blocks, ((0, 0), (0, 0), (0, ph), (0, ph))).astype(compute_dtype)
    b_blocks = jnp.pad(params["b_blocks"], ((0, 0), (0, 0), (0, ph)))
    b_blocks = b_blocks[:, :, None, :].astype(jnp.float32)

    # output head: (M, H_pad, D_out_pad)
    w_out = jnp.transpose(params["w_out"], (0, 2, 1))
    w_out = jnp.pad(w_out, ((0, 0), (0, ph), (0, po))).astype(compute_dtype)
    b_out = jnp.pad(params["b_out"], ((0, 0), (0, po)))[:, None, :].astype(jnp.float32)

    return dict(w_init=w_init, b_init=b_init, w_blocks=w_blocks, b_blocks=b_blocks,
                w_out=w_out, b_out=b_out,
                out_features=out_features, compute_dtype=compute_dtype)


# -------------------------------------------------------------------------- forward
def _choose_batch_tile(B, tb_max):
    """Balanced batch tiles: minimize padding, >=2 tiles when B > 32 (v7x megacore)."""
    n_tiles = pl.cdiv(B, tb_max)
    if B > 32:
        n_tiles = max(n_tiles, 2)
    tb = _round_up(pl.cdiv(B, n_tiles), SUBLANE_BF16)
    b_pad = _round_up(B, tb)
    return tb, b_pad


def residual_ensemble_forward(x, packed, *, tb_max=1024):
    """x: (B, in_features) float32  ->  (B, out_features) float32 (ensemble mean)."""
    B, d_in = x.shape
    M, _, h_pad = packed["w_init"].shape
    d_out_pad = packed["w_out"].shape[-1]
    out_features = packed["out_features"]
    compute_dtype = packed["compute_dtype"]
    num_blocks = packed["w_blocks"].shape[1] // 2

    tb, b_pad = _choose_batch_tile(B, tb_max)
    x_p = x.astype(compute_dtype)
    if b_pad != B:
        x_p = jnp.pad(x_p, ((0, b_pad - B), (0, 0)))

    # VMEM budget derived from actual block sizes (double-buffered IO + resident
    # weights + f32 intermediates), clamped to 48 MiB for v7x's 64 MiB physical VMEM.
    def _nbytes(a):
        return int(a.size) * a.dtype.itemsize
    weight_bytes = sum(_nbytes(packed[k]) for k in
                       ("w_init", "b_init", "w_blocks", "b_blocks", "w_out", "b_out"))
    io_bytes = tb * d_in * 2 + tb * d_out_pad * 4
    scratch_bytes = 4 * tb * h_pad * 4
    vmem_limit = int(min(48 << 20,
                         max(16 << 20,
                             2 * (weight_bytes + io_bytes) + scratch_bytes + (4 << 20))))

    kernel = functools.partial(
        residual_ensemble_kernel,
        num_blocks=num_blocks,
        num_members=M,
        inv_members=1.0 / M,
        compute_dtype=compute_dtype,
    )

    out = pl.pallas_call(
        kernel,
        out_shape=jax.ShapeDtypeStruct((b_pad, d_out_pad), jnp.float32),
        grid_spec=pltpu.PrefetchScalarGridSpec(
            num_scalar_prefetch=0,
            grid=(b_pad // tb,),
            in_specs=[
                pl.BlockSpec((tb, d_in), lambda i: (i, 0)),                           # x
                # Weight blocks: full-M, constant index map -> fetched once, resident.
                pl.BlockSpec((M, d_in, h_pad), lambda i: (0, 0, 0)),                  # w_init
                pl.BlockSpec((M, 1, h_pad), lambda i: (0, 0, 0)),                     # b_init
                pl.BlockSpec((M, 2 * num_blocks, h_pad, h_pad), lambda i: (0, 0, 0, 0)),  # w_blocks
                pl.BlockSpec((M, 2 * num_blocks, 1, h_pad), lambda i: (0, 0, 0, 0)),      # b_blocks
                pl.BlockSpec((M, h_pad, d_out_pad), lambda i: (0, 0, 0)),             # w_out
                pl.BlockSpec((M, 1, d_out_pad), lambda i: (0, 0, 0)),                 # b_out
            ],
            out_specs=pl.BlockSpec((tb, d_out_pad), lambda i: (i, 0)),
        ),
        compiler_params=pltpu.CompilerParams(
            dimension_semantics=("parallel",),
            vmem_limit_bytes=vmem_limit,
        ),
    )(x_p, packed["w_init"], packed["b_init"], packed["w_blocks"],
      packed["b_blocks"], packed["w_out"], packed["b_out"])

    return out[:B, :out_features]


# ------------------------------------------------------------------------- reference
def residual_ensemble_ref(x, params, compute_dtype=jnp.bfloat16):
    """Pure-JAX mirror of ResidualEmsemble.forward (default flags), with the same
    mixed precision as the kernel (bf16 matmul operands, f32 accumulation)."""
    def dot(a, w_torch, b):
        return jnp.dot(a.astype(compute_dtype), w_torch.T.astype(compute_dtype),
                       preferred_element_type=jnp.float32) + b

    M = params["w_init"].shape[0]
    num_blocks = params["w_blocks"].shape[1] // 2
    outs = []
    for mi in range(M):
        h = dot(x, params["w_init"][mi], params["b_init"][mi])
        for blk in range(num_blocks):
            t = _elu(h)
            t = dot(t, params["w_blocks"][mi, 2 * blk], params["b_blocks"][mi, 2 * blk])
            t = _elu(t)
            t = dot(t, params["w_blocks"][mi, 2 * blk + 1], params["b_blocks"][mi, 2 * blk + 1])
            h = h + t
        outs.append(dot(h, params["w_out"][mi], params["b_out"][mi]))
    return jnp.mean(jnp.stack(outs, axis=-1), axis=-1)


if __name__ == "__main__":
    key = jax.random.PRNGKey(0)
    in_features, out_features, hidden_features = 4, 3, 64
    num_blocks, ncomponents = 2, 3
    B = 64

    k_p, k_x = jax.random.split(key)
    params = init_params(k_p, in_features, out_features, hidden_features,
                         num_blocks, ncomponents)
    x = jax.random.normal(k_x, (B, in_features), dtype=jnp.float32)

    packed = pack_params(params)                      # one-time transpose/cast/pad
    out = residual_ensemble_forward(x, packed)
    out = jax.block_until_ready(out)

    ref = residual_ensemble_ref(x, params)
    assert out.shape == (B, out_features)
    err = float(jnp.max(jnp.abs(out - ref)))
    assert jnp.allclose(out, ref, atol=1e-3, rtol=1e-3), f"max abs err={err}"

    print("KERNEL_OK")
</pallas_src>

<mosaic_0001>
module attributes {stable_mosaic.version = 11 : i64} {
  func.func @residual_ensemble_kernel(%arg0: i32, %arg1: memref<32x4xbf16, #tpu.memory_space<vmem>>, %arg2: memref<3x4x128xbf16, #tpu.memory_space<vmem>>, %arg3: memref<3x1x128xf32, #tpu.memory_space<vmem>>, %arg4: memref<3x4x128x128xbf16, #tpu.memory_space<vmem>>, %arg5: memref<3x4x1x128xf32, #tpu.memory_space<vmem>>, %arg6: memref<3x128x128xbf16, #tpu.memory_space<vmem>>, %arg7: memref<3x1x128xf32, #tpu.memory_space<vmem>>, %arg8: memref<32x128xf32, #tpu.memory_space<vmem>>) attributes {dimension_semantics = [#tpu.dimension_semantics<parallel>], iteration_bounds = array<i64: 2>, scalar_prefetch = 0 : i64, scratch_operands = 0 : i64, tpu.core_type = #tpu.core_type<tc>, window_params = [{transform_indices = @transform_0, window_bounds = array<i64: 32, 4>}, {pipeline_mode = #tpu.pipeline_mode<synchronous>, transform_indices = @transform_1, window_bounds = array<i64: 3, 4, 128>}, {pipeline_mode = #tpu.pipeline_mode<synchronous>, transform_indices = @transform_2, window_bounds = array<i64: 3, 1, 128>}, {pipeline_mode = #tpu.pipeline_mode<synchronous>, transform_indices = @transform_3, window_bounds = array<i64: 3, 4, 128, 128>}, {pipeline_mode = #tpu.pipeline_mode<synchronous>, transform_indices = @transform_4, window_bounds = array<i64: 3, 4, 1, 128>}, {pipeline_mode = #tpu.pipeline_mode<synchronous>, transform_indices = @transform_5, window_bounds = array<i64: 3, 128, 128>}, {pipeline_mode = #tpu.pipeline_mode<synchronous>, transform_indices = @transform_6, window_bounds = array<i64: 3, 1, 128>}, {transform_indices = @transform_7, window_bounds = array<i64: 32, 128>}]} {
    %c0 = arith.constant 0 : index
    %c0_0 = arith.constant 0 : index
    %0 = vector.load %arg1[%c0, %c0_0] : memref<32x4xbf16, #tpu.memory_space<vmem>>, vector<32x4xbf16>
    %cst = arith.constant 0.000000e+00 : f32
    %1 = vector.broadcast %cst : f32 to vector<32x128xf32>
    %c0_1 = arith.constant 0 : index
    %c0_2 = arith.constant 0 : index
    %c0_3 = arith.constant 0 : index
    %2 = vector.load %arg2[%c0_1, %c0_2, %c0_3] : memref<3x4x128xbf16, #tpu.memory_space<vmem>>, vector<1x4x128xbf16>
    %3 = vector.shape_cast %2 : vector<1x4x128xbf16> to vector<4x128xbf16>
    %cst_4 = arith.constant dense<0.000000e+00> : vector<32x128xf32>
    %4 = tpu.matmul %0, %3, %cst_4 {dimension_numbers = #tpu.dot_dimension_numbers<[1], [0], [0], [1], [0, 0, 1, 1], [], []>} : vector<32x4xbf16>, vector<4x128xbf16>, vector<32x128xf32> -> vector<32x128xf32>
    %c0_5 = arith.constant 0 : index
    %c0_6 = arith.constant 0 : index
    %c0_7 = arith.constant 0 : index
    %5 = vector.load %arg3[%c0_5, %c0_6, %c0_7] : memref<3x1x128xf32, #tpu.memory_space<vmem>>, vector<1x1x128xf32>
    %6 = vector.shape_cast %5 : vector<1x1x128xf32> to vector<1x128xf32>
    %7 = vector.broadcast %6 : vector<1x128xf32> to vector<32x128xf32>
    %8 = arith.addf %4, %7 : vector<32x128xf32>
    %cst_8 = arith.constant 0.000000e+00 : f32
    %9 = vector.broadcast %cst_8 : f32 to vector<32x128xf32>
    %10 = arith.cmpf ogt, %8, %9 : vector<32x128xf32>
    %cst_9 = arith.constant 0.000000e+00 : f32
    %11 = vector.broadcast %cst_9 : f32 to vector<32x128xf32>
    %12 = arith.minimumf %8, %11 : vector<32x128xf32>
    %13 = math.exp %12 : vector<32x128xf32>
    %cst_10 = arith.constant 1.000000e+00 : f32
    %14 = vector.broadcast %cst_10 : f32 to vector<32x128xf32>
    %15 = arith.subf %13, %14 : vector<32x128xf32>
    %16 = arith.select %10, %8, %15 : vector<32x128xi1>, vector<32x128xf32>
    %17 = arith.truncf %16 : vector<32x128xf32> to vector<32x128xbf16>
    %c0_11 = arith.constant 0 : index
    %c0_12 = arith.constant 0 : index
    %c0_13 = arith.constant 0 : index
    %c0_14 = arith.constant 0 : index
    %18 = vector.load %arg4[%c0_11, %c0_12, %c0_13, %c0_14] : memref<3x4x128x128xbf16, #tpu.memory_space<vmem>>, vector<1x1x128x128xbf16>
    %19 = vector.shape_cast %18 : vector<1x1x128x128xbf16> to vector<128x128xbf16>
    %cst_15 = arith.constant dense<0.000000e+00> : vector<32x128xf32>
    %20 = tpu.matmul %17, %19, %cst_15 {dimension_numbers = #tpu.dot_dimension_numbers<[1], [0], [0], [1], [0, 0, 1, 1], [], []>} : vector<32x128xbf16>, vector<128x128xbf16>, vector<32x128xf32> -> vector<32x128xf32>
    %c0_16 = arith.constant 0 : index
    %c0_17 = arith.constant 0 : index
    %c0_18 = arith.constant 0 : index
    %c0_19 = arith.constant 0 : index
    %21 = vector.load %arg5[%c0_16, %c0_17, %c0_18, %c0_19] : memref<3x4x1x128xf32, #tpu.memory_space<vmem>>, vector<1x1x1x128xf32>
    %22 = vector.shape_cast %21 : vector<1x1x1x128xf32> to vector<1x128xf32>
    %23 = vector.broadcast %22 : vector<1x128xf32> to vector<32x128xf32>
    %24 = arith.addf %20, %23 : vector<32x128xf32>
    %cst_20 = arith.constant 0.000000e+00 : f32
    %25 = vector.broadcast %cst_20 : f32 to vector<32x128xf32>
    %26 = arith.cmpf ogt, %24, %25 : vector<32x128xf32>
    %cst_21 = arith.constant 0.000000e+00 : f32
    %27 = vector.broadcast %cst_21 : f32 to vector<32x128xf32>
    %28 = arith.minimumf %24, %27 : vector<32x128xf32>
    %29 = math.exp %28 : vector<32x128xf32>
    %cst_22 = arith.constant 1.000000e+00 : f32
    %30 = vector.broadcast %cst_22 : f32 to vector<32x128xf32>
    %31 = arith.subf %29, %30 : vector<32x128xf32>
    %32 = arith.select %26, %24, %31 : vector<32x128xi1>, vector<32x128xf32>
    %33 = arith.truncf %32 : vector<32x128xf32> to vector<32x128xbf16>
    %c0_23 = arith.constant 0 : index
    %c1 = arith.constant 1 : index
    %c0_24 = arith.constant 0 : index
    %c0_25 = arith.constant 0 : index
    %34 = vector.load %arg4[%c0_23, %c1, %c0_24, %c0_25] : memref<3x4x128x128xbf16, #tpu.memory_space<vmem>>, vector<1x1x128x128xbf16>
    %35 = vector.shape_cast %34 : vector<1x1x128x128xbf16> to vector<128x128xbf16>
    %cst_26 = arith.constant dense<0.000000e+00> : vector<32x128xf32>
    %36 = tpu.matmul %33, %35, %cst_26 {dimension_numbers = #tpu.dot_dimension_numbers<[1], [0], [0], [1], [0, 0, 1, 1], [], []>} : vector<32x128xbf16>, vector<128x128xbf16>, vector<32x128xf32> -> vector<32x128xf32>
    %c0_27 = arith.constant 0 : index
    %c1_28 = arith.constant 1 : index
    %c0_29 = arith.constant 0 : index
    %c0_30 = arith.constant 0 : index
    %37 = vector.load %arg5[%c0_27, %c1_28, %c0_29, %c0_30] : memref<3x4x1x128xf32, #tpu.memory_space<vmem>>, vector<1x1x1x128xf32>
    %38 = vector.shape_cast %37 : vector<1x1x1x128xf32> to vector<1x128xf32>
    %39 = vector.broadcast %38 : vector<1x128xf32> to vector<32x128xf32>
    %40 = arith.addf %36, %39 : vector<32x128xf32>
    %41 = arith.addf %8, %40 : vector<32x128xf32>
    %cst_31 = arith.constant 0.000000e+00 : f32
    %42 = vector.broadcast %cst_31 : f32 to vector<32x128xf32>
    %43 = arith.cmpf ogt, %41, %42 : vector<32x128xf32>
    %cst_32 = arith.constant 0.000000e+00 : f32
    %44 = vector.broadcast %cst_32 : f32 to vector<32x128xf32>
    %45 = arith.minimumf %41, %44 : vector<32x128xf32>
    %46 = math.exp %45 : vector<32x128xf32>
    %cst_33 = arith.constant 1.000000e+00 : f32
    %47 = vector.broadcast %cst_33 : f32 to vector<32x128xf32>
    %48 = arith.subf %46, %47 : vector<32x128xf32>
    %49 = arith.select %43, %41, %48 : vector<32x128xi1>, vector<32x128xf32>
    %50 = arith.truncf %49 : vector<32x128xf32> to vector<32x128xbf16>
    %c0_34 = arith.constant 0 : index
    %c2 = arith.constant 2 : index
    %c0_35 = arith.constant 0 : index
    %c0_36 = arith.constant 0 : index
    %51 = vector.load %arg4[%c0_34, %c2, %c0_35, %c0_36] : memref<3x4x128x128xbf16, #tpu.memory_space<vmem>>, vector<1x1x128x128xbf16>
    %52 = vector.shape_cast %51 : vector<1x1x128x128xbf16> to vector<128x128xbf16>
    %cst_37 = arith.constant dense<0.000000e+00> : vector<32x128xf32>
    %53 = tpu.matmul %50, %52, %cst_37 {dimension_numbers = #tpu.dot_dimension_numbers<[1], [0], [0], [1], [0, 0, 1, 1], [], []>} : vector<32x128xbf16>, vector<128x128xbf16>, vector<32x128xf32> -> vector<32x128xf32>
    %c0_38 = arith.constant 0 : index
    %c2_39 = arith.constant 2 : index
    %c0_40 = arith.constant 0 : index
    %c0_41 = arith.constant 0 : index
    %54 = vector.load %arg5[%c0_38, %c2_39, %c0_40, %c0_41] : memref<3x4x1x128xf32, #tpu.memory_space<vmem>>, vector<1x1x1x128xf32>
    %55 = vector.shape_cast %54 : vector<1x1x1x128xf32> to vector<1x128xf32>
    %56 = vector.broadcast %55 : vector<1x128xf32> to vector<32x128xf32>
    %57 = arith.addf %53, %56 : vector<32x128xf32>
    %cst_42 = arith.constant 0.000000e+00 : f32
    %58 = vector.broadcast %cst_42 : f32 to vector<32x128xf32>
    %59 = arith.cmpf ogt, %57, %58 : vector<32x128xf32>
    %cst_43 = arith.constant 0.000000e+00 : f32
    %60 = vector.broadcast %cst_43 : f32 to vector<32x128xf32>
    %61 = arith.minimumf %57, %60 : vector<32x128xf32>
    %62 = math.exp %61 : vector<32x128xf32>
    %cst_44 = arith.constant 1.000000e+00 : f32
    %63 = vector.broadcast %cst_44 : f32 to vector<32x128xf32>
    %64 = arith.subf %62, %63 : vector<32x128xf32>
    %65 = arith.select %59, %57, %64 : vector<32x128xi1>, vector<32x128xf32>
    %66 = arith.truncf %65 : vector<32x128xf32> to vector<32x128xbf16>
    %c0_45 = arith.constant 0 : index
    %c3 = arith.constant 3 : index
    %c0_46 = arith.constant 0 : index
    %c0_47 = arith.constant 0 : index
    %67 = vector.load %arg4[%c0_45, %c3, %c0_46, %c0_47] : memref<3x4x128x128xbf16, #tpu.memory_space<vmem>>, vector<1x1x128x128xbf16>
    %68 = vector.shape_cast %67 : vector<1x1x128x128xbf16> to vector<128x128xbf16>
    %cst_48 = arith.constant dense<0.000000e+00> : vector<32x128xf32>
    %69 = tpu.matmul %66, %68, %cst_48 {dimension_numbers = #tpu.dot_dimension_numbers<[1], [0], [0], [1], [0, 0, 1, 1], [], []>} : vector<32x128xbf16>, vector<128x128xbf16>, vector<32x128xf32> -> vector<32x128xf32>
    %c0_49 = arith.constant 0 : index
    %c3_50 = arith.constant 3 : index
    %c0_51 = arith.constant 0 : index
    %c0_52 = arith.constant 0 : index
    %70 = vector.load %arg5[%c0_49, %c3_50, %c0_51, %c0_52] : memref<3x4x1x128xf32, #tpu.memory_space<vmem>>, vector<1x1x1x128xf32>
    %71 = vector.shape_cast %70 : vector<1x1x1x128xf32> to vector<1x128xf32>
    %72 = vector.broadcast %71 : vector<1x128xf32> to vector<32x128xf32>
    %73 = arith.addf %69, %72 : vector<32x128xf32>
    %74 = arith.addf %41, %73 : vector<32x128xf32>
    %75 = arith.truncf %74 : vector<32x128xf32> to vector<32x128xbf16>
    %c0_53 = arith.constant 0 : index
    %c0_54 = arith.constant 0 : index
    %c0_55 = arith.constant 0 : index
    %76 = vector.load %arg6[%c0_53, %c0_54, %c0_55] : memref<3x128x128xbf16, #tpu.memory_space<vmem>>, vector<1x128x128xbf16>
    %77 = vector.shape_cast %76 : vector<1x128x128xbf16> to vector<128x128xbf16>
    %cst_56 = arith.constant dense<0.000000e+00> : vector<32x128xf32>
    %78 = tpu.matmul %75, %77, %cst_56 {dimension_numbers = #tpu.dot_dimension_numbers<[1], [0], [0], [1], [0, 0, 1, 1], [], []>} : vector<32x128xbf16>, vector<128x128xbf16>, vector<32x128xf32> -> vector<32x128xf32>
    %c0_57 = arith.constant 0 : index
    %c0_58 = arith.constant 0 : index
    %c0_59 = arith.constant 0 : index
    %79 = vector.load %arg7[%c0_57, %c0_58, %c0_59] : memref<3x1x128xf32, #tpu.memory_space<vmem>>, vector<1x1x128xf32>
    %80 = vector.shape_cast %79 : vector<1x1x128xf32> to vector<1x128xf32>
    %81 = vector.broadcast %80 : vector<1x128xf32> to vector<32x128xf32>
    %82 = arith.addf %78, %81 : vector<32x128xf32>
    %83 = arith.addf %1, %82 : vector<32x128xf32>
    %c1_60 = arith.constant 1 : index
    %c0_61 = arith.constant 0 : index
    %c0_62 = arith.constant 0 : index
    %84 = vector.load %arg2[%c1_60, %c0_61, %c0_62] : memref<3x4x128xbf16, #tpu.memory_space<vmem>>, vector<1x4x128xbf16>
    %85 = vector.shape_cast %84 : vector<1x4x128xbf16> to vector<4x128xbf16>
    %cst_63 = arith.constant dense<0.000000e+00> : vector<32x128xf32>
    %86 = tpu.matmul %0, %85, %cst_63 {dimension_numbers = #tpu.dot_dimension_numbers<[1], [0], [0], [1], [0, 0, 1, 1], [], []>} : vector<32x4xbf16>, vector<4x128xbf16>, vector<32x128xf32> -> vector<32x128xf32>
    %c1_64 = arith.constant 1 : index
    %c0_65 = arith.constant 0 : index
    %c0_66 = arith.constant 0 : index
    %87 = vector.load %arg3[%c1_64, %c0_65, %c0_66] : memref<3x1x128xf32, #tpu.memory_space<vmem>>, vector<1x1x128xf32>
    %88 = vector.shape_cast %87 : vector<1x1x128xf32> to vector<1x128xf32>
    %89 = vector.broadcast %88 : vector<1x128xf32> to vector<32x128xf32>
    %90 = arith.addf %86, %89 : vector<32x128xf32>
    %cst_67 = arith.constant 0.000000e+00 : f32
    %91 = vector.broadcast %cst_67 : f32 to vector<32x128xf32>
    %92 = arith.cmpf ogt, %90, %91 : vector<32x128xf32>
    %cst_68 = arith.constant 0.000000e+00 : f32
    %93 = vector.broadcast %cst_68 : f32 to vector<32x128xf32>
    %94 = arith.minimumf %90, %93 : vector<32x128xf32>
    %95 = math.exp %94 : vector<32x128xf32>
    %cst_69 = arith.constant 1.000000e+00 : f32
    %96 = vector.broadcast %cst_69 : f32 to vector<32x128xf32>
    %97 = arith.subf %95, %96 : vector<32x128xf32>
    %98 = arith.select %92, %90, %97 : vector<32x128xi1>, vector<32x128xf32>
    %99 = arith.truncf %98 : vector<32x128xf32> to vector<32x128xbf16>
    %c1_70 = arith.constant 1 : index
    %c0_71 = arith.constant 0 : index
    %c0_72 = arith.constant 0 : index
    %c0_73 = arith.constant 0 : index
    %100 = vector.load %arg4[%c1_70, %c0_71, %c0_72, %c0_73] : memref<3x4x128x128xbf16, #tpu.memory_space<vmem>>, vector<1x1x128x128xbf16>
    %101 = vector.shape_cast %100 : vector<1x1x128x128xbf16> to vector<128x128xbf16>
    %cst_74 = arith.constant dense<0.000000e+00> : vector<32x128xf32>
    %102 = tpu.matmul %99, %101, %cst_74 {dimension_numbers = #tpu.dot_dimension_numbers<[1], [0], [0], [1], [0, 0, 1, 1], [], []>} : vector<32x128xbf16>, vector<128x128xbf16>, vector<32x128xf32> -> vector<32x128xf32>
    %c1_75 = arith.constant 1 : index
    %c0_76 = arith.constant 0 : index
    %c0_77 = arith.constant 0 : index
    %c0_78 = arith.constant 0 : index
    %103 = vector.load %arg5[%c1_75, %c0_76, %c0_77, %c0_78] : memref<3x4x1x128xf32, #tpu.memory_space<vmem>>, vector<1x1x1x128xf32>
    %104 = vector.shape_cast %103 : vector<1x1x1x128xf32> to vector<1x128xf32>
    %105 = vector.broadcast %104 : vector<1x128xf32> to vector<32x128xf32>
    %106 = arith.addf %102, %105 : vector<32x128xf32>
    %cst_79 = arith.constant 0.000000e+00 : f32
    %107 = vector.broadcast %cst_79 : f32 to vector<32x128xf32>
    %108 = arith.cmpf ogt, %106, %107 : vector<32x128xf32>
    %cst_80 = arith.constant 0.000000e+00 : f32
    %109 = vector.broadcast %cst_80 : f32 to vector<32x128xf32>
    %110 = arith.minimumf %106, %109 : vector<32x128xf32>
    %111 = math.exp %110 : vector<32x128xf32>
    %cst_81 = arith.constant 1.000000e+00 : f32
    %112 = vector.broadcast %cst_81 : f32 to vector<32x128xf32>
    %113 = arith.subf %111, %112 : vector<32x128xf32>
    %114 = arith.select %108, %106, %113 : vector<32x128xi1>, vector<32x128xf32>
    %115 = arith.truncf %114 : vector<32x128xf32> to vector<32x128xbf16>
    %c1_82 = arith.constant 1 : index
    %c1_83 = arith.constant 1 : index
    %c0_84 = arith.constant 0 : index
    %c0_85 = arith.constant 0 : index
    %116 = vector.load %arg4[%c1_82, %c1_83, %c0_84, %c0_85] : memref<3x4x128x128xbf16, #tpu.memory_space<vmem>>, vector<1x1x128x128xbf16>
    %117 = vector.shape_cast %116 : vector<1x1x128x128xbf16> to vector<128x128xbf16>
    %cst_86 = arith.constant dense<0.000000e+00> : vector<32x128xf32>
    %118 = tpu.matmul %115, %117, %cst_86 {dimension_numbers = #tpu.dot_dimension_numbers<[1], [0], [0], [1], [0, 0, 1, 1], [], []>} : vector<32x128xbf16>, vector<128x128xbf16>, vector<32x128xf32> -> vector<32x128xf32>
    %c1_87 = arith.constant 1 : index
    %c1_88 = arith.constant 1 : index
    %c0_89 = arith.constant 0 : index
    %c0_90 = arith.constant 0 : index
    %119 = vector.load %arg5[%c1_87, %c1_88, %c0_89, %c0_90] : memref<3x4x1x128xf32, #tpu.memory_space<vmem>>, vector<1x1x1x128xf32>
    %120 = vector.shape_cast %119 : vector<1x1x1x128xf32> to vector<1x128xf32>
    %121 = vector.broadcast %120 : vector<1x128xf32> to vector<32x128xf32>
    %122 = arith.addf %118, %121 : vector<32x128xf32>
    %123 = arith.addf %90, %122 : vector<32x128xf32>
    %cst_91 = arith.constant 0.000000e+00 : f32
    %124 = vector.broadcast %cst_91 : f32 to vector<32x128xf32>
    %125 = arith.cmpf ogt, %123, %124 : vector<32x128xf32>
    %cst_92 = arith.constant 0.000000e+00 : f32
    %126 = vector.broadcast %cst_92 : f32 to vector<32x128xf32>
    %127 = arith.minimumf %123, %126 : vector<32x128xf32>
    %128 = math.exp %127 : vector<32x128xf32>
    %cst_93 = arith.constant 1.000000e+00 : f32
    %129 = vector.broadcast %cst_93 : f32 to vector<32x128xf32>
    %130 = arith.subf %128, %129 : vector<32x128xf32>
    %131 = arith.select %125, %123, %130 : vector<32x128xi1>, vector<32x128xf32>
    %132 = arith.truncf %131 : vector<32x128xf32> to vector<32x128xbf16>
    %c1_94 = arith.constant 1 : index
    %c2_95 = arith.constant 2 : index
    %c0_96 = arith.constant 0 : index
    %c0_97 = arith.constant 0 : index
    %133 = vector.load %arg4[%c1_94, %c2_95, %c0_96, %c0_97] : memref<3x4x128x128xbf16, #tpu.memory_space<vmem>>, vector<1x1x128x128xbf16>
    %134 = vector.shape_cast %133 : vector<1x1x128x128xbf16> to vector<128x128xbf16>
    %cst_98 = arith.constant dense<0.000000e+00> : vector<32x128xf32>
    %135 = tpu.matmul %132, %134, %cst_98 {dimension_numbers = #tpu.dot_dimension_numbers<[1], [0], [0], [1], [0, 0, 1, 1], [], []>} : vector<32x128xbf16>, vector<128x128xbf16>, vector<32x128xf32> -> vector<32x128xf32>
    %c1_99 = arith.constant 1 : index
    %c2_100 = arith.constant 2 : index
    %c0_101 = arith.constant 0 : index
    %c0_102 = arith.constant 0 : index
    %136 = vector.load %arg5[%c1_99, %c2_100, %c0_101, %c0_102] : memref<3x4x1x128xf32, #tpu.memory_space<vmem>>, vector<1x1x1x128xf32>
    %137 = vector.shape_cast %136 : vector<1x1x1x128xf32> to vector<1x128xf32>
    %138 = vector.broadcast %137 : vector<1x128xf32> to vector<32x128xf32>
    %139 = arith.addf %135, %138 : vector<32x128xf32>
    %cst_103 = arith.constant 0.000000e+00 : f32
    %140 = vector.broadcast %cst_103 : f32 to vector<32x128xf32>
    %141 = arith.cmpf ogt, %139, %140 : vector<32x128xf32>
    %cst_104 = arith.constant 0.000000e+00 : f32
    %142 = vector.broadcast %cst_104 : f32 to vector<32x128xf32>
    %143 = arith.minimumf %139, %142 : vector<32x128xf32>
    %144 = math.exp %143 : vector<32x128xf32>
    %cst_105 = arith.constant 1.000000e+00 : f32
    %145 = vector.broadcast %cst_105 : f32 to vector<32x128xf32>
    %146 = arith.subf %144, %145 : vector<32x128xf32>
    %147 = arith.select %141, %139, %146 : vector<32x128xi1>, vector<32x128xf32>
    %148 = arith.truncf %147 : vector<32x128xf32> to vector<32x128xbf16>
    %c1_106 = arith.constant 1 : index
    %c3_107 = arith.constant 3 : index
    %c0_108 = arith.constant 0 : index
    %c0_109 = arith.constant 0 : index
    %149 = vector.load %arg4[%c1_106, %c3_107, %c0_108, %c0_109] : memref<3x4x128x128xbf16, #tpu.memory_space<vmem>>, vector<1x1x128x128xbf16>
    %150 = vector.shape_cast %149 : vector<1x1x128x128xbf16> to vector<128x128xbf16>
    %cst_110 = arith.constant dense<0.000000e+00> : vector<32x128xf32>
    %151 = tpu.matmul %148, %150, %cst_110 {dimension_numbers = #tpu.dot_dimension_numbers<[1], [0], [0], [1], [0, 0, 1, 1], [], []>} : vector<32x128xbf16>, vector<128x128xbf16>, vector<32x128xf32> -> vector<32x128xf32>
    %c1_111 = arith.constant 1 : index
    %c3_112 = arith.constant 3 : index
    %c0_113 = arith.constant 0 : index
    %c0_114 = arith.constant 0 : index
    %152 = vector.load %arg5[%c1_111, %c3_112, %c0_113, %c0_114] : memref<3x4x1x128xf32, #tpu.memory_space<vmem>>, vector<1x1x1x128xf32>
    %153 = vector.shape_cast %152 : vector<1x1x1x128xf32> to vector<1x128xf32>
    %154 = vector.broadcast %153 : vector<1x128xf32> to vector<32x128xf32>
    %155 = arith.addf %151, %154 : vector<32x128xf32>
    %156 = arith.addf %123, %155 : vector<32x128xf32>
    %157 = arith.truncf %156 : vector<32x128xf32> to vector<32x128xbf16>
    %c1_115 = arith.constant 1 : index
    %c0_116 = arith.constant 0 : index
    %c0_117 = arith.constant 0 : index
    %158 = vector.load %arg6[%c1_115, %c0_116, %c0_117] : memref<3x128x128xbf16, #tpu.memory_space<vmem>>, vector<1x128x128xbf16>
    %159 = vector.shape_cast %158 : vector<1x128x128xbf16> to vector<128x128xbf16>
    %cst_118 = arith.constant dense<0.000000e+00> : vector<32x128xf32>
    %160 = tpu.matmul %157, %159, %cst_118 {dimension_numbers = #tpu.dot_dimension_numbers<[1], [0], [0], [1], [0, 0, 1, 1], [], []>} : vector<32x128xbf16>, vector<128x128xbf16>, vector<32x128xf32> -> vector<32x128xf32>
    %c1_119 = arith.constant 1 : index
    %c0_120 = arith.constant 0 : index
    %c0_121 = arith.constant 0 : index
    %161 = vector.load %arg7[%c1_119, %c0_120, %c0_121] : memref<3x1x128xf32, #tpu.memory_space<vmem>>, vector<1x1x128xf32>
    %162 = vector.shape_cast %161 : vector<1x1x128xf32> to vector<1x128xf32>
    %163 = vector.broadcast %162 : vector<1x128xf32> to vector<32x128xf32>
    %164 = arith.addf %160, %163 : vector<32x128xf32>
    %165 = arith.addf %83, %164 : vector<32x128xf32>
    %c2_122 = arith.constant 2 : index
    %c0_123 = arith.constant 0 : index
    %c0_124 = arith.constant 0 : index
    %166 = vector.load %arg2[%c2_122, %c0_123, %c0_124] : memref<3x4x128xbf16, #tpu.memory_space<vmem>>, vector<1x4x128xbf16>
    %167 = vector.shape_cast %166 : vector<1x4x128xbf16> to vector<4x128xbf16>
    %cst_125 = arith.constant dense<0.000000e+00> : vector<32x128xf32>
    %168 = tpu.matmul %0, %167, %cst_125 {dimension_numbers = #tpu.dot_dimension_numbers<[1], [0], [0], [1], [0, 0, 1, 1], [], []>} : vector<32x4xbf16>, vector<4x128xbf16>, vector<32x128xf32> -> vector<32x128xf32>
    %c2_126 = arith.constant 2 : index
    %c0_127 = arith.constant 0 : index
    %c0_128 = arith.constant 0 : index
    %169 = vector.load %arg3[%c2_126, %c0_127, %c0_128] : memref<3x1x128xf32, #tpu.memory_space<vmem>>, vector<1x1x128xf32>
    %170 = vector.shape_cast %169 : vector<1x1x128xf32> to vector<1x128xf32>
    %171 = vector.broadcast %170 : vector<1x128xf32> to vector<32x128xf32>
    %172 = arith.addf %168, %171 : vector<32x128xf32>
    %cst_129 = arith.constant 0.000000e+00 : f32
    %173 = vector.broadcast %cst_129 : f32 to vector<32x128xf32>
    %174 = arith.cmpf ogt, %172, %173 : vector<32x128xf32>
    %cst_130 = arith.constant 0.000000e+00 : f32
    %175 = vector.broadcast %cst_130 : f32 to vector<32x128xf32>
    %176 = arith.minimumf %172, %175 : vector<32x128xf32>
    %177 = math.exp %176 : vector<32x128xf32>
    %cst_131 = arith.constant 1.000000e+00 : f32
    %178 = vector.broadcast %cst_131 : f32 to vector<32x128xf32>
    %179 = arith.subf %177, %178 : vector<32x128xf32>
    %180 = arith.select %174, %172, %179 : vector<32x128xi1>, vector<32x128xf32>
    %181 = arith.truncf %180 : vector<32x128xf32> to vector<32x128xbf16>
    %c2_132 = arith.constant 2 : index
    %c0_133 = arith.constant 0 : index
    %c0_134 = arith.constant 0 : index
    %c0_135 = arith.constant 0 : index
    %182 = vector.load %arg4[%c2_132, %c0_133, %c0_134, %c0_135] : memref<3x4x128x128xbf16, #tpu.memory_space<vmem>>, vector<1x1x128x128xbf16>
    %183 = vector.shape_cast %182 : vector<1x1x128x128xbf16> to vector<128x128xbf16>
    %cst_136 = arith.constant dense<0.000000e+00> : vector<32x128xf32>
    %184 = tpu.matmul %181, %183, %cst_136 {dimension_numbers = #tpu.dot_dimension_numbers<[1], [0], [0], [1], [0, 0, 1, 1], [], []>} : vector<32x128xbf16>, vector<128x128xbf16>, vector<32x128xf32> -> vector<32x128xf32>
    %c2_137 = arith.constant 2 : index
    %c0_138 = arith.constant 0 : index
    %c0_139 = arith.constant 0 : index
    %c0_140 = arith.constant 0 : index
    %185 = vector.load %arg5[%c2_137, %c0_138, %c0_139, %c0_140] : memref<3x4x1x128xf32, #tpu.memory_space<vmem>>, vector<1x1x1x128xf32>
    %186 = vector.shape_cast %185 : vector<1x1x1x128xf32> to vector<1x128xf32>
    %187 = vector.broadcast %186 : vector<1x128xf32> to vector<32x128xf32>
    %188 = arith.addf %184, %187 : vector<32x128xf32>
    %cst_141 = arith.constant 0.000000e+00 : f32
    %189 = vector.broadcast %cst_141 : f32 to vector<32x128xf32>
    %190 = arith.cmpf ogt, %188, %189 : vector<32x128xf32>
    %cst_142 = arith.constant 0.000000e+00 : f32
    %191 = vector.broadcast %cst_142 : f32 to vector<32x128xf32>
    %192 = arith.minimumf %188, %191 : vector<32x128xf32>
    %193 = math.exp %192 : vector<32x128xf32>
    %cst_143 = arith.constant 1.000000e+00 : f32
    %194 = vector.broadcast %cst_143 : f32 to vector<32x128xf32>
    %195 = arith.subf %193, %194 : vector<32x128xf32>
    %196 = arith.select %190, %188, %195 : vector<32x128xi1>, vector<32x128xf32>
    %197 = arith.truncf %196 : vector<32x128xf32> to vector<32x128xbf16>
    %c2_144 = arith.constant 2 : index
    %c1_145 = arith.constant 1 : index
    %c0_146 = arith.constant 0 : index
    %c0_147 = arith.constant 0 : index
    %198 = vector.load %arg4[%c2_144, %c1_145, %c0_146, %c0_147] : memref<3x4x128x128xbf16, #tpu.memory_space<vmem>>, vector<1x1x128x128xbf16>
    %199 = vector.shape_cast %198 : vector<1x1x128x128xbf16> to vector<128x128xbf16>
    %cst_148 = arith.constant dense<0.000000e+00> : vector<32x128xf32>
    %200 = tpu.matmul %197, %199, %cst_148 {dimension_numbers = #tpu.dot_dimension_numbers<[1], [0], [0], [1], [0, 0, 1, 1], [], []>} : vector<32x128xbf16>, vector<128x128xbf16>, vector<32x128xf32> -> vector<32x128xf32>
    %c2_149 = arith.constant 2 : index
    %c1_150 = arith.constant 1 : index
    %c0_151 = arith.constant 0 : index
    %c0_152 = arith.constant 0 : index
    %201 = vector.load %arg5[%c2_149, %c1_150, %c0_151, %c0_152] : memref<3x4x1x128xf32, #tpu.memory_space<vmem>>, vector<1x1x1x128xf32>
    %202 = vector.shape_cast %201 : vector<1x1x1x128xf32> to vector<1x128xf32>
    %203 = vector.broadcast %202 : vector<1x128xf32> to vector<32x128xf32>
    %204 = arith.addf %200, %203 : vector<32x128xf32>
    %205 = arith.addf %172, %204 : vector<32x128xf32>
    %cst_153 = arith.constant 0.000000e+00 : f32
    %206 = vector.broadcast %cst_153 : f32 to vector<32x128xf32>
    %207 = arith.cmpf ogt, %205, %206 : vector<32x128xf32>
    %cst_154 = arith.constant 0.000000e+00 : f32
    %208 = vector.broadcast %cst_154 : f32 to vector<32x128xf32>
    %209 = arith.minimumf %205, %208 : vector<32x128xf32>
    %210 = math.exp %209 : vector<32x128xf32>
    %cst_155 = arith.constant 1.000000e+00 : f32
    %211 = vector.broadcast %cst_155 : f32 to vector<32x128xf32>
    %212 = arith.subf %210, %211 : vector<32x128xf32>
    %213 = arith.select %207, %205, %212 : vector<32x128xi1>, vector<32x128xf32>
    %214 = arith.truncf %213 : vector<32x128xf32> to vector<32x128xbf16>
    %c2_156 = arith.constant 2 : index
    %c2_157 = arith.constant 2 : index
    %c0_158 = arith.constant 0 : index
    %c0_159 = arith.constant 0 : index
    %215 = vector.load %arg4[%c2_156, %c2_157, %c0_158, %c0_159] : memref<3x4x128x128xbf16, #tpu.memory_space<vmem>>, vector<1x1x128x128xbf16>
    %216 = vector.shape_cast %215 : vector<1x1x128x128xbf16> to vector<128x128xbf16>
    %cst_160 = arith.constant dense<0.000000e+00> : vector<32x128xf32>
    %217 = tpu.matmul %214, %216, %cst_160 {dimension_numbers = #tpu.dot_dimension_numbers<[1], [0], [0], [1], [0, 0, 1, 1], [], []>} : vector<32x128xbf16>, vector<128x128xbf16>, vector<32x128xf32> -> vector<32x128xf32>
    %c2_161 = arith.constant 2 : index
    %c2_162 = arith.constant 2 : index
    %c0_163 = arith.constant 0 : index
    %c0_164 = arith.constant 0 : index
    %218 = vector.load %arg5[%c2_161, %c2_162, %c0_163, %c0_164] : memref<3x4x1x128xf32, #tpu.memory_space<vmem>>, vector<1x1x1x128xf32>
    %219 = vector.shape_cast %218 : vector<1x1x1x128xf32> to vector<1x128xf32>
    %220 = vector.broadcast %219 : vector<1x128xf32> to vector<32x128xf32>
    %221 = arith.addf %217, %220 : vector<32x128xf32>
    %cst_165 = arith.constant 0.000000e+00 : f32
    %222 = vector.broadcast %cst_165 : f32 to vector<32x128xf32>
    %223 = arith.cmpf ogt, %221, %222 : vector<32x128xf32>
    %cst_166 = arith.constant 0.000000e+00 : f32
    %224 = vector.broadcast %cst_166 : f32 to vector<32x128xf32>
    %225 = arith.minimumf %221, %224 : vector<32x128xf32>
    %226 = math.exp %225 : vector<32x128xf32>
    %cst_167 = arith.constant 1.000000e+00 : f32
    %227 = vector.broadcast %cst_167 : f32 to vector<32x128xf32>
    %228 = arith.subf %226, %227 : vector<32x128xf32>
    %229 = arith.select %223, %221, %228 : vector<32x128xi1>, vector<32x128xf32>
    %230 = arith.truncf %229 : vector<32x128xf32> to vector<32x128xbf16>
    %c2_168 = arith.constant 2 : index
    %c3_169 = arith.constant 3 : index
    %c0_170 = arith.constant 0 : index
    %c0_171 = arith.constant 0 : index
    %231 = vector.load %arg4[%c2_168, %c3_169, %c0_170, %c0_171] : memref<3x4x128x128xbf16, #tpu.memory_space<vmem>>, vector<1x1x128x128xbf16>
    %232 = vector.shape_cast %231 : vector<1x1x128x128xbf16> to vector<128x128xbf16>
    %cst_172 = arith.constant dense<0.000000e+00> : vector<32x128xf32>
    %233 = tpu.matmul %230, %232, %cst_172 {dimension_numbers = #tpu.dot_dimension_numbers<[1], [0], [0], [1], [0, 0, 1, 1], [], []>} : vector<32x128xbf16>, vector<128x128xbf16>, vector<32x128xf32> -> vector<32x128xf32>
    %c2_173 = arith.constant 2 : index
    %c3_174 = arith.constant 3 : index
    %c0_175 = arith.constant 0 : index
    %c0_176 = arith.constant 0 : index
    %234 = vector.load %arg5[%c2_173, %c3_174, %c0_175, %c0_176] : memref<3x4x1x128xf32, #tpu.memory_space<vmem>>, vector<1x1x1x128xf32>
    %235 = vector.shape_cast %234 : vector<1x1x1x128xf32> to vector<1x128xf32>
    %236 = vector.broadcast %235 : vector<1x128xf32> to vector<32x128xf32>
    %237 = arith.addf %233, %236 : vector<32x128xf32>
    %238 = arith.addf %205, %237 : vector<32x128xf32>
    %239 = arith.truncf %238 : vector<32x128xf32> to vector<32x128xbf16>
    %c2_177 = arith.constant 2 : index
    %c0_178 = arith.constant 0 : index
    %c0_179 = arith.constant 0 : index
    %240 = vector.load %arg6[%c2_177, %c0_178, %c0_179] : memref<3x128x128xbf16, #tpu.memory_space<vmem>>, vector<1x128x128xbf16>
    %241 = vector.shape_cast %240 : vector<1x128x128xbf16> to vector<128x128xbf16>
    %cst_180 = arith.constant dense<0.000000e+00> : vector<32x128xf32>
    %242 = tpu.matmul %239, %241, %cst_180 {dimension_numbers = #tpu.dot_dimension_numbers<[1], [0], [0], [1], [0, 0, 1, 1], [], []>} : vector<32x128xbf16>, vector<128x128xbf16>, vector<32x128xf32> -> vector<32x128xf32>
    %c2_181 = arith.constant 2 : index
    %c0_182 = arith.constant 0 : index
    %c0_183 = arith.constant 0 : index
    %243 = vector.load %arg7[%c2_181, %c0_182, %c0_183] : memref<3x1x128xf32, #tpu.memory_space<vmem>>, vector<1x1x128xf32>
    %244 = vector.shape_cast %243 : vector<1x1x128xf32> to vector<1x128xf32>
    %245 = vector.broadcast %244 : vector<1x128xf32> to vector<32x128xf32>
    %246 = arith.addf %242, %245 : vector<32x128xf32>
    %247 = arith.addf %165, %246 : vector<32x128xf32>
    %cst_184 = arith.constant 0.333333343 : f32
    %248 = vector.broadcast %cst_184 : f32 to vector<32x128xf32>
    %249 = arith.mulf %247, %248 : vector<32x128xf32>
    %c0_185 = arith.constant 0 : index
    %c0_186 = arith.constant 0 : index
    %250 = vector.load %arg8[%c0_185, %c0_186] : memref<32x128xf32, #tpu.memory_space<vmem>>, vector<32x128xf32>
    tpu.vector_store %arg8[%c0_185, %c0_186], %249 {strides = array<i32>} : memref<32x128xf32, #tpu.memory_space<vmem>>, vector<32x128xf32>,
    return
  }
  func.func @transform_0(%arg0: i32) -> (i32, i32) {
    %c0_i32 = arith.constant 0 : i32
    %c0_i32_0 = arith.constant 0 : i32
    return %arg0, %c0_i32 : i32, i32
  }
  func.func @transform_1(%arg0: i32) -> (i32, i32, i32) {
    %c0_i32 = arith.constant 0 : i32
    %c0_i32_0 = arith.constant 0 : i32
    %c0_i32_1 = arith.constant 0 : i32
    %c0_i32_2 = arith.constant 0 : i32
    return %c0_i32, %c0_i32_0, %c0_i32_1 : i32, i32, i32
  }
  func.func @transform_2(%arg0: i32) -> (i32, i32, i32) {
    %c0_i32 = arith.constant 0 : i32
    %c0_i32_0 = arith.constant 0 : i32
    %c0_i32_1 = arith.constant 0 : i32
    %c0_i32_2 = arith.constant 0 : i32
    return %c0_i32, %c0_i32_0, %c0_i32_1 : i32, i32, i32
  }
  func.func @transform_3(%arg0: i32) -> (i32, i32, i32, i32) {
    %c0_i32 = arith.constant 0 : i32
    %c0_i32_0 = arith.constant 0 : i32
    %c0_i32_1 = arith.constant 0 : i32
    %c0_i32_2 = arith.constant 0 : i32
    %c0_i32_3 = arith.constant 0 : i32
    return %c0_i32, %c0_i32_0, %c0_i32_1, %c0_i32_2 : i32, i32, i32, i32
  }
  func.func @transform_4(%arg0: i32) -> (i32, i32, i32, i32) {
    %c0_i32 = arith.constant 0 : i32
    %c0_i32_0 = arith.constant 0 : i32
    %c0_i32_1 = arith.constant 0 : i32
    %c0_i32_2 = arith.constant 0 : i32
    %c0_i32_3 = arith.constant 0 : i32
    return %c0_i32, %c0_i32_0, %c0_i32_1, %c0_i32_2 : i32, i32, i32, i32
  }
  func.func @transform_5(%arg0: i32) -> (i32, i32, i32) {
    %c0_i32 = arith.constant 0 : i32
    %c0_i32_0 = arith.constant 0 : i32
    %c0_i32_1 = arith.constant 0 : i32
    %c0_i32_2 = arith.constant 0 : i32
    return %c0_i32, %c0_i32_0, %c0_i32_1 : i32, i32, i32
  }
  func.func @transform_6(%arg0: i32) -> (i32, i32, i32) {
    %c0_i32 = arith.constant 0 : i32
    %c0_i32_0 = arith.constant 0 : i32
    %c0_i32_1 = arith.constant 0 : i32
    %c0_i32_2 = arith.constant 0 : i32
    return %c0_i32, %c0_i32_0, %c0_i32_1 : i32, i32, i32
  }
  func.func @transform_7(%arg0: i32) -> (i32, i32) {
    %c0_i32 = arith.constant 0 : i32
    %c0_i32_0 = arith.constant 0 : i32
    return %arg0, %c0_i32 : i32, i32
  }
}

</mosaic_0001>

<llo_original>
// kernel: tpu_custom_call.1
$region0: #{tpu_custom_call.1}
  #allocation0 [shape = 'u32[]', space=smem, size = 0x4, offset = 0x4, fixed_abs, tag = 'smem constant byte address 0x4 - core index']
  #allocation1 [shape = 'u32[144,128]{1,0:T(1,128)}', space=vmem, size = 0x12000, scoped, tag = 'internal scratch']
  %s0 = inlined_call_operand.vmem [shape: bf16[64,4], index: 0, kind: input, shape index: {}]
  %s1 = inlined_call_operand.vmem [shape: bf16[3,4,128], index: 1, kind: input, shape index: {}]
  %s2 = inlined_call_operand.vmem [shape: f32[3,1,128], index: 2, kind: input, shape index: {}]
  %s3 = inlined_call_operand.hbm [shape: bf16[3,4,128,128], index: 3, kind: input, shape index: {}]
  %s4 = inlined_call_operand.vmem [shape: f32[3,4,1,128], index: 4, kind: input, shape index: {}]
  %s5 = inlined_call_operand.hbm [shape: bf16[3,128,128], index: 5, kind: input, shape index: {}]
  %s6 = inlined_call_operand.vmem [shape: f32[3,1,128], index: 6, kind: input, shape index: {}]
  %s7 = inlined_call_operand.hbm [shape: f32[64,128], index: 7, kind: output, shape index: {}]
  %s8 = sld [smem:[#allocation0]]
  $region69: #{tpu_custom_call.1} parent=0
    _
  %s10 = ssub.s32 1, %s8
  %s11 = scalar_select 0, %s10, %s8
  $region1: #{tpu_custom_call.1} parent=0
    #allocation2 [shape = 'u8[393216]{0}', space=vmem, size = 0x60000, scoped, tag = 'input window, operand 3, single buffered']
    #allocation3 [shape = 's32[2]{0}', space=sflag, size = 0x8, scoped, tag = 'scoped memory for tpu_custom_call.1']
    #allocation4 [shape = 's32[2]{0}', space=sflag, size = 0x8, scoped, tag = 'scoped memory for tpu_custom_call.1']
    #allocation5 [shape = 'u8[98304]{0}', space=vmem, size = 0x18000, scoped, tag = 'input window, operand 5, single buffered']
    #allocation6 [shape = 's32[1]{0}', space=sflag, size = 0x4, scoped, tag = 'scoped memory for tpu_custom_call.1']
    #allocation7 [shape = 'u8[32768]{0}', space=vmem, size = 0x8000, scoped, tag = 'output window, operand 0']
    %12 = vsyncpa [#allocation3], 0
    %13 = vsyncpa [#allocation6], 0
    %14 = vsyncpa [#allocation4], 0
    %s15 = scalar_lea.sflag [#allocation4], 1
    %16 = vsyncpa %s15, 0
    loop: start=0, step=1, limit=4
    $region2: #{tpu_custom_call.1} parent=1 // loop_pre_header
      _
    $region3: #{tpu_custom_call.1} parent=1 // loop_header
      %s18 = sphi 0, %s22
      %p19 = scmp.ge.s32.totalorder %s18, 4
      %s28 = sphi 0, %s30
      %s31 = sphi 0, %s28
      %s32 = sphi 0, %s31
      %s48 = sphi 0, %s32
      %s52 = sphi 0, %s52
      %s54 = sphi 0, %s52
      %s55 = sphi 0, %s54
      %s69 = sphi 0, %s55
      %s73 = sphi 0, %s73
      %s75 = sphi 0, %s73
      %s76 = sphi 0, %s75
      %s90 = sphi 0, %s76
      %s94 = sphi 0, %s94
      %s96 = sphi 0, %s94
      %s97 = sphi 0, %s96
      %s111 = sphi 0, %s97
      %s115 = sphi 0, %s115
      %s117 = sphi 0, %s115
      %s118 = sphi 0, %s117
      %s132 = sphi 0, %s118
      %s136 = sphi 0, %s136
      %s138 = sphi 0, %s136
      %s139 = sphi 0, %s138
      %s153 = sphi 0, %s139
      %s157 = sphi 0, %s157
      %s159 = sphi 0, %s157
      %s160 = sphi 0, %s159
      %s174 = sphi 0, %s160
      %s180 = sphi 0, %s182
      %s183 = sphi 0, %s180
      %s184 = sphi 0, %s183
      %s200 = sphi 0, %s184
    $region4: #{tpu_custom_call.1} parent=1 // loop_header_branch
      %21 = sbr.rel (%p19) target = $region8
    $region5: #{tpu_custom_call.1} parent=1 // loop_body
      %s23 = ssub.s32 %s18, 1
      %s24 = ssub.s32 %s18, 2
      %s25 = sadd.s32 %s18, 1
      %s26 = ssub.s32 %s18, %s25
      %p27 = scmp.eq.s32.totalorder %s26, 0
      %s29 = sadd.s32 %s28, 1
      %s30 = scalar_select %p27, %s28, %s29
      %p33 = pneg %p27
      %p34 = scmp.eq.s32.totalorder %s18, 1
      %p35 = por %p33, %p34
      %p36 = scmp.ne.s32.totalorder %s28, %s31
      %p37 = scmp.eq.s32.totalorder %s18, 0
      %p38 = por %p36, %p37
      %p39 = scmp.ne.s32.totalorder %s28, %s31
      %p40 = scmp.eq.s32.totalorder %s23, 1
      %p41 = por %p39, %p40
      %p42 = scmp.ne.s32.totalorder %s31, %s32
      %p43 = scmp.eq.s32.totalorder %s23, 0
      %p44 = por %p42, %p43
      %p45 = scmp.ne.s32.totalorder %s31, %s32
      %p46 = scmp.eq.s32.totalorder %s24, 1
      %p47 = por %p45, %p46
      %p49 = scmp.ne.s32.totalorder %s32, %s48
      %p50 = scmp.eq.s32.totalorder %s24, 0
      %p51 = por %p49, %p50
      %s53 = sadd.s32 %s52, 1
      %p56 = scmp.eq.s32.totalorder %s18, 1
      %p57 = scmp.ne.s32.totalorder %s52, %s54
      %p58 = scmp.eq.s32.totalorder %s18, 0
      %p59 = por %p57, %p58
      %p60 = scmp.ne.s32.totalorder %s52, %s54
      %p61 = scmp.eq.s32.totalorder %s23, 1
      %p62 = por %p60, %p61
      %p63 = scmp.ne.s32.totalorder %s54, %s55
      %p64 = scmp.eq.s32.totalorder %s23, 0
      %p65 = por %p63, %p64
      %p66 = scmp.ne.s32.totalorder %s54, %s55
      %p67 = scmp.eq.s32.totalorder %s24, 1
      %p68 = por %p66, %p67
      %p70 = scmp.ne.s32.totalorder %s55, %s69
      %p71 = scmp.eq.s32.totalorder %s24, 0
      %p72 = por %p70, %p71
      %s74 = sadd.s32 %s73, 1
      %p77 = scmp.eq.s32.totalorder %s18, 1
      %p78 = scmp.ne.s32.totalorder %s73, %s75
      %p79 = scmp.eq.s32.totalorder %s18, 0
      %p80 = por %p78, %p79
      %p81 = scmp.ne.s32.totalorder %s73, %s75
      %p82 = scmp.eq.s32.totalorder %s23, 1
      %p83 = por %p81, %p82
      %p84 = scmp.ne.s32.totalorder %s75, %s76
      %p85 = scmp.eq.s32.totalorder %s23, 0
      %p86 = por %p84, %p85
      %p87 = scmp.ne.s32.totalorder %s75, %s76
      %p88 = scmp.eq.s32.totalorder %s24, 1
      %p89 = por %p87, %p88
      %p91 = scmp.ne.s32.totalorder %s76, %s90
      %p92 = scmp.eq.s32.totalorder %s24, 0
      %p93 = por %p91, %p92
      %s95 = sadd.s32 %s94, 1
      %p98 = scmp.eq.s32.totalorder %s18, 1
      %p99 = scmp.ne.s32.totalorder %s94, %s96
      %p100 = scmp.eq.s32.totalorder %s18, 0
      %p101 = por %p99, %p100
      %p102 = scmp.ne.s32.totalorder %s94, %s96
      %p103 = scmp.eq.s32.totalorder %s23, 1
      %p104 = por %p102, %p103
      %p105 = scmp.ne.s32.totalorder %s96, %s97
      %p106 = scmp.eq.s32.totalorder %s23, 0
      %p107 = por %p105, %p106
      %p108 = scmp.ne.s32.totalorder %s96, %s97
      %p109 = scmp.eq.s32.totalorder %s24, 1
      %p110 = por %p108, %p109
      %p112 = scmp.ne.s32.totalorder %s97, %s111
      %p113 = scmp.eq.s32.totalorder %s24, 0
      %p114 = por %p112, %p113
      %s116 = sadd.s32 %s115, 1
      %p119 = scmp.eq.s32.totalorder %s18, 1
      %p120 = scmp.ne.s32.totalorder %s115, %s117
      %p121 = scmp.eq.s32.totalorder %s18, 0
      %p122 = por %p120, %p121
      %p123 = scmp.ne.s32.totalorder %s115, %s117
      %p124 = scmp.eq.s32.totalorder %s23, 1
      %p125 = por %p123, %p124
      %p126 = scmp.ne.s32.totalorder %s117, %s118
      %p127 = scmp.eq.s32.totalorder %s23, 0
      %p128 = por %p126, %p127
      %p129 = scmp.ne.s32.totalorder %s117, %s118
      %p130 = scmp.eq.s32.totalorder %s24, 1
      %p131 = por %p129, %p130
      %p133 = scmp.ne.s32.totalorder %s118, %s132
      %p134 = scmp.eq.s32.totalorder %s24, 0
      %p135 = por %p133, %p134
      %s137 = sadd.s32 %s136, 1
      %p140 = scmp.eq.s32.totalorder %s18, 1
      %p141 = scmp.ne.s32.totalorder %s136, %s138
      %p142 = scmp.eq.s32.totalorder %s18, 0
      %p143 = por %p141, %p142
      %p144 = scmp.ne.s32.totalorder %s136, %s138
      %p145 = scmp.eq.s32.totalorder %s23, 1
      %p146 = por %p144, %p145
      %p147 = scmp.ne.s32.totalorder %s138, %s139
      %p148 = scmp.eq.s32.totalorder %s23, 0
      %p149 = por %p147, %p148
      %p150 = scmp.ne.s32.totalorder %s138, %s139
      %p151 = scmp.eq.s32.totalorder %s24, 1
      %p152 = por %p150, %p151
      %p154 = scmp.ne.s32.totalorder %s139, %s153
      %p155 = scmp.eq.s32.totalorder %s24, 0
      %p156 = por %p154, %p155
      %s158 = sadd.s32 %s157, 1
      %p161 = scmp.eq.s32.totalorder %s18, 1
      %p162 = scmp.ne.s32.totalorder %s157, %s159
      %p163 = scmp.eq.s32.totalorder %s18, 0
      %p164 = por %p162, %p163
      %p165 = scmp.ne.s32.totalorder %s157, %s159
      %p166 = scmp.eq.s32.totalorder %s23, 1
      %p167 = por %p165, %p166
      %p168 = scmp.ne.s32.totalorder %s159, %s160
      %p169 = scmp.eq.s32.totalorder %s23, 0
      %p170 = por %p168, %p169
      %p171 = scmp.ne.s32.totalorder %s159, %s160
      %p172 = scmp.eq.s32.totalorder %s24, 1
      %p173 = por %p171, %p172
      %p175 = scmp.ne.s32.totalorder %s160, %s174
      %p176 = scmp.eq.s32.totalorder %s24, 0
      %p177 = por %p175, %p176
      %s178 = ssub.s32 %s18, %s25
      %p179 = scmp.eq.s32.totalorder %s178, 0
      %s181 = sadd.s32 %s180, 1
      %s182 = scalar_select %p179, %s180, %s181
      %p185 = pneg %p179
      %p186 = scmp.eq.s32.totalorder %s18, 1
      %p187 = por %p185, %p186
      %p188 = scmp.ne.s32.totalorder %s180, %s183
      %p189 = scmp.eq.s32.totalorder %s18, 0
      %p190 = por %p188, %p189
      %p191 = scmp.ne.s32.totalorder %s180, %s183
      %p192 = scmp.eq.s32.totalorder %s23, 1
      %p193 = por %p191, %p192
      %p194 = scmp.ne.s32.totalorder %s183, %s184
      %p195 = scmp.eq.s32.totalorder %s23, 0
      %p196 = por %p194, %p195
      %p197 = scmp.ne.s32.totalorder %s183, %s184
      %p198 = scmp.eq.s32.totalorder %s24, 1
      %p199 = por %p197, %p198
      %p201 = scmp.ne.s32.totalorder %s184, %s200
      %p202 = scmp.eq.s32.totalorder %s24, 0
      %p203 = por %p201, %p202
      %p204 = scmp.le.s32.totalorder 1, %s18
      %p205 = scmp.lt.s32.totalorder %s18, 3
      %p206 = pnand %p204, %p205
      %p207 = pneg %p206
      // Predicated region
      $region9: #{tpu_custom_call.1} parent=5 // pred_check
        _
      $region10: #{tpu_custom_call.1} parent=5 // pred_check_branch
        %209 = sbr.rel (%p206) target = $region12
      $region11: #{tpu_custom_call.1} parent=5 // pred_region
        %s210 = ssub.s32 %s18, 1
        // Predicated region
        $region13: #{tpu_custom_call.1} parent=11 // pred_check
          %p211 = pneg %p65
        $region14: #{tpu_custom_call.1} parent=11 // pred_check_branch
          %213 = sbr.rel (%p211) target = $region16
        $region15: #{tpu_custom_call.1} parent=11 // pred_region
          _
        $region16: #{tpu_custom_call.1} parent=11 // pred_fallthru
          _
        // Predicated region
        $region17: #{tpu_custom_call.1} parent=11 // pred_check
          %p214 = pneg %p86
        $region18: #{tpu_custom_call.1} parent=11 // pred_check_branch
          %216 = sbr.rel (%p214) target = $region20
        $region19: #{tpu_custom_call.1} parent=11 // pred_region
          _
        $region20: #{tpu_custom_call.1} parent=11 // pred_fallthru
          _
        // Predicated region
        $region21: #{tpu_custom_call.1} parent=11 // pred_check
          %p217 = pneg %p107
        $region22: #{tpu_custom_call.1} parent=11 // pred_check_branch
          %219 = sbr.rel (%p217) target = $region24
        $region23: #{tpu_custom_call.1} parent=11 // pred_region
          %s221 = ssub.s32 12288, 12288
          %222 = vsyncadd [#allocation3], %s221
          %s223 = sshll.u32 [#allocation2], 4
          %s224 = int_to_ptr.vmem [resolvable:$true] %s223
          %229 = dma.hbm_to_vmem [thread:$0]  %s3, 12288, %s224, [#allocation3], 64, 64, 4
        $region24: #{tpu_custom_call.1} parent=11 // pred_fallthru
          _
        // Predicated region
        $region25: #{tpu_custom_call.1} parent=11 // pred_check
          %p230 = pneg %p128
        $region26: #{tpu_custom_call.1} parent=11 // pred_check_branch
          %232 = sbr.rel (%p230) target = $region28
        $region27: #{tpu_custom_call.1} parent=11 // pred_region
          _
        $region28: #{tpu_custom_call.1} parent=11 // pred_fallthru
          _
        // Predicated region
        $region29: #{tpu_custom_call.1} parent=11 // pred_check
          %p233 = pneg %p149
        $region30: #{tpu_custom_call.1} parent=11 // pred_check_branch
          %235 = sbr.rel (%p233) target = $region32
        $region31: #{tpu_custom_call.1} parent=11 // pred_region
          %s237 = ssub.s32 3072, 3072
          %238 = vsyncadd [#allocation6], %s237
          %s239 = sshll.u32 [#allocation5], 4
          %s240 = int_to_ptr.vmem [resolvable:$true] %s239
          %245 = dma.hbm_to_vmem [thread:$0]  %s5, 3072, %s240, [#allocation6], 64, 64, 4
        $region32: #{tpu_custom_call.1} parent=11 // pred_fallthru
          _
        // Predicated region
        $region33: #{tpu_custom_call.1} parent=11 // pred_check
          %p246 = pneg %p170
        $region34: #{tpu_custom_call.1} parent=11 // pred_check_branch
          %248 = sbr.rel (%p246) target = $region36
        $region35: #{tpu_custom_call.1} parent=11 // pred_region
          _
        $region36: #{tpu_custom_call.1} parent=11 // pred_fallthru
          _
      $region12: #{tpu_custom_call.1} parent=5 // pred_fallthru
        _
      %p249 = scmp.lt.s32.totalorder %s18, 2
      // Predicated region
      $region37: #{tpu_custom_call.1} parent=5 // pred_check
        %p250 = pneg %p249
      $region38: #{tpu_custom_call.1} parent=5 // pred_check_branch
        %252 = sbr.rel (%p250) target = $region40
      $region39: #{tpu_custom_call.1} parent=5 // pred_region
        // Predicated region
        $region41: #{tpu_custom_call.1} parent=39 // pred_check
          %p253 = pneg %p38
        $region42: #{tpu_custom_call.1} parent=39 // pred_check_branch
          %255 = sbr.rel (%p253) target = $region44
        $region43: #{tpu_custom_call.1} parent=39 // pred_region
          %s256 = smul.u32 4, %s18
          %p257 = scmp.lt.s32.totalorder %s256, 7
          %s258 = scalar_select %p257, %s256, 7
          %s259 = smul.addr %s258, 4
          %s260 = scalar_lea.vmem %s0, %s259
          %s261 = smul.u32 4, %s18
        $region44: #{tpu_custom_call.1} parent=39 // pred_fallthru
          _
      $region40: #{tpu_custom_call.1} parent=5 // pred_fallthru
        _
      %p262 = scmp.le.s32.totalorder 1, %s18
      %p263 = scmp.lt.s32.totalorder %s18, 3
      %p264 = pnand %p262, %p263
      %p265 = pneg %p264
      // Predicated region
      $region45: #{tpu_custom_call.1} parent=5 // pred_check
        _
      $region46: #{tpu_custom_call.1} parent=5 // pred_check_branch
        %267 = sbr.rel (%p264) target = $region48
      $region47: #{tpu_custom_call.1} parent=5 // pred_region
        %s268 = ssub.s32 %s18, 1
        // Predicated region
        $region49: #{tpu_custom_call.1} parent=47 // pred_check
          %p269 = pneg %p107
        $region50: #{tpu_custom_call.1} parent=47 // pred_check_branch
          %271 = sbr.rel (%p269) target = $region52
        $region51: #{tpu_custom_call.1} parent=47 // pred_region
          %272 = dma.done [#allocation3], 12288
        $region52: #{tpu_custom_call.1} parent=47 // pred_fallthru
          _
        // Predicated region
        $region53: #{tpu_custom_call.1} parent=47 // pred_check
          %p273 = pneg %p149
        $region54: #{tpu_custom_call.1} parent=47 // pred_check_branch
          %275 = sbr.rel (%p273) target = $region56
        $region55: #{tpu_custom_call.1} parent=47 // pred_region
          %276 = dma.done [#allocation6], 3072
        $region56: #{tpu_custom_call.1} parent=47 // pred_fallthru
          _
        %s277 = smul.u32 4, %s23
        %p278 = scmp.lt.s32.totalorder %s277, 7
        %s279 = scalar_select %p278, %s277, 7
        %s280 = smul.addr %s279, 4
        %s281 = scalar_lea.vmem %s0, %s280
        %p282 = pneg %p44
        %p283 = pneg %p41
        %p284 = pneg %p65
        %p285 = pneg %p62
        %p286 = pneg %p86
        %p287 = pneg %p83
        %p288 = pneg %p107
        %p289 = pneg %p104
        %p290 = pneg %p128
        %p291 = pneg %p125
        %p292 = pneg %p149
        %p293 = pneg %p146
        %p294 = pneg %p170
        %p295 = pneg %p167
        %p296 = pneg %p196
        %p297 = pneg %p193
        %s298 = sand.u32 %s183, 1
        %s299 = scalar_lea.sflag [#allocation4], %s298
        %s300 = sand.u32 %s183, 1
        %s301 = smul.addr %s300, 32
        %s302 = scalar_lea.vmem [#allocation7], %s301
        %s303 = smul.u32 4, %s23
        %p304 = scmp.lt.s32.totalorder %s303, 7
        %s305 = scalar_select %p304, %s303, 7
        %s306 = smul.addr %s305, 4
        %s307 = scalar_lea.vmem %s0, %s306
        %s308 = smul.u32 4, %s23
        %s309 = smul.u32 4, %s23
        %v311 = vld [vmem:[%s307] sm:$0xf]
        %v312 = vld [vmem:[%s307 + $0x4] sm:$0xf]
        %v313 = vld [vmem:[%s307 + $0x8] sm:$0xf]
        %v314 = vld [vmem:[%s307 + $0xc] sm:$0xf]
        %v315 = vld [vmem:[%s1] sm:$0x3]
        %v316 = vld [vmem:[%s2] sm:$0x1]
        %v318 = vlaneseq
        %v319 = vshrl.u32 %v318, 7
        %v320 = vsub.s32 0, %v319
        %v321 = vrot.slane %v316, %v320
        %v327 = vunpack.c.l.b16 %v311
        %v328 = vunpack.c.l.b16 %v312
        %v329 = vunpack.c.l.b16 %v313
        %v330 = vunpack.c.l.b16 %v314
        %v331 = vpack.c.b16 %v328, %v327
        %v332 = vpack.c.b16 %v330, %v329
        %vm333 = vcmask 31744
        %v335 = vsel %vm333, %v331, 0
        %v338 = vsel %vm333, %v332, 0
        %vm340 = vcmask 1041408
        %v342 = vsel %vm340, %v315, 0
        %344 = vmatprep.subr.bf16.mxu0 0
        %345 = vmatpush1.bf16.msra.mxu0 0
        %346 = vmatprep.subr.bf16.mxu0 0
        %347 = vmatpush1.bf16.msra.mxu0 0
        %348 = vmatprep.subr.bf16.mxu0 0
        %349 = vmatpush1.bf16.msra.mxu0 0
        %350 = vmatprep.subr.bf16.mxu0 0
        %351 = vmatpush1.bf16.msra.mxu0 0
        %352 = vmatprep.subr.bf16.mxu0 0
        %353 = vmatpush1.bf16.msra.mxu0 0
        %354 = vmatprep.subr.bf16.mxu0 0
        %355 = vmatpush1.bf16.msra.mxu0 0
        %356 = vmatprep.subr.bf16.mxu0 0
        %357 = vmatpush1.bf16.msra.mxu0 0
        %358 = vmatprep.subr.bf16.mxu0 0
        %359 = vmatpush1.bf16.msra.mxu0 %v342
        %360 = vmatprep.subr.bf16.mxu0 0
        %361 = vmatpush2.bf16.msra.mxu0 0
        %362 = vmatprep.subr.bf16.mxu0 0
        %363 = vmatpush2.bf16.msra.mxu0 0
        %364 = vmatprep.subr.bf16.mxu0 0
        %365 = vmatpush2.bf16.msra.mxu0 0
        %366 = vmatprep.subr.bf16.mxu0 0
        %367 = vmatpush2.bf16.msra.mxu0 0
        %368 = vmatprep.subr.bf16.mxu0 0
        %369 = vmatpush2.bf16.msra.mxu0 0
        %370 = vmatprep.subr.bf16.mxu0 0
        %371 = vmatpush2.bf16.msra.mxu0 0
        %372 = vmatprep.subr.bf16.mxu0 0
        %373 = vmatpush2.bf16.msra.mxu0 0
        %374 = vmatprep.subr.bf16.mxu0 0
        %375 = vmatpush2.bf16.msra.mxu0 0
        %376 = vmatprep.mubr.bf16.mxu0 0
        %377 = vmatmul.mubr.bf16.gmra.mxu0 %v335
        %v378 = vpop.f32.mrf.mxu0
        %v379 = vadd.f32 %v321, %v378
        %v380 = vpop.f32.mrf.mxu0
        %v381 = vpop.f32.mrf.mxu0
        %v382 = vadd.f32 %v321, %v381
        %v383 = vpop.f32.mrf.mxu0
        %384 = vmatprep.mubr.bf16.mxu0 0
        %385 = vmatmul.mubr.bf16.gmra.mxu0 %v338
        %v386 = vpop.f32.mrf.mxu0
        %v387 = vadd.f32 %v321, %v386
        %v388 = vpop.f32.mrf.mxu0
        %v389 = vpop.f32.mrf.mxu0
        %v390 = vadd.f32 %v321, %v389
        %v391 = vpop.f32.mrf.mxu0
        %392 = vdwg.mxu0
        %vm393 = vcmp.gt.f32.partialorder %v379, 0.0
        %vm394 = vcmp.gt.f32.partialorder %v382, 0.0
        %vm395 = vcmp.gt.f32.partialorder %v387, 0.0
        %vm396 = vcmp.gt.f32.partialorder %v390, 0.0
        %v397 = vmin.f32 %v379, 0.0
        %v398 = vmin.f32 %v382, 0.0
        %v399 = vmin.f32 %v387, 0.0
        %v400 = vmin.f32 %v390, 0.0
        %v401 = vmul.f32 %v397, 1.442695
        %v402 = vpow.pop %v401
        %v403 = vmul.f32 %v398, 1.442695
        %v404 = vpow.pop %v403
        %v405 = vmul.f32 %v399, 1.442695
        %v406 = vpow.pop %v405
        %v407 = vmul.f32 %v400, 1.442695
        %v408 = vpow.pop %v407
        %v409 = vsub.f32 %v402, 1.0
        %v410 = vsub.f32 %v404, 1.0
        %v411 = vsub.f32 %v406, 1.0
        %v412 = vsub.f32 %v408, 1.0
        %v413 = vsel %vm393, %v379, %v409
        %v414 = vsel %vm394, %v382, %v410
        %v415 = vsel %vm395, %v387, %v411
        %v416 = vsel %vm396, %v390, %v412
        %v417 = vpack.c.bf16 %v414, %v413
        %v418 = vpack.c.bf16 %v416, %v415
        %v419 = vld [vmem:[#allocation2] sm:$0xf]
        %v420 = vld [vmem:[#allocation2 + $0x4] sm:$0xf]
        %v421 = vld [vmem:[#allocation2 + $0x8] sm:$0xf]
        %v422 = vld [vmem:[#allocation2 + $0xc] sm:$0xf]
        %v423 = vld [vmem:[#allocation2 + $0x10] sm:$0xf]
        %v424 = vld [vmem:[#allocation2 + $0x14] sm:$0xf]
        %v425 = vld [vmem:[#allocation2 + $0x18] sm:$0xf]
        %v426 = vld [vmem:[#allocation2 + $0x1c] sm:$0xf]
        %v427 = vld [vmem:[#allocation2 + $0x20] sm:$0xf]
        %v428 = vld [vmem:[#allocation2 + $0x24] sm:$0xf]
        %v429 = vld [vmem:[#allocation2 + $0x28] sm:$0xf]
        %v430 = vld [vmem:[#allocation2 + $0x2c] sm:$0xf]
        %v431 = vld [vmem:[#allocation2 + $0x30] sm:$0xf]
        %v432 = vld [vmem:[#allocation2 + $0x34] sm:$0xf]
        %v433 = vld [vmem:[#allocation2 + $0x38] sm:$0xf]
        %v434 = vld [vmem:[#allocation2 + $0x3c] sm:$0xf]
        %v435 = vld [vmem:[%s4] sm:$0x1]
        %v437 = vlaneseq
        %v438 = vshrl.u32 %v437, 7
        %v439 = vsub.s32 0, %v438
        %v440 = vrot.slane %v435, %v439
        %v458 = vunpack.c.l.b16 %v419
        %v459 = vunpack.c.l.b16 %v420
        %v460 = vunpack.c.l.b16 %v421
        %v461 = vunpack.c.l.b16 %v422
        %v462 = vunpack.c.l.b16 %v423
        %v463 = vunpack.c.l.b16 %v424
        %v464 = vunpack.c.l.b16 %v425
        %v465 = vunpack.c.l.b16 %v426
        %v466 = vunpack.c.l.b16 %v427
        %v467 = vunpack.c.l.b16 %v428
        %v468 = vunpack.c.l.b16 %v429
        %v469 = vunpack.c.l.b16 %v430
        %v470 = vunpack.c.l.b16 %v431
        %v471 = vunpack.c.l.b16 %v432
        %v472 = vunpack.c.l.b16 %v433
        %v473 = vunpack.c.l.b16 %v434
        %v474 = vpack.c.b16 %v459, %v458
        %v475 = vpack.c.b16 %v461, %v460
        %v476 = vpack.c.b16 %v463, %v462
        %v477 = vpack.c.b16 %v465, %v464
        %v478 = vpack.c.b16 %v467, %v466
        %v479 = vpack.c.b16 %v469, %v468
        %v480 = vpack.c.b16 %v471, %v470
        %v481 = vpack.c.b16 %v473, %v472
        %490 = vmatprep.subr.bf16.mxu0 0
        %491 = vmatpush1.bf16.msra.mxu0 %v481
        %492 = vmatprep.subr.bf16.mxu0 0
        %493 = vmatpush1.bf16.msra.mxu0 %v480
        %494 = vmatprep.subr.bf16.mxu0 0
        %495 = vmatpush1.bf16.msra.mxu0 %v479
        %496 = vmatprep.subr.bf16.mxu0 0
        %497 = vmatpush1.bf16.msra.mxu0 %v478
        %498 = vmatprep.subr.bf16.mxu0 0
        %499 = vmatpush1.bf16.msra.mxu0 %v477
        %500 = vmatprep.subr.bf16.mxu0 0
        %501 = vmatpush1.bf16.msra.mxu0 %v476
        %502 = vmatprep.subr.bf16.mxu0 0
        %503 = vmatpush1.bf16.msra.mxu0 %v475
        %504 = vmatprep.subr.bf16.mxu0 0
        %505 = vmatpush1.bf16.msra.mxu0 %v474
        %506 = vmatprep.subr.bf16.mxu0 0
        %507 = vmatpush2.bf16.msra.mxu0 0
        %508 = vmatprep.subr.bf16.mxu0 0
        %509 = vmatpush2.bf16.msra.mxu0 0
        %510 = vmatprep.subr.bf16.mxu0 0
        %511 = vmatpush2.bf16.msra.mxu0 0
        %512 = vmatprep.subr.bf16.mxu0 0
        %513 = vmatpush2.bf16.msra.mxu0 0
        %514 = vmatprep.subr.bf16.mxu0 0
        %515 = vmatpush2.bf16.msra.mxu0 0
        %516 = vmatprep.subr.bf16.mxu0 0
        %517 = vmatpush2.bf16.msra.mxu0 0
        %518 = vmatprep.subr.bf16.mxu0 0
        %519 = vmatpush2.bf16.msra.mxu0 0
        %520 = vmatprep.subr.bf16.mxu0 0
        %521 = vmatpush2.bf16.msra.mxu0 0
        %522 = vmatprep.mubr.bf16.mxu0 0
        %523 = vmatmul.mubr.bf16.gmra.mxu0 %v417
        %v524 = vpop.f32.mrf.mxu0
        %v525 = vadd.f32 %v440, %v524
        %v526 = vpop.f32.mrf.mxu0
        %v527 = vpop.f32.mrf.mxu0
        %v528 = vadd.f32 %v440, %v527
        %v529 = vpop.f32.mrf.mxu0
        %530 = vmatprep.mubr.bf16.mxu0 0
        %531 = vmatmul.mubr.bf16.gmra.mxu0 %v418
        %v532 = vpop.f32.mrf.mxu0
        %v533 = vadd.f32 %v440, %v532
        %v534 = vpop.f32.mrf.mxu0
        %v535 = vpop.f32.mrf.mxu0
        %v536 = vadd.f32 %v440, %v535
        %v537 = vpop.f32.mrf.mxu0
        %538 = vdwg.mxu0
        %vm539 = vcmp.gt.f32.partialorder %v525, 0.0
        %vm540 = vcmp.gt.f32.partialorder %v528, 0.0
        %vm541 = vcmp.gt.f32.partialorder %v533, 0.0
        %vm542 = vcmp.gt.f32.partialorder %v536, 0.0
        %v543 = vmin.f32 %v525, 0.0
        %v544 = vmin.f32 %v528, 0.0
        %v545 = vmin.f32 %v533, 0.0
        %v546 = vmin.f32 %v536, 0.0
        %v547 = vmul.f32 %v543, 1.442695
        %v548 = vpow.pop %v547
        %v549 = vmul.f32 %v544, 1.442695
        %v550 = vpow.pop %v549
        %v551 = vmul.f32 %v545, 1.442695
        %v552 = vpow.pop %v551
        %v553 = vmul.f32 %v546, 1.442695
        %v554 = vpow.pop %v553
        %v555 = vsub.f32 %v548, 1.0
        %v556 = vsub.f32 %v550, 1.0
        %v557 = vsub.f32 %v552, 1.0
        %v558 = vsub.f32 %v554, 1.0
        %v559 = vsel %vm539, %v525, %v555
        %v560 = vsel %vm540, %v528, %v556
        %v561 = vsel %vm541, %v533, %v557
        %v562 = vsel %vm542, %v536, %v558
        %v563 = vpack.c.bf16 %v560, %v559
        %v564 = vpack.c.bf16 %v562, %v561
        %s565 = scalar_lea.vmem [#allocation2], 64
        %v566 = vld [vmem:[%s565] sm:$0xf]
        %v567 = vld [vmem:[%s565 + $0x4] sm:$0xf]
        %v568 = vld [vmem:[%s565 + $0x8] sm:$0xf]
        %v569 = vld [vmem:[%s565 + $0xc] sm:$0xf]
        %v570 = vld [vmem:[%s565 + $0x10] sm:$0xf]
        %v571 = vld [vmem:[%s565 + $0x14] sm:$0xf]
        %v572 = vld [vmem:[%s565 + $0x18] sm:$0xf]
        %v573 = vld [vmem:[%s565 + $0x1c] sm:$0xf]
        %v574 = vld [vmem:[%s565 + $0x20] sm:$0xf]
        %v575 = vld [vmem:[%s565 + $0x24] sm:$0xf]
        %v576 = vld [vmem:[%s565 + $0x28] sm:$0xf]
        %v577 = vld [vmem:[%s565 + $0x2c] sm:$0xf]
        %v578 = vld [vmem:[%s565 + $0x30] sm:$0xf]
        %v579 = vld [vmem:[%s565 + $0x34] sm:$0xf]
        %v580 = vld [vmem:[%s565 + $0x38] sm:$0xf]
        %v581 = vld [vmem:[%s565 + $0x3c] sm:$0xf]
        %s582 = scalar_lea.vmem %s4, 1
        %v583 = vld [vmem:[%s582] sm:$0x1]
        %v585 = vlaneseq
        %v586 = vshrl.u32 %v585, 7
        %v587 = vsub.s32 0, %v586
        %v588 = vrot.slane %v583, %v587
        %v606 = vunpack.c.l.b16 %v566
        %v607 = vunpack.c.l.b16 %v567
        %v608 = vunpack.c.l.b16 %v568
        %v609 = vunpack.c.l.b16 %v569
        %v610 = vunpack.c.l.b16 %v570
        %v611 = vunpack.c.l.b16 %v571
        %v612 = vunpack.c.l.b16 %v572
        %v613 = vunpack.c.l.b16 %v573
        %v614 = vunpack.c.l.b16 %v574
        %v615 = vunpack.c.l.b16 %v575
        %v616 = vunpack.c.l.b16 %v576
        %v617 = vunpack.c.l.b16 %v577
        %v618 = vunpack.c.l.b16 %v578
        %v619 = vunpack.c.l.b16 %v579
        %v620 = vunpack.c.l.b16 %v580
        %v621 = vunpack.c.l.b16 %v581
        %v622 = vpack.c.b16 %v607, %v606
        %v623 = vpack.c.b16 %v609, %v608
        %v624 = vpack.c.b16 %v611, %v610
        %v625 = vpack.c.b16 %v613, %v612
        %v626 = vpack.c.b16 %v615, %v614
        %v627 = vpack.c.b16 %v617, %v616
        %v628 = vpack.c.b16 %v619, %v618
        %v629 = vpack.c.b16 %v621, %v620
        %638 = vmatprep.subr.bf16.mxu0 0
        %639 = vmatpush1.bf16.msra.mxu0 %v629
        %640 = vmatprep.subr.bf16.mxu0 0
        %641 = vmatpush1.bf16.msra.mxu0 %v628
        %642 = vmatprep.subr.bf16.mxu0 0
        %643 = vmatpush1.bf16.msra.mxu0 %v627
        %644 = vmatprep.subr.bf16.mxu0 0
        %645 = vmatpush1.bf16.msra.mxu0 %v626
        %646 = vmatprep.subr.bf16.mxu0 0
        %647 = vmatpush1.bf16.msra.mxu0 %v625
        %648 = vmatprep.subr.bf16.mxu0 0
        %649 = vmatpush1.bf16.msra.mxu0 %v624
        %650 = vmatprep.subr.bf16.mxu0 0
        %651 = vmatpush1.bf16.msra.mxu0 %v623
        %652 = vmatprep.subr.bf16.mxu0 0
        %653 = vmatpush1.bf16.msra.mxu0 %v622
        %654 = vmatprep.subr.bf16.mxu0 0
        %655 = vmatpush2.bf16.msra.mxu0 0
        %656 = vmatprep.subr.bf16.mxu0 0
        %657 = vmatpush2.bf16.msra.mxu0 0
        %658 = vmatprep.subr.bf16.mxu0 0
        %659 = vmatpush2.bf16.msra.mxu0 0
        %660 = vmatprep.subr.bf16.mxu0 0
        %661 = vmatpush2.bf16.msra.mxu0 0
        %662 = vmatprep.subr.bf16.mxu0 0
        %663 = vmatpush2.bf16.msra.mxu0 0
        %664 = vmatprep.subr.bf16.mxu0 0
        %665 = vmatpush2.bf16.msra.mxu0 0
        %666 = vmatprep.subr.bf16.mxu0 0
        %667 = vmatpush2.bf16.msra.mxu0 0
        %668 = vmatprep.subr.bf16.mxu0 0
        %669 = vmatpush2.bf16.msra.mxu0 0
        %670 = vmatprep.mubr.bf16.mxu0 0
        %671 = vmatmul.mubr.bf16.gmra.mxu0 %v563
        %v672 = vpop.f32.mrf.mxu0
        %v673 = vadd.f32 %v588, %v672
        %v674 = vpop.f32.mrf.mxu0
        %v675 = vpop.f32.mrf.mxu0
        %v676 = vadd.f32 %v588, %v675
        %v677 = vpop.f32.mrf.mxu0
        %678 = vmatprep.mubr.bf16.mxu0 0
        %679 = vmatmul.mubr.bf16.gmra.mxu0 %v564
        %v680 = vpop.f32.mrf.mxu0
        %v681 = vadd.f32 %v588, %v680
        %v682 = vpop.f32.mrf.mxu0
        %v683 = vpop.f32.mrf.mxu0
        %v684 = vadd.f32 %v588, %v683
        %v685 = vpop.f32.mrf.mxu0
        %686 = vdwg.mxu0
        %v687 = vadd.f32 %v379, %v673
        %v688 = vadd.f32 %v382, %v676
        %v689 = vadd.f32 %v387, %v681
        %v690 = vadd.f32 %v390, %v684
        %vm691 = vcmp.gt.f32.partialorder %v687, 0.0
        %vm692 = vcmp.gt.f32.partialorder %v688, 0.0
        %vm693 = vcmp.gt.f32.partialorder %v689, 0.0
        %vm694 = vcmp.gt.f32.partialorder %v690, 0.0
        %v695 = vmin.f32 %v687, 0.0
        %v696 = vmin.f32 %v688, 0.0
        %v697 = vmin.f32 %v689, 0.0
        %v698 = vmin.f32 %v690, 0.0
        %v699 = vmul.f32 %v695, 1.442695
        %v700 = vpow.pop %v699
        %v701 = vmul.f32 %v696, 1.442695
        %v702 = vpow.pop %v701
        %v703 = vmul.f32 %v697, 1.442695
        %v704 = vpow.pop %v703
        %v705 = vmul.f32 %v698, 1.442695
        %v706 = vpow.pop %v705
        %v707 = vsub.f32 %v700, 1.0
        %v708 = vsub.f32 %v702, 1.0
        %v709 = vsub.f32 %v704, 1.0
        %v710 = vsub.f32 %v706, 1.0
        %v711 = vsel %vm691, %v687, %v707
        %v712 = vsel %vm692, %v688, %v708
        %v713 = vsel %vm693, %v689, %v709
        %v714 = vsel %vm694, %v690, %v710
        %v715 = vpack.c.bf16 %v712, %v711
        %v716 = vpack.c.bf16 %v714, %v713
        %s717 = scalar_lea.vmem [#allocation2], 128
        %v718 = vld [vmem:[%s717] sm:$0xf]
        %v719 = vld [vmem:[%s717 + $0x4] sm:$0xf]
        %v720 = vld [vmem:[%s717 + $0x8] sm:$0xf]
        %v721 = vld [vmem:[%s717 + $0xc] sm:$0xf]
        %v722 = vld [vmem:[%s717 + $0x10] sm:$0xf]
        %v723 = vld [vmem:[%s717 + $0x14] sm:$0xf]
        %v724 = vld [vmem:[%s717 + $0x18] sm:$0xf]
        %v725 = vld [vmem:[%s717 + $0x1c] sm:$0xf]
        %v726 = vld [vmem:[%s717 + $0x20] sm:$0xf]
        %v727 = vld [vmem:[%s717 + $0x24] sm:$0xf]
        %v728 = vld [vmem:[%s717 + $0x28] sm:$0xf]
        %v729 = vld [vmem:[%s717 + $0x2c] sm:$0xf]
        %v730 = vld [vmem:[%s717 + $0x30] sm:$0xf]
        %v731 = vld [vmem:[%s717 + $0x34] sm:$0xf]
        %v732 = vld [vmem:[%s717 + $0x38] sm:$0xf]
        %v733 = vld [vmem:[%s717 + $0x3c] sm:$0xf]
        %s734 = scalar_lea.vmem %s4, 2
        %v735 = vld [vmem:[%s734] sm:$0x1]
        %v737 = vlaneseq
        %v738 = vshrl.u32 %v737, 7
        %v739 = vsub.s32 0, %v738
        %v740 = vrot.slane %v735, %v739
        %v758 = vunpack.c.l.b16 %v718
        %v759 = vunpack.c.l.b16 %v719
        %v760 = vunpack.c.l.b16 %v720
        %v761 = vunpack.c.l.b16 %v721
        %v762 = vunpack.c.l.b16 %v722
        %v763 = vunpack.c.l.b16 %v723
        %v764 = vunpack.c.l.b16 %v724
        %v765 = vunpack.c.l.b16 %v725
        %v766 = vunpack.c.l.b16 %v726
        %v767 = vunpack.c.l.b16 %v727
        %v768 = vunpack.c.l.b16 %v728
        %v769 = vunpack.c.l.b16 %v729
        %v770 = vunpack.c.l.b16 %v730
        %v771 = vunpack.c.l.b16 %v731
        %v772 = vunpack.c.l.b16 %v732
        %v773 = vunpack.c.l.b16 %v733
        %v774 = vpack.c.b16 %v759, %v758
        %v775 = vpack.c.b16 %v761, %v760
        %v776 = vpack.c.b16 %v763, %v762
        %v777 = vpack.c.b16 %v765, %v764
        %v778 = vpack.c.b16 %v767, %v766
        %v779 = vpack.c.b16 %v769, %v768
        %v780 = vpack.c.b16 %v771, %v770
        %v781 = vpack.c.b16 %v773, %v772
        %790 = vmatprep.subr.bf16.mxu0 0
        %791 = vmatpush1.bf16.msra.mxu0 %v781
        %792 = vmatprep.subr.bf16.mxu0 0
        %793 = vmatpush1.bf16.msra.mxu0 %v780
        %794 = vmatprep.subr.bf16.mxu0 0
        %795 = vmatpush1.bf16.msra.mxu0 %v779
        %796 = vmatprep.subr.bf16.mxu0 0
        %797 = vmatpush1.bf16.msra.mxu0 %v778
        %798 = vmatprep.subr.bf16.mxu0 0
        %799 = vmatpush1.bf16.msra.mxu0 %v777
        %800 = vmatprep.subr.bf16.mxu0 0
        %801 = vmatpush1.bf16.msra.mxu0 %v776
        %802 = vmatprep.subr.bf16.mxu0 0
        %803 = vmatpush1.bf16.msra.mxu0 %v775
        %804 = vmatprep.subr.bf16.mxu0 0
        %805 = vmatpush1.bf16.msra.mxu0 %v774
        %806 = vmatprep.subr.bf16.mxu0 0
        %807 = vmatpush2.bf16.msra.mxu0 0
        %808 = vmatprep.subr.bf16.mxu0 0
        %809 = vmatpush2.bf16.msra.mxu0 0
        %810 = vmatprep.subr.bf16.mxu0 0
        %811 = vmatpush2.bf16.msra.mxu0 0
        %812 = vmatprep.subr.bf16.mxu0 0
        %813 = vmatpush2.bf16.msra.mxu0 0
        %814 = vmatprep.subr.bf16.mxu0 0
        %815 = vmatpush2.bf16.msra.mxu0 0
        %816 = vmatprep.subr.bf16.mxu0 0
        %817 = vmatpush2.bf16.msra.mxu0 0
        %818 = vmatprep.subr.bf16.mxu0 0
        %819 = vmatpush2.bf16.msra.mxu0 0
        %820 = vmatprep.subr.bf16.mxu0 0
        %821 = vmatpush2.bf16.msra.mxu0 0
        %822 = vmatprep.mubr.bf16.mxu0 0
        %823 = vmatmul.mubr.bf16.gmra.mxu0 %v715
        %v824 = vpop.f32.mrf.mxu0
        %v825 = vadd.f32 %v740, %v824
        %v826 = vpop.f32.mrf.mxu0
        %v827 = vpop.f32.mrf.mxu0
        %v828 = vadd.f32 %v740, %v827
        %v829 = vpop.f32.mrf.mxu0
        %830 = vmatprep.mubr.bf16.mxu0 0
        %831 = vmatmul.mubr.bf16.gmra.mxu0 %v716
        %v832 = vpop.f32.mrf.mxu0
        %v833 = vadd.f32 %v740, %v832
        %v834 = vpop.f32.mrf.mxu0
        %v835 = vpop.f32.mrf.mxu0
        %v836 = vadd.f32 %v740, %v835
        %v837 = vpop.f32.mrf.mxu0
        %838 = vdwg.mxu0
        %vm839 = vcmp.gt.f32.partialorder %v825, 0.0
        %vm840 = vcmp.gt.f32.partialorder %v828, 0.0
        %vm841 = vcmp.gt.f32.partialorder %v833, 0.0
        %vm842 = vcmp.gt.f32.partialorder %v836, 0.0
        %v843 = vmin.f32 %v825, 0.0
        %v844 = vmin.f32 %v828, 0.0
        %v845 = vmin.f32 %v833, 0.0
        %v846 = vmin.f32 %v836, 0.0
        %v847 = vmul.f32 %v843, 1.442695
        %v848 = vpow.pop %v847
        %v849 = vmul.f32 %v844, 1.442695
        %v850 = vpow.pop %v849
        %v851 = vmul.f32 %v845, 1.442695
        %v852 = vpow.pop %v851
        %v853 = vmul.f32 %v846, 1.442695
        %v854 = vpow.pop %v853
        %v855 = vsub.f32 %v848, 1.0
        %v856 = vsub.f32 %v850, 1.0
        %v857 = vsub.f32 %v852, 1.0
        %v858 = vsub.f32 %v854, 1.0
        %v859 = vsel %vm839, %v825, %v855
        %v860 = vsel %vm840, %v828, %v856
        %v861 = vsel %vm841, %v833, %v857
        %v862 = vsel %vm842, %v836, %v858
        %v863 = vpack.c.bf16 %v860, %v859
        %v864 = vpack.c.bf16 %v862, %v861
        %s865 = scalar_lea.vmem [#allocation2], 192
        %v866 = vld [vmem:[%s865] sm:$0xf]
        %v867 = vld [vmem:[%s865 + $0x4] sm:$0xf]
        %v868 = vld [vmem:[%s865 + $0x8] sm:$0xf]
        %v869 = vld [vmem:[%s865 + $0xc] sm:$0xf]
        %v870 = vld [vmem:[%s865 + $0x10] sm:$0xf]
        %v871 = vld [vmem:[%s865 + $0x14] sm:$0xf]
        %v872 = vld [vmem:[%s865 + $0x18] sm:$0xf]
        %v873 = vld [vmem:[%s865 + $0x1c] sm:$0xf]
        %v874 = vld [vmem:[%s865 + $0x20] sm:$0xf]
        %v875 = vld [vmem:[%s865 + $0x24] sm:$0xf]
        %v876 = vld [vmem:[%s865 + $0x28] sm:$0xf]
        %v877 = vld [vmem:[%s865 + $0x2c] sm:$0xf]
        %v878 = vld [vmem:[%s865 + $0x30] sm:$0xf]
        %v879 = vld [vmem:[%s865 + $0x34] sm:$0xf]
        %v880 = vld [vmem:[%s865 + $0x38] sm:$0xf]
        %v881 = vld [vmem:[%s865 + $0x3c] sm:$0xf]
        %s882 = scalar_lea.vmem %s4, 3
        %v883 = vld [vmem:[%s882] sm:$0x1]
        %v885 = vlaneseq
        %v886 = vshrl.u32 %v885, 7
        %v887 = vsub.s32 0, %v886
        %v888 = vrot.slane %v883, %v887
        %v906 = vunpack.c.l.b16 %v866
        %v907 = vunpack.c.l.b16 %v867
        %v908 = vunpack.c.l.b16 %v868
        %v909 = vunpack.c.l.b16 %v869
        %v910 = vunpack.c.l.b16 %v870
        %v911 = vunpack.c.l.b16 %v871
        %v912 = vunpack.c.l.b16 %v872
        %v913 = vunpack.c.l.b16 %v873
        %v914 = vunpack.c.l.b16 %v874
        %v915 = vunpack.c.l.b16 %v875
        %v916 = vunpack.c.l.b16 %v876
        %v917 = vunpack.c.l.b16 %v877
        %v918 = vunpack.c.l.b16 %v878
        %v919 = vunpack.c.l.b16 %v879
        %v920 = vunpack.c.l.b16 %v880
        %v921 = vunpack.c.l.b16 %v881
        %v922 = vpack.c.b16 %v907, %v906
        %v923 = vpack.c.b16 %v909, %v908
        %v924 = vpack.c.b16 %v911, %v910
        %v925 = vpack.c.b16 %v913, %v912
        %v926 = vpack.c.b16 %v915, %v914
        %v927 = vpack.c.b16 %v917, %v916
        %v928 = vpack.c.b16 %v919, %v918
        %v929 = vpack.c.b16 %v921, %v920
        %938 = vmatprep.subr.bf16.mxu0 0
        %939 = vmatpush1.bf16.msra.mxu0 %v929
        %940 = vmatprep.subr.bf16.mxu0 0
        %941 = vmatpush1.bf16.msra.mxu0 %v928
        %942 = vmatprep.subr.bf16.mxu0 0
        %943 = vmatpush1.bf16.msra.mxu0 %v927
        %944 = vmatprep.subr.bf16.mxu0 0
        %945 = vmatpush1.bf16.msra.mxu0 %v926
        %946 = vmatprep.subr.bf16.mxu0 0
        %947 = vmatpush1.bf16.msra.mxu0 %v925
        %948 = vmatprep.subr.bf16.mxu0 0
        %949 = vmatpush1.bf16.msra.mxu0 %v924
        %950 = vmatprep.subr.bf16.mxu0 0
        %951 = vmatpush1.bf16.msra.mxu0 %v923
        %952 = vmatprep.subr.bf16.mxu0 0
        %953 = vmatpush1.bf16.msra.mxu0 %v922
        %954 = vmatprep.subr.bf16.mxu0 0
        %955 = vmatpush2.bf16.msra.mxu0 0
        %956 = vmatprep.subr.bf16.mxu0 0
        %957 = vmatpush2.bf16.msra.mxu0 0
        %958 = vmatprep.subr.bf16.mxu0 0
        %959 = vmatpush2.bf16.msra.mxu0 0
        %960 = vmatprep.subr.bf16.mxu0 0
        %961 = vmatpush2.bf16.msra.mxu0 0
        %962 = vmatprep.subr.bf16.mxu0 0
        %963 = vmatpush2.bf16.msra.mxu0 0
        %964 = vmatprep.subr.bf16.mxu0 0
        %965 = vmatpush2.bf16.msra.mxu0 0
        %966 = vmatprep.subr.bf16.mxu0 0
        %967 = vmatpush2.bf16.msra.mxu0 0
        %968 = vmatprep.subr.bf16.mxu0 0
        %969 = vmatpush2.bf16.msra.mxu0 0
        %970 = vmatprep.mubr.bf16.mxu0 0
        %971 = vmatmul.mubr.bf16.gmra.mxu0 %v863
        %v972 = vpop.f32.mrf.mxu0
        %v973 = vadd.f32 %v888, %v972
        %v974 = vpop.f32.mrf.mxu0
        %v975 = vpop.f32.mrf.mxu0
        %v976 = vadd.f32 %v888, %v975
        %v977 = vpop.f32.mrf.mxu0
        %978 = vmatprep.mubr.bf16.mxu0 0
        %979 = vmatmul.mubr.bf16.gmra.mxu0 %v864
        %v980 = vpop.f32.mrf.mxu0
        %v981 = vadd.f32 %v888, %v980
        %v982 = vpop.f32.mrf.mxu0
        %v983 = vpop.f32.mrf.mxu0
        %v984 = vadd.f32 %v888, %v983
        %v985 = vpop.f32.mrf.mxu0
        %986 = vdwg.mxu0
        %v987 = vadd.f32 %v687, %v973
        %v988 = vadd.f32 %v688, %v976
        %v989 = vadd.f32 %v689, %v981
        %v990 = vadd.f32 %v690, %v984
        %v991 = vpack.c.bf16 %v988, %v987
        %v992 = vpack.c.bf16 %v990, %v989
        %v993 = vld [vmem:[#allocation5] sm:$0xf]
        %v994 = vld [vmem:[#allocation5 + $0x4] sm:$0xf]
        %v995 = vld [vmem:[#allocation5 + $0x8] sm:$0xf]
        %v996 = vld [vmem:[#allocation5 + $0xc] sm:$0xf]
        %v997 = vld [vmem:[#allocation5 + $0x10] sm:$0xf]
        %v998 = vld [vmem:[#allocation5 + $0x14] sm:$0xf]
        %v999 = vld [vmem:[#allocation5 + $0x18] sm:$0xf]
        %v1000 = vld [vmem:[#allocation5 + $0x1c] sm:$0xf]
        %v1001 = vld [vmem:[#allocation5 + $0x20] sm:$0xf]
        %v1002 = vld [vmem:[#allocation5 + $0x24] sm:$0xf]
        %v1003 = vld [vmem:[#allocation5 + $0x28] sm:$0xf]
        %v1004 = vld [vmem:[#allocation5 + $0x2c] sm:$0xf]
        %v1005 = vld [vmem:[#allocation5 + $0x30] sm:$0xf]
        %v1006 = vld [vmem:[#allocation5 + $0x34] sm:$0xf]
        %v1007 = vld [vmem:[#allocation5 + $0x38] sm:$0xf]
        %v1008 = vld [vmem:[#allocation5 + $0x3c] sm:$0xf]
        %v1009 = vld [vmem:[%s6] sm:$0x1]
        %v1011 = vlaneseq
        %v1012 = vshrl.u32 %v1011, 7
        %v1013 = vsub.s32 0, %v1012
        %v1014 = vrot.slane %v1009, %v1013
        %v1032 = vunpack.c.l.b16 %v993
        %v1033 = vunpack.c.l.b16 %v994
        %v1034 = vunpack.c.l.b16 %v995
        %v1035 = vunpack.c.l.b16 %v996
        %v1036 = vunpack.c.l.b16 %v997
        %v1037 = vunpack.c.l.b16 %v998
        %v1038 = vunpack.c.l.b16 %v999
        %v1039 = vunpack.c.l.b16 %v1000
        %v1040 = vunpack.c.l.b16 %v1001
        %v1041 = vunpack.c.l.b16 %v1002
        %v1042 = vunpack.c.l.b16 %v1003
        %v1043 = vunpack.c.l.b16 %v1004
        %v1044 = vunpack.c.l.b16 %v1005
        %v1045 = vunpack.c.l.b16 %v1006
        %v1046 = vunpack.c.l.b16 %v1007
        %v1047 = vunpack.c.l.b16 %v1008
        %v1048 = vpack.c.b16 %v1033, %v1032
        %v1049 = vpack.c.b16 %v1035, %v1034
        %v1050 = vpack.c.b16 %v1037, %v1036
        %v1051 = vpack.c.b16 %v1039, %v1038
        %v1052 = vpack.c.b16 %v1041, %v1040
        %v1053 = vpack.c.b16 %v1043, %v1042
        %v1054 = vpack.c.b16 %v1045, %v1044
        %v1055 = vpack.c.b16 %v1047, %v1046
        %1064 = vmatprep.subr.bf16.mxu0 0
        %1065 = vmatpush1.bf16.msra.mxu0 %v1055
        %1066 = vmatprep.subr.bf16.mxu0 0
        %1067 = vmatpush1.bf16.msra.mxu0 %v1054
        %1068 = vmatprep.subr.bf16.mxu0 0
        %1069 = vmatpush1.bf16.msra.mxu0 %v1053
        %1070 = vmatprep.subr.bf16.mxu0 0
        %1071 = vmatpush1.bf16.msra.mxu0 %v1052
        %1072 = vmatprep.subr.bf16.mxu0 0
        %1073 = vmatpush1.bf16.msra.mxu0 %v1051
        %1074 = vmatprep.subr.bf16.mxu0 0
        %1075 = vmatpush1.bf16.msra.mxu0 %v1050
        %1076 = vmatprep.subr.bf16.mxu0 0
        %1077 = vmatpush1.bf16.msra.mxu0 %v1049
        %1078 = vmatprep.subr.bf16.mxu0 0
        %1079 = vmatpush1.bf16.msra.mxu0 %v1048
        %1080 = vmatprep.subr.bf16.mxu0 0
        %1081 = vmatpush2.bf16.msra.mxu0 0
        %1082 = vmatprep.subr.bf16.mxu0 0
        %1083 = vmatpush2.bf16.msra.mxu0 0
        %1084 = vmatprep.subr.bf16.mxu0 0
        %1085 = vmatpush2.bf16.msra.mxu0 0
        %1086 = vmatprep.subr.bf16.mxu0 0
        %1087 = vmatpush2.bf16.msra.mxu0 0
        %1088 = vmatprep.subr.bf16.mxu0 0
        %1089 = vmatpush2.bf16.msra.mxu0 0
        %1090 = vmatprep.subr.bf16.mxu0 0
        %1091 = vmatpush2.bf16.msra.mxu0 0
        %1092 = vmatprep.subr.bf16.mxu0 0
        %1093 = vmatpush2.bf16.msra.mxu0 0
        %1094 = vmatprep.subr.bf16.mxu0 0
        %1095 = vmatpush2.bf16.msra.mxu0 0
        %1096 = vmatprep.mubr.bf16.mxu0 0
        %1097 = vmatmul.mubr.bf16.gmra.mxu0 %v991
        %v1098 = vpop.f32.mrf.mxu0
        %v1099 = vadd.f32 %v1014, %v1098
        %v1100 = vpop.f32.mrf.mxu0
        %v1101 = vpop.f32.mrf.mxu0
        %v1102 = vadd.f32 %v1014, %v1101
        %v1103 = vpop.f32.mrf.mxu0
        %1104 = vmatprep.mubr.bf16.mxu0 0
        %1105 = vmatmul.mubr.bf16.gmra.mxu0 %v992
        %v1106 = vpop.f32.mrf.mxu0
        %v1107 = vadd.f32 %v1014, %v1106
        %v1108 = vpop.f32.mrf.mxu0
        %v1109 = vpop.f32.mrf.mxu0
        %v1110 = vadd.f32 %v1014, %v1109
        %v1111 = vpop.f32.mrf.mxu0
        %1112 = vdwg.mxu0
        %v1113 = vadd.f32 %v1099, 0.0
        %v1114 = vadd.f32 %v1102, 0.0
        %v1115 = vadd.f32 %v1107, 0.0
        %v1116 = vadd.f32 %v1110, 0.0
        %s1117 = scalar_lea.vmem %s1, 2
        %v1118 = vld [vmem:[%s1117] sm:$0x3]
        %s1119 = scalar_lea.vmem %s2, 1
        %v1120 = vld [vmem:[%s1119] sm:$0x1]
        %v1122 = vlaneseq
        %v1123 = vshrl.u32 %v1122, 7
        %v1124 = vsub.s32 0, %v1123
        %v1125 = vrot.slane %v1120, %v1124
        %v1128 = vsel %vm340, %v1118, 0
        %1130 = vmatprep.subr.bf16.mxu0 0
        %1131 = vmatpush1.bf16.msra.mxu0 0
        %1132 = vmatprep.subr.bf16.mxu0 0
        %1133 = vmatpush1.bf16.msra.mxu0 0
        %1134 = vmatprep.subr.bf16.mxu0 0
        %1135 = vmatpush1.bf16.msra.mxu0 0
        %1136 = vmatprep.subr.bf16.mxu0 0
        %1137 = vmatpush1.bf16.msra.mxu0 0
        %1138 = vmatprep.subr.bf16.mxu0 0
        %1139 = vmatpush1.bf16.msra.mxu0 0
        %1140 = vmatprep.subr.bf16.mxu0 0
        %1141 = vmatpush1.bf16.msra.mxu0 0
        %1142 = vmatprep.subr.bf16.mxu0 0
        %1143 = vmatpush1.bf16.msra.mxu0 0
        %1144 = vmatprep.subr.bf16.mxu0 0
        %1145 = vmatpush1.bf16.msra.mxu0 %v1128
        %1146 = vmatprep.subr.bf16.mxu0 0
        %1147 = vmatpush2.bf16.msra.mxu0 0
        %1148 = vmatprep.subr.bf16.mxu0 0
        %1149 = vmatpush2.bf16.msra.mxu0 0
        %1150 = vmatprep.subr.bf16.mxu0 0
        %1151 = vmatpush2.bf16.msra.mxu0 0
        %1152 = vmatprep.subr.bf16.mxu0 0
        %1153 = vmatpush2.bf16.msra.mxu0 0
        %1154 = vmatprep.subr.bf16.mxu0 0
        %1155 = vmatpush2.bf16.msra.mxu0 0
        %1156 = vmatprep.subr.bf16.mxu0 0
        %1157 = vmatpush2.bf16.msra.mxu0 0
        %1158 = vmatprep.subr.bf16.mxu0 0
        %1159 = vmatpush2.bf16.msra.mxu0 0
        %1160 = vmatprep.subr.bf16.mxu0 0
        %1161 = vmatpush2.bf16.msra.mxu0 0
        %1162 = vmatprep.mubr.bf16.mxu0 0
        %1163 = vmatmul.mubr.bf16.gmra.mxu0 %v335
        %v1164 = vpop.f32.mrf.mxu0
        %v1165 = vadd.f32 %v1125, %v1164
        %v1166 = vpop.f32.mrf.mxu0
        %v1167 = vpop.f32.mrf.mxu0
        %v1168 = vadd.f32 %v1125, %v1167
        %v1169 = vpop.f32.mrf.mxu0
        %1170 = vmatprep.mubr.bf16.mxu0 0
        %1171 = vmatmul.mubr.bf16.gmra.mxu0 %v338
        %v1172 = vpop.f32.mrf.mxu0
        %v1173 = vadd.f32 %v1125, %v1172
        %v1174 = vpop.f32.mrf.mxu0
        %v1175 = vpop.f32.mrf.mxu0
        %v1176 = vadd.f32 %v1125, %v1175
        %v1177 = vpop.f32.mrf.mxu0
        %1178 = vdwg.mxu0
        %vm1179 = vcmp.gt.f32.partialorder %v1165, 0.0
        %vm1180 = vcmp.gt.f32.partialorder %v1168, 0.0
        %vm1181 = vcmp.gt.f32.partialorder %v1173, 0.0
        %vm1182 = vcmp.gt.f32.partialorder %v1176, 0.0
        %v1183 = vmin.f32 %v1165, 0.0
        %v1184 = vmin.f32 %v1168, 0.0
        %v1185 = vmin.f32 %v1173, 0.0
        %v1186 = vmin.f32 %v1176, 0.0
        %v1187 = vmul.f32 %v1183, 1.442695
        %v1188 = vpow.pop %v1187
        %v1189 = vmul.f32 %v1184, 1.442695
        %v1190 = vpow.pop %v1189
        %v1191 = vmul.f32 %v1185, 1.442695
        %v1192 = vpow.pop %v1191
        %v1193 = vmul.f32 %v1186, 1.442695
        %v1194 = vpow.pop %v1193
        %v1195 = vsub.f32 %v1188, 1.0
        %v1196 = vsub.f32 %v1190, 1.0
        %v1197 = vsub.f32 %v1192, 1.0
        %v1198 = vsub.f32 %v1194, 1.0
        %v1199 = vsel %vm1179, %v1165, %v1195
        %v1200 = vsel %vm1180, %v1168, %v1196
        %v1201 = vsel %vm1181, %v1173, %v1197
        %v1202 = vsel %vm1182, %v1176, %v1198
        %v1203 = vpack.c.bf16 %v1200, %v1199
        %v1204 = vpack.c.bf16 %v1202, %v1201
        %s1205 = scalar_lea.vmem [#allocation2], 256
        %v1206 = vld [vmem:[%s1205] sm:$0xf]
        %v1207 = vld [vmem:[%s1205 + $0x4] sm:$0xf]
        %v1208 = vld [vmem:[%s1205 + $0x8] sm:$0xf]
        %v1209 = vld [vmem:[%s1205 + $0xc] sm:$0xf]
        %v1210 = vld [vmem:[%s1205 + $0x10] sm:$0xf]
        %v1211 = vld [vmem:[%s1205 + $0x14] sm:$0xf]
        %v1212 = vld [vmem:[%s1205 + $0x18] sm:$0xf]
        %v1213 = vld [vmem:[%s1205 + $0x1c] sm:$0xf]
        %v1214 = vld [vmem:[%s1205 + $0x20] sm:$0xf]
        %v1215 = vld [vmem:[%s1205 + $0x24] sm:$0xf]
        %v1216 = vld [vmem:[%s1205 + $0x28] sm:$0xf]
        %v1217 = vld [vmem:[%s1205 + $0x2c] sm:$0xf]
        %v1218 = vld [vmem:[%s1205 + $0x30] sm:$0xf]
        %v1219 = vld [vmem:[%s1205 + $0x34] sm:$0xf]
        %v1220 = vld [vmem:[%s1205 + $0x38] sm:$0xf]
        %v1221 = vld [vmem:[%s1205 + $0x3c] sm:$0xf]
        %s1222 = scalar_lea.vmem %s4, 4
        %v1223 = vld [vmem:[%s1222] sm:$0x1]
        %v1225 = vlaneseq
        %v1226 = vshrl.u32 %v1225, 7
        %v1227 = vsub.s32 0, %v1226
        %v1228 = vrot.slane %v1223, %v1227
        %v1246 = vunpack.c.l.b16 %v1206
        %v1247 = vunpack.c.l.b16 %v1207
        %v1248 = vunpack.c.l.b16 %v1208
        %v1249 = vunpack.c.l.b16 %v1209
        %v1250 = vunpack.c.l.b16 %v1210
        %v1251 = vunpack.c.l.b16 %v1211
        %v1252 = vunpack.c.l.b16 %v1212
        %v1253 = vunpack.c.l.b16 %v1213
        %v1254 = vunpack.c.l.b16 %v1214
        %v1255 = vunpack.c.l.b16 %v1215
        %v1256 = vunpack.c.l.b16 %v1216
        %v1257 = vunpack.c.l.b16 %v1217
        %v1258 = vunpack.c.l.b16 %v1218
        %v1259 = vunpack.c.l.b16 %v1219
        %v1260 = vunpack.c.l.b16 %v1220
        %v1261 = vunpack.c.l.b16 %v1221
        %v1262 = vpack.c.b16 %v1247, %v1246
        %v1263 = vpack.c.b16 %v1249, %v1248
        %v1264 = vpack.c.b16 %v1251, %v1250
        %v1265 = vpack.c.b16 %v1253, %v1252
        %v1266 = vpack.c.b16 %v1255, %v1254
        %v1267 = vpack.c.b16 %v1257, %v1256
        %v1268 = vpack.c.b16 %v1259, %v1258
        %v1269 = vpack.c.b16 %v1261, %v1260
        %1278 = vmatprep.subr.bf16.mxu0 0
        %1279 = vmatpush1.bf16.msra.mxu0 %v1269
        %1280 = vmatprep.subr.bf16.mxu0 0
        %1281 = vmatpush1.bf16.msra.mxu0 %v1268
        %1282 = vmatprep.subr.bf16.mxu0 0
        %1283 = vmatpush1.bf16.msra.mxu0 %v1267
        %1284 = vmatprep.subr.bf16.mxu0 0
        %1285 = vmatpush1.bf16.msra.mxu0 %v1266
        %1286 = vmatprep.subr.bf16.mxu0 0
        %1287 = vmatpush1.bf16.msra.mxu0 %v1265
        %1288 = vmatprep.subr.bf16.mxu0 0
        %1289 = vmatpush1.bf16.msra.mxu0 %v1264
        %1290 = vmatprep.subr.bf16.mxu0 0
        %1291 = vmatpush1.bf16.msra.mxu0 %v1263
        %1292 = vmatprep.subr.bf16.mxu0 0
        %1293 = vmatpush1.bf16.msra.mxu0 %v1262
        %1294 = vmatprep.subr.bf16.mxu0 0
        %1295 = vmatpush2.bf16.msra.mxu0 0
        %1296 = vmatprep.subr.bf16.mxu0 0
        %1297 = vmatpush2.bf16.msra.mxu0 0
        %1298 = vmatprep.subr.bf16.mxu0 0
        %1299 = vmatpush2.bf16.msra.mxu0 0
        %1300 = vmatprep.subr.bf16.mxu0 0
        %1301 = vmatpush2.bf16.msra.mxu0 0
        %1302 = vmatprep.subr.bf16.mxu0 0
        %1303 = vmatpush2.bf16.msra.mxu0 0
        %1304 = vmatprep.subr.bf16.mxu0 0
        %1305 = vmatpush2.bf16.msra.mxu0 0
        %1306 = vmatprep.subr.bf16.mxu0 0
        %1307 = vmatpush2.bf16.msra.mxu0 0
        %1308 = vmatprep.subr.bf16.mxu0 0
        %1309 = vmatpush2.bf16.msra.mxu0 0
        %1310 = vmatprep.mubr.bf16.mxu0 0
        %1311 = vmatmul.mubr.bf16.gmra.mxu0 %v1203
        %v1312 = vpop.f32.mrf.mxu0
        %v1313 = vadd.f32 %v1228, %v1312
        %v1314 = vpop.f32.mrf.mxu0
        %v1315 = vpop.f32.mrf.mxu0
        %v1316 = vadd.f32 %v1228, %v1315
        %v1317 = vpop.f32.mrf.mxu0
        %1318 = vmatprep.mubr.bf16.mxu0 0
        %1319 = vmatmul.mubr.bf16.gmra.mxu0 %v1204
        %v1320 = vpop.f32.mrf.mxu0
        %v1321 = vadd.f32 %v1228, %v1320
        %v1322 = vpop.f32.mrf.mxu0
        %v1323 = vpop.f32.mrf.mxu0
        %v1324 = vadd.f32 %v1228, %v1323
        %v1325 = vpop.f32.mrf.mxu0
        %1326 = vdwg.mxu0
        %vm1327 = vcmp.gt.f32.partialorder %v1313, 0.0
        %vm1328 = vcmp.gt.f32.partialorder %v1316, 0.0
        %vm1329 = vcmp.gt.f32.partialorder %v1321, 0.0
        %vm1330 = vcmp.gt.f32.partialorder %v1324, 0.0
        %v1331 = vmin.f32 %v1313, 0.0
        %v1332 = vmin.f32 %v1316, 0.0
        %v1333 = vmin.f32 %v1321, 0.0
        %v1334 = vmin.f32 %v1324, 0.0
        %v1335 = vmul.f32 %v1331, 1.442695
        %v1336 = vpow.pop %v1335
        %v1337 = vmul.f32 %v1332, 1.442695
        %v1338 = vpow.pop %v1337
        %v1339 = vmul.f32 %v1333, 1.442695
        %v1340 = vpow.pop %v1339
        %v1341 = vmul.f32 %v1334, 1.442695
        %v1342 = vpow.pop %v1341
        %v1343 = vsub.f32 %v1336, 1.0
        %v1344 = vsub.f32 %v1338, 1.0
        %v1345 = vsub.f32 %v1340, 1.0
        %v1346 = vsub.f32 %v1342, 1.0
        %v1347 = vsel %vm1327, %v1313, %v1343
        %v1348 = vsel %vm1328, %v1316, %v1344
        %v1349 = vsel %vm1329, %v1321, %v1345
        %v1350 = vsel %vm1330, %v1324, %v1346
        %v1351 = vpack.c.bf16 %v1348, %v1347
        %v1352 = vpack.c.bf16 %v1350, %v1349
        %s1353 = scalar_lea.vmem [#allocation2], 320
        %v1354 = vld [vmem:[%s1353] sm:$0xf]
        %v1355 = vld [vmem:[%s1353 + $0x4] sm:$0xf]
        %v1356 = vld [vmem:[%s1353 + $0x8] sm:$0xf]
        %v1357 = vld [vmem:[%s1353 + $0xc] sm:$0xf]
        %v1358 = vld [vmem:[%s1353 + $0x10] sm:$0xf]
        %v1359 = vld [vmem:[%s1353 + $0x14] sm:$0xf]
        %v1360 = vld [vmem:[%s1353 + $0x18] sm:$0xf]
        %v1361 = vld [vmem:[%s1353 + $0x1c] sm:$0xf]
        %v1362 = vld [vmem:[%s1353 + $0x20] sm:$0xf]
        %v1363 = vld [vmem:[%s1353 + $0x24] sm:$0xf]
        %v1364 = vld [vmem:[%s1353 + $0x28] sm:$0xf]
        %v1365 = vld [vmem:[%s1353 + $0x2c] sm:$0xf]
        %v1366 = vld [vmem:[%s1353 + $0x30] sm:$0xf]
        %v1367 = vld [vmem:[%s1353 + $0x34] sm:$0xf]
        %v1368 = vld [vmem:[%s1353 + $0x38] sm:$0xf]
        %v1369 = vld [vmem:[%s1353 + $0x3c] sm:$0xf]
        %s1370 = scalar_lea.vmem %s4, 5
        %v1371 = vld [vmem:[%s1370] sm:$0x1]
        %v1373 = vlaneseq
        %v1374 = vshrl.u32 %v1373, 7
        %v1375 = vsub.s32 0, %v1374
        %v1376 = vrot.slane %v1371, %v1375
        %v1394 = vunpack.c.l.b16 %v1354
        %v1395 = vunpack.c.l.b16 %v1355
        %v1396 = vunpack.c.l.b16 %v1356
        %v1397 = vunpack.c.l.b16 %v1357
        %v1398 = vunpack.c.l.b16 %v1358
        %v1399 = vunpack.c.l.b16 %v1359
        %v1400 = vunpack.c.l.b16 %v1360
        %v1401 = vunpack.c.l.b16 %v1361
        %v1402 = vunpack.c.l.b16 %v1362
        %v1403 = vunpack.c.l.b16 %v1363
        %v1404 = vunpack.c.l.b16 %v1364
        %v1405 = vunpack.c.l.b16 %v1365
        %v1406 = vunpack.c.l.b16 %v1366
        %v1407 = vunpack.c.l.b16 %v1367
        %v1408 = vunpack.c.l.b16 %v1368
        %v1409 = vunpack.c.l.b16 %v1369
        %v1410 = vpack.c.b16 %v1395, %v1394
        %v1411 = vpack.c.b16 %v1397, %v1396
        %v1412 = vpack.c.b16 %v1399, %v1398
        %v1413 = vpack.c.b16 %v1401, %v1400
        %v1414 = vpack.c.b16 %v1403, %v1402
        %v1415 = vpack.c.b16 %v1405, %v1404
        %v1416 = vpack.c.b16 %v1407, %v1406
        %v1417 = vpack.c.b16 %v1409, %v1408
        %1426 = vmatprep.subr.bf16.mxu0 0
        %1427 = vmatpush1.bf16.msra.mxu0 %v1417
        %1428 = vmatprep.subr.bf16.mxu0 0
        %1429 = vmatpush1.bf16.msra.mxu0 %v1416
        %1430 = vmatprep.subr.bf16.mxu0 0
        %1431 = vmatpush1.bf16.msra.mxu0 %v1415
        %1432 = vmatprep.subr.bf16.mxu0 0
        %1433 = vmatpush1.bf16.msra.mxu0 %v1414
        %1434 = vmatprep.subr.bf16.mxu0 0
        %1435 = vmatpush1.bf16.msra.mxu0 %v1413
        %1436 = vmatprep.subr.bf16.mxu0 0
        %1437 = vmatpush1.bf16.msra.mxu0 %v1412
        %1438 = vmatprep.subr.bf16.mxu0 0
        %1439 = vmatpush1.bf16.msra.mxu0 %v1411
        %1440 = vmatprep.subr.bf16.mxu0 0
        %1441 = vmatpush1.bf16.msra.mxu0 %v1410
        %1442 = vmatprep.subr.bf16.mxu0 0
        %1443 = vmatpush2.bf16.msra.mxu0 0
        %1444 = vmatprep.subr.bf16.mxu0 0
        %1445 = vmatpush2.bf16.msra.mxu0 0
        %1446 = vmatprep.subr.bf16.mxu0 0
        %1447 = vmatpush2.bf16.msra.mxu0 0
        %1448 = vmatprep.subr.bf16.mxu0 0
        %1449 = vmatpush2.bf16.msra.mxu0 0
        %1450 = vmatprep.subr.bf16.mxu0 0
        %1451 = vmatpush2.bf16.msra.mxu0 0
        %1452 = vmatprep.subr.bf16.mxu0 0
        %1453 = vmatpush2.bf16.msra.mxu0 0
        %1454 = vmatprep.subr.bf16.mxu0 0
        %1455 = vmatpush2.bf16.msra.mxu0 0
        %1456 = vmatprep.subr.bf16.mxu0 0
        %1457 = vmatpush2.bf16.msra.mxu0 0
        %1458 = vmatprep.mubr.bf16.mxu0 0
        %1459 = vmatmul.mubr.bf16.gmra.mxu0 %v1351
        %v1460 = vpop.f32.mrf.mxu0
        %v1461 = vadd.f32 %v1376, %v1460
        %v1462 = vpop.f32.mrf.mxu0
        %v1463 = vpop.f32.mrf.mxu0
        %v1464 = vadd.f32 %v1376, %v1463
        %v1465 = vpop.f32.mrf.mxu0
        %1466 = vmatprep.mubr.bf16.mxu0 0
        %1467 = vmatmul.mubr.bf16.gmra.mxu0 %v1352
        %v1468 = vpop.f32.mrf.mxu0
        %v1469 = vadd.f32 %v1376, %v1468
        %v1470 = vpop.f32.mrf.mxu0
        %v1471 = vpop.f32.mrf.mxu0
        %v1472 = vadd.f32 %v1376, %v1471
        %v1473 = vpop.f32.mrf.mxu0
        %1474 = vdwg.mxu0
        %v1475 = vadd.f32 %v1165, %v1461
        %v1476 = vadd.f32 %v1168, %v1464
        %v1477 = vadd.f32 %v1173, %v1469
        %v1478 = vadd.f32 %v1176, %v1472
        %vm1479 = vcmp.gt.f32.partialorder %v1475, 0.0
        %vm1480 = vcmp.gt.f32.partialorder %v1476, 0.0
        %vm1481 = vcmp.gt.f32.partialorder %v1477, 0.0
        %vm1482 = vcmp.gt.f32.partialorder %v1478, 0.0
        %v1483 = vmin.f32 %v1475, 0.0
        %v1484 = vmin.f32 %v1476, 0.0
        %v1485 = vmin.f32 %v1477, 0.0
        %v1486 = vmin.f32 %v1478, 0.0
        %v1487 = vmul.f32 %v1483, 1.442695
        %v1488 = vpow.pop %v1487
        %v1489 = vmul.f32 %v1484, 1.442695
        %v1490 = vpow.pop %v1489
        %v1491 = vmul.f32 %v1485, 1.442695
        %v1492 = vpow.pop %v1491
        %v1493 = vmul.f32 %v1486, 1.442695
        %v1494 = vpow.pop %v1493
        %v1495 = vsub.f32 %v1488, 1.0
        %v1496 = vsub.f32 %v1490, 1.0
        %v1497 = vsub.f32 %v1492, 1.0
        %v1498 = vsub.f32 %v1494, 1.0
        %v1499 = vsel %vm1479, %v1475, %v1495
        %v1500 = vsel %vm1480, %v1476, %v1496
        %v1501 = vsel %vm1481, %v1477, %v1497
        %v1502 = vsel %vm1482, %v1478, %v1498
        %v1503 = vpack.c.bf16 %v1500, %v1499
        %v1504 = vpack.c.bf16 %v1502, %v1501
        %s1505 = scalar_lea.vmem [#allocation2], 384
        %v1506 = vld [vmem:[%s1505] sm:$0xf]
        %v1507 = vld [vmem:[%s1505 + $0x4] sm:$0xf]
        %v1508 = vld [vmem:[%s1505 + $0x8] sm:$0xf]
        %v1509 = vld [vmem:[%s1505 + $0xc] sm:$0xf]
        %v1510 = vld [vmem:[%s1505 + $0x10] sm:$0xf]
        %v1511 = vld [vmem:[%s1505 + $0x14] sm:$0xf]
        %v1512 = vld [vmem:[%s1505 + $0x18] sm:$0xf]
        %v1513 = vld [vmem:[%s1505 + $0x1c] sm:$0xf]
        %v1514 = vld [vmem:[%s1505 + $0x20] sm:$0xf]
        %v1515 = vld [vmem:[%s1505 + $0x24] sm:$0xf]
        %v1516 = vld [vmem:[%s1505 + $0x28] sm:$0xf]
        %v1517 = vld [vmem:[%s1505 + $0x2c] sm:$0xf]
        %v1518 = vld [vmem:[%s1505 + $0x30] sm:$0xf]
        %v1519 = vld [vmem:[%s1505 + $0x34] sm:$0xf]
        %v1520 = vld [vmem:[%s1505 + $0x38] sm:$0xf]
        %v1521 = vld [vmem:[%s1505 + $0x3c] sm:$0xf]
        %s1522 = scalar_lea.vmem %s4, 6
        %v1523 = vld [vmem:[%s1522] sm:$0x1]
        %v1525 = vlaneseq
        %v1526 = vshrl.u32 %v1525, 7
        %v1527 = vsub.s32 0, %v1526
        %v1528 = vrot.slane %v1523, %v1527
        %v1546 = vunpack.c.l.b16 %v1506
        %v1547 = vunpack.c.l.b16 %v1507
        %v1548 = vunpack.c.l.b16 %v1508
        %v1549 = vunpack.c.l.b16 %v1509
        %v1550 = vunpack.c.l.b16 %v1510
        %v1551 = vunpack.c.l.b16 %v1511
        %v1552 = vunpack.c.l.b16 %v1512
        %v1553 = vunpack.c.l.b16 %v1513
        %v1554 = vunpack.c.l.b16 %v1514
        %v1555 = vunpack.c.l.b16 %v1515
        %v1556 = vunpack.c.l.b16 %v1516
        %v1557 = vunpack.c.l.b16 %v1517
        %v1558 = vunpack.c.l.b16 %v1518
        %v1559 = vunpack.c.l.b16 %v1519
        %v1560 = vunpack.c.l.b16 %v1520
        %v1561 = vunpack.c.l.b16 %v1521
        %v1562 = vpack.c.b16 %v1547, %v1546
        %v1563 = vpack.c.b16 %v1549, %v1548
        %v1564 = vpack.c.b16 %v1551, %v1550
        %v1565 = vpack.c.b16 %v1553, %v1552
        %v1566 = vpack.c.b16 %v1555, %v1554
        %v1567 = vpack.c.b16 %v1557, %v1556
        %v1568 = vpack.c.b16 %v1559, %v1558
        %v1569 = vpack.c.b16 %v1561, %v1560
        %1578 = vmatprep.subr.bf16.mxu0 0
        %1579 = vmatpush1.bf16.msra.mxu0 %v1569
        %1580 = vmatprep.subr.bf16.mxu0 0
        %1581 = vmatpush1.bf16.msra.mxu0 %v1568
        %1582 = vmatprep.subr.bf16.mxu0 0
        %1583 = vmatpush1.bf16.msra.mxu0 %v1567
        %1584 = vmatprep.subr.bf16.mxu0 0
        %1585 = vmatpush1.bf16.msra.mxu0 %v1566
        %1586 = vmatprep.subr.bf16.mxu0 0
        %1587 = vmatpush1.bf16.msra.mxu0 %v1565
        %1588 = vmatprep.subr.bf16.mxu0 0
        %1589 = vmatpush1.bf16.msra.mxu0 %v1564
        %1590 = vmatprep.subr.bf16.mxu0 0
        %1591 = vmatpush1.bf16.msra.mxu0 %v1563
        %1592 = vmatprep.subr.bf16.mxu0 0
        %1593 = vmatpush1.bf16.msra.mxu0 %v1562
        %1594 = vmatprep.subr.bf16.mxu0 0
        %1595 = vmatpush2.bf16.msra.mxu0 0
        %1596 = vmatprep.subr.bf16.mxu0 0
        %1597 = vmatpush2.bf16.msra.mxu0 0
        %1598 = vmatprep.subr.bf16.mxu0 0
        %1599 = vmatpush2.bf16.msra.mxu0 0
        %1600 = vmatprep.subr.bf16.mxu0 0
        %1601 = vmatpush2.bf16.msra.mxu0 0
        %1602 = vmatprep.subr.bf16.mxu0 0
        %1603 = vmatpush2.bf16.msra.mxu0 0
        %1604 = vmatprep.subr.bf16.mxu0 0
        %1605 = vmatpush2.bf16.msra.mxu0 0
        %1606 = vmatprep.subr.bf16.mxu0 0
        %1607 = vmatpush2.bf16.msra.mxu0 0
        %1608 = vmatprep.subr.bf16.mxu0 0
        %1609 = vmatpush2.bf16.msra.mxu0 0
        %1610 = vmatprep.mubr.bf16.mxu0 0
        %1611 = vmatmul.mubr.bf16.gmra.mxu0 %v1503
        %v1612 = vpop.f32.mrf.mxu0
        %v1613 = vadd.f32 %v1528, %v1612
        %v1614 = vpop.f32.mrf.mxu0
        %v1615 = vpop.f32.mrf.mxu0
        %v1616 = vadd.f32 %v1528, %v1615
        %v1617 = vpop.f32.mrf.mxu0
        %1618 = vmatprep.mubr.bf16.mxu0 0
        %1619 = vmatmul.mubr.bf16.gmra.mxu0 %v1504
        %v1620 = vpop.f32.mrf.mxu0
        %v1621 = vadd.f32 %v1528, %v1620
        %v1622 = vpop.f32.mrf.mxu0
        %v1623 = vpop.f32.mrf.mxu0
        %v1624 = vadd.f32 %v1528, %v1623
        %v1625 = vpop.f32.mrf.mxu0
        %1626 = vdwg.mxu0
        %vm1627 = vcmp.gt.f32.partialorder %v1613, 0.0
        %vm1628 = vcmp.gt.f32.partialorder %v1616, 0.0
        %vm1629 = vcmp.gt.f32.partialorder %v1621, 0.0
        %vm1630 = vcmp.gt.f32.partialorder %v1624, 0.0
        %v1631 = vmin.f32 %v1613, 0.0
        %v1632 = vmin.f32 %v1616, 0.0
        %v1633 = vmin.f32 %v1621, 0.0
        %v1634 = vmin.f32 %v1624, 0.0
        %v1635 = vmul.f32 %v1631, 1.442695
        %v1636 = vpow.pop %v1635
        %v1637 = vmul.f32 %v1632, 1.442695
        %v1638 = vpow.pop %v1637
        %v1639 = vmul.f32 %v1633, 1.442695
        %v1640 = vpow.pop %v1639
        %v1641 = vmul.f32 %v1634, 1.442695
        %v1642 = vpow.pop %v1641
        %v1643 = vsub.f32 %v1636, 1.0
        %v1644 = vsub.f32 %v1638, 1.0
        %v1645 = vsub.f32 %v1640, 1.0
        %v1646 = vsub.f32 %v1642, 1.0
        %v1647 = vsel %vm1627, %v1613, %v1643
        %v1648 = vsel %vm1628, %v1616, %v1644
        %v1649 = vsel %vm1629, %v1621, %v1645
        %v1650 = vsel %vm1630, %v1624, %v1646
        %v1651 = vpack.c.bf16 %v1648, %v1647
        %v1652 = vpack.c.bf16 %v1650, %v1649
        %s1653 = scalar_lea.vmem [#allocation2], 448
        %v1654 = vld [vmem:[%s1653] sm:$0xf]
        %v1655 = vld [vmem:[%s1653 + $0x4] sm:$0xf]
        %v1656 = vld [vmem:[%s1653 + $0x8] sm:$0xf]
        %v1657 = vld [vmem:[%s1653 + $0xc] sm:$0xf]
        %v1658 = vld [vmem:[%s1653 + $0x10] sm:$0xf]
        %v1659 = vld [vmem:[%s1653 + $0x14] sm:$0xf]
        %v1660 = vld [vmem:[%s1653 + $0x18] sm:$0xf]
        %v1661 = vld [vmem:[%s1653 + $0x1c] sm:$0xf]
        %v1662 = vld [vmem:[%s1653 + $0x20] sm:$0xf]
        %v1663 = vld [vmem:[%s1653 + $0x24] sm:$0xf]
        %v1664 = vld [vmem:[%s1653 + $0x28] sm:$0xf]
        %v1665 = vld [vmem:[%s1653 + $0x2c] sm:$0xf]
        %v1666 = vld [vmem:[%s1653 + $0x30] sm:$0xf]
        %v1667 = vld [vmem:[%s1653 + $0x34] sm:$0xf]
        %v1668 = vld [vmem:[%s1653 + $0x38] sm:$0xf]
        %v1669 = vld [vmem:[%s1653 + $0x3c] sm:$0xf]
        %s1670 = scalar_lea.vmem %s4, 7
        %v1671 = vld [vmem:[%s1670] sm:$0x1]
        %v1673 = vlaneseq
        %v1674 = vshrl.u32 %v1673, 7
        %v1675 = vsub.s32 0, %v1674
        %v1676 = vrot.slane %v1671, %v1675
        %v1694 = vunpack.c.l.b16 %v1654
        %v1695 = vunpack.c.l.b16 %v1655
        %v1696 = vunpack.c.l.b16 %v1656
        %v1697 = vunpack.c.l.b16 %v1657
        %v1698 = vunpack.c.l.b16 %v1658
        %v1699 = vunpack.c.l.b16 %v1659
        %v1700 = vunpack.c.l.b16 %v1660
        %v1701 = vunpack.c.l.b16 %v1661
        %v1702 = vunpack.c.l.b16 %v1662
        %v1703 = vunpack.c.l.b16 %v1663
        %v1704 = vunpack.c.l.b16 %v1664
        %v1705 = vunpack.c.l.b16 %v1665
        %v1706 = vunpack.c.l.b16 %v1666
        %v1707 = vunpack.c.l.b16 %v1667
        %v1708 = vunpack.c.l.b16 %v1668
        %v1709 = vunpack.c.l.b16 %v1669
        %v1710 = vpack.c.b16 %v1695, %v1694
        %v1711 = vpack.c.b16 %v1697, %v1696
        %v1712 = vpack.c.b16 %v1699, %v1698
        %v1713 = vpack.c.b16 %v1701, %v1700
        %v1714 = vpack.c.b16 %v1703, %v1702
        %v1715 = vpack.c.b16 %v1705, %v1704
        %v1716 = vpack.c.b16 %v1707, %v1706
        %v1717 = vpack.c.b16 %v1709, %v1708
        %1726 = vmatprep.subr.bf16.mxu0 0
        %1727 = vmatpush1.bf16.msra.mxu0 %v1717
        %1728 = vmatprep.subr.bf16.mxu0 0
        %1729 = vmatpush1.bf16.msra.mxu0 %v1716
        %1730 = vmatprep.subr.bf16.mxu0 0
        %1731 = vmatpush1.bf16.msra.mxu0 %v1715
        %1732 = vmatprep.subr.bf16.mxu0 0
        %1733 = vmatpush1.bf16.msra.mxu0 %v1714
        %1734 = vmatprep.subr.bf16.mxu0 0
        %1735 = vmatpush1.bf16.msra.mxu0 %v1713
        %1736 = vmatprep.subr.bf16.mxu0 0
        %1737 = vmatpush1.bf16.msra.mxu0 %v1712
        %1738 = vmatprep.subr.bf16.mxu0 0
        %1739 = vmatpush1.bf16.msra.mxu0 %v1711
        %1740 = vmatprep.subr.bf16.mxu0 0
        %1741 = vmatpush1.bf16.msra.mxu0 %v1710
        %1742 = vmatprep.subr.bf16.mxu0 0
        %1743 = vmatpush2.bf16.msra.mxu0 0
        %1744 = vmatprep.subr.bf16.mxu0 0
        %1745 = vmatpush2.bf16.msra.mxu0 0
        %1746 = vmatprep.subr.bf16.mxu0 0
        %1747 = vmatpush2.bf16.msra.mxu0 0
        %1748 = vmatprep.subr.bf16.mxu0 0
        %1749 = vmatpush2.bf16.msra.mxu0 0
        %1750 = vmatprep.subr.bf16.mxu0 0
        %1751 = vmatpush2.bf16.msra.mxu0 0
        %1752 = vmatprep.subr.bf16.mxu0 0
        %1753 = vmatpush2.bf16.msra.mxu0 0
        %1754 = vmatprep.subr.bf16.mxu0 0
        %1755 = vmatpush2.bf16.msra.mxu0 0
        %1756 = vmatprep.subr.bf16.mxu0 0
        %1757 = vmatpush2.bf16.msra.mxu0 0
        %1758 = vmatprep.mubr.bf16.mxu0 0
        %1759 = vmatmul.mubr.bf16.gmra.mxu0 %v1651
        %v1760 = vpop.f32.mrf.mxu0
        %v1761 = vadd.f32 %v1676, %v1760
        %v1762 = vpop.f32.mrf.mxu0
        %v1763 = vpop.f32.mrf.mxu0
        %v1764 = vadd.f32 %v1676, %v1763
        %v1765 = vpop.f32.mrf.mxu0
        %1766 = vmatprep.mubr.bf16.mxu0 0
        %1767 = vmatmul.mubr.bf16.gmra.mxu0 %v1652
        %v1768 = vpop.f32.mrf.mxu0
        %v1769 = vadd.f32 %v1676, %v1768
        %v1770 = vpop.f32.mrf.mxu0
        %v1771 = vpop.f32.mrf.mxu0
        %v1772 = vadd.f32 %v1676, %v1771
        %v1773 = vpop.f32.mrf.mxu0
        %1774 = vdwg.mxu0
        %v1775 = vadd.f32 %v1475, %v1761
        %v1776 = vadd.f32 %v1476, %v1764
        %v1777 = vadd.f32 %v1477, %v1769
        %v1778 = vadd.f32 %v1478, %v1772
        %v1779 = vpack.c.bf16 %v1776, %v1775
        %v1780 = vpack.c.bf16 %v1778, %v1777
        %s1781 = scalar_lea.vmem [#allocation5], 64
        %v1782 = vld [vmem:[%s1781] sm:$0xf]
        %v1783 = vld [vmem:[%s1781 + $0x4] sm:$0xf]
        %v1784 = vld [vmem:[%s1781 + $0x8] sm:$0xf]
        %v1785 = vld [vmem:[%s1781 + $0xc] sm:$0xf]
        %v1786 = vld [vmem:[%s1781 + $0x10] sm:$0xf]
        %v1787 = vld [vmem:[%s1781 + $0x14] sm:$0xf]
        %v1788 = vld [vmem:[%s1781 + $0x18] sm:$0xf]
        %v1789 = vld [vmem:[%s1781 + $0x1c] sm:$0xf]
        %v1790 = vld [vmem:[%s1781 + $0x20] sm:$0xf]
        %v1791 = vld [vmem:[%s1781 + $0x24] sm:$0xf]
        %v1792 = vld [vmem:[%s1781 + $0x28] sm:$0xf]
        %v1793 = vld [vmem:[%s1781 + $0x2c] sm:$0xf]
        %v1794 = vld [vmem:[%s1781 + $0x30] sm:$0xf]
        %v1795 = vld [vmem:[%s1781 + $0x34] sm:$0xf]
        %v1796 = vld [vmem:[%s1781 + $0x38] sm:$0xf]
        %v1797 = vld [vmem:[%s1781 + $0x3c] sm:$0xf]
        %s1798 = scalar_lea.vmem %s6, 1
        %v1799 = vld [vmem:[%s1798] sm:$0x1]
        %v1801 = vlaneseq
        %v1802 = vshrl.u32 %v1801, 7
        %v1803 = vsub.s32 0, %v1802
        %v1804 = vrot.slane %v1799, %v1803
        %v1822 = vunpack.c.l.b16 %v1782
        %v1823 = vunpack.c.l.b16 %v1783
        %v1824 = vunpack.c.l.b16 %v1784
        %v1825 = vunpack.c.l.b16 %v1785
        %v1826 = vunpack.c.l.b16 %v1786
        %v1827 = vunpack.c.l.b16 %v1787
        %v1828 = vunpack.c.l.b16 %v1788
        %v1829 = vunpack.c.l.b16 %v1789
        %v1830 = vunpack.c.l.b16 %v1790
        %v1831 = vunpack.c.l.b16 %v1791
        %v1832 = vunpack.c.l.b16 %v1792
        %v1833 = vunpack.c.l.b16 %v1793
        %v1834 = vunpack.c.l.b16 %v1794
        %v1835 = vunpack.c.l.b16 %v1795
        %v1836 = vunpack.c.l.b16 %v1796
        %v1837 = vunpack.c.l.b16 %v1797
        %v1838 = vpack.c.b16 %v1823, %v1822
        %v1839 = vpack.c.b16 %v1825, %v1824
        %v1840 = vpack.c.b16 %v1827, %v1826
        %v1841 = vpack.c.b16 %v1829, %v1828
        %v1842 = vpack.c.b16 %v1831, %v1830
        %v1843 = vpack.c.b16 %v1833, %v1832
        %v1844 = vpack.c.b16 %v1835, %v1834
        %v1845 = vpack.c.b16 %v1837, %v1836
        %1854 = vmatprep.subr.bf16.mxu0 0
        %1855 = vmatpush1.bf16.msra.mxu0 %v1845
        %1856 = vmatprep.subr.bf16.mxu0 0
        %1857 = vmatpush1.bf16.msra.mxu0 %v1844
        %1858 = vmatprep.subr.bf16.mxu0 0
        %1859 = vmatpush1.bf16.msra.mxu0 %v1843
        %1860 = vmatprep.subr.bf16.mxu0 0
        %1861 = vmatpush1.bf16.msra.mxu0 %v1842
        %1862 = vmatprep.subr.bf16.mxu0 0
        %1863 = vmatpush1.bf16.msra.mxu0 %v1841
        %1864 = vmatprep.subr.bf16.mxu0 0
        %1865 = vmatpush1.bf16.msra.mxu0 %v1840
        %1866 = vmatprep.subr.bf16.mxu0 0
        %1867 = vmatpush1.bf16.msra.mxu0 %v1839
        %1868 = vmatprep.subr.bf16.mxu0 0
        %1869 = vmatpush1.bf16.msra.mxu0 %v1838
        %1870 = vmatprep.subr.bf16.mxu0 0
        %1871 = vmatpush2.bf16.msra.mxu0 0
        %1872 = vmatprep.subr.bf16.mxu0 0
        %1873 = vmatpush2.bf16.msra.mxu0 0
        %1874 = vmatprep.subr.bf16.mxu0 0
        %1875 = vmatpush2.bf16.msra.mxu0 0
        %1876 = vmatprep.subr.bf16.mxu0 0
        %1877 = vmatpush2.bf16.msra.mxu0 0
        %1878 = vmatprep.subr.bf16.mxu0 0
        %1879 = vmatpush2.bf16.msra.mxu0 0
        %1880 = vmatprep.subr.bf16.mxu0 0
        %1881 = vmatpush2.bf16.msra.mxu0 0
        %1882 = vmatprep.subr.bf16.mxu0 0
        %1883 = vmatpush2.bf16.msra.mxu0 0
        %1884 = vmatprep.subr.bf16.mxu0 0
        %1885 = vmatpush2.bf16.msra.mxu0 0
        %1886 = vmatprep.mubr.bf16.mxu0 0
        %1887 = vmatmul.mubr.bf16.gmra.mxu0 %v1779
        %v1888 = vpop.f32.mrf.mxu0
        %v1889 = vadd.f32 %v1804, %v1888
        %v1890 = vpop.f32.mrf.mxu0
        %v1891 = vpop.f32.mrf.mxu0
        %v1892 = vadd.f32 %v1804, %v1891
        %v1893 = vpop.f32.mrf.mxu0
        %1894 = vmatprep.mubr.bf16.mxu0 0
        %1895 = vmatmul.mubr.bf16.gmra.mxu0 %v1780
        %v1896 = vpop.f32.mrf.mxu0
        %v1897 = vadd.f32 %v1804, %v1896
        %v1898 = vpop.f32.mrf.mxu0
        %v1899 = vpop.f32.mrf.mxu0
        %v1900 = vadd.f32 %v1804, %v1899
        %v1901 = vpop.f32.mrf.mxu0
        %1902 = vdwg.mxu0
        %v1903 = vadd.f32 %v1113, %v1889
        %v1904 = vadd.f32 %v1114, %v1892
        %v1905 = vadd.f32 %v1115, %v1897
        %v1906 = vadd.f32 %v1116, %v1900
        %s1907 = scalar_lea.vmem %s1, 4
        %v1908 = vld [vmem:[%s1907] sm:$0x3]
        %s1909 = scalar_lea.vmem %s2, 2
        %v1910 = vld [vmem:[%s1909] sm:$0x1]
        %v1912 = vlaneseq
        %v1913 = vshrl.u32 %v1912, 7
        %v1914 = vsub.s32 0, %v1913
        %v1915 = vrot.slane %v1910, %v1914
        %v1918 = vsel %vm340, %v1908, 0
        %1920 = vmatprep.subr.bf16.mxu0 0
        %1921 = vmatpush1.bf16.msra.mxu0 0
        %1922 = vmatprep.subr.bf16.mxu0 0
        %1923 = vmatpush1.bf16.msra.mxu0 0
        %1924 = vmatprep.subr.bf16.mxu0 0
        %1925 = vmatpush1.bf16.msra.mxu0 0
        %1926 = vmatprep.subr.bf16.mxu0 0
        %1927 = vmatpush1.bf16.msra.mxu0 0
        %1928 = vmatprep.subr.bf16.mxu0 0
        %1929 = vmatpush1.bf16.msra.mxu0 0
        %1930 = vmatprep.subr.bf16.mxu0 0
        %1931 = vmatpush1.bf16.msra.mxu0 0
        %1932 = vmatprep.subr.bf16.mxu0 0
        %1933 = vmatpush1.bf16.msra.mxu0 0
        %1934 = vmatprep.subr.bf16.mxu0 0
        %1935 = vmatpush1.bf16.msra.mxu0 %v1918
        %1936 = vmatprep.subr.bf16.mxu0 0
        %1937 = vmatpush2.bf16.msra.mxu0 0
        %1938 = vmatprep.subr.bf16.mxu0 0
        %1939 = vmatpush2.bf16.msra.mxu0 0
        %1940 = vmatprep.subr.bf16.mxu0 0
        %1941 = vmatpush2.bf16.msra.mxu0 0
        %1942 = vmatprep.subr.bf16.mxu0 0
        %1943 = vmatpush2.bf16.msra.mxu0 0
        %1944 = vmatprep.subr.bf16.mxu0 0
        %1945 = vmatpush2.bf16.msra.mxu0 0
        %1946 = vmatprep.subr.bf16.mxu0 0
        %1947 = vmatpush2.bf16.msra.mxu0 0
        %1948 = vmatprep.subr.bf16.mxu0 0
        %1949 = vmatpush2.bf16.msra.mxu0 0
        %1950 = vmatprep.subr.bf16.mxu0 0
        %1951 = vmatpush2.bf16.msra.mxu0 0
        %1952 = vmatprep.mubr.bf16.mxu0 0
        %1953 = vmatmul.mubr.bf16.gmra.mxu0 %v335
        %v1954 = vpop.f32.mrf.mxu0
        %v1955 = vadd.f32 %v1915, %v1954
        %v1956 = vpop.f32.mrf.mxu0
        %v1957 = vpop.f32.mrf.mxu0
        %v1958 = vadd.f32 %v1915, %v1957
        %v1959 = vpop.f32.mrf.mxu0
        %1960 = vmatprep.mubr.bf16.mxu0 0
        %1961 = vmatmul.mubr.bf16.gmra.mxu0 %v338
        %v1962 = vpop.f32.mrf.mxu0
        %v1963 = vadd.f32 %v1915, %v1962
        %v1964 = vpop.f32.mrf.mxu0
        %v1965 = vpop.f32.mrf.mxu0
        %v1966 = vadd.f32 %v1915, %v1965
        %v1967 = vpop.f32.mrf.mxu0
        %1968 = vdwg.mxu0
        %vm1969 = vcmp.gt.f32.partialorder %v1955, 0.0
        %vm1970 = vcmp.gt.f32.partialorder %v1958, 0.0
        %vm1971 = vcmp.gt.f32.partialorder %v1963, 0.0
        %vm1972 = vcmp.gt.f32.partialorder %v1966, 0.0
        %v1973 = vmin.f32 %v1955, 0.0
        %v1974 = vmin.f32 %v1958, 0.0
        %v1975 = vmin.f32 %v1963, 0.0
        %v1976 = vmin.f32 %v1966, 0.0
        %v1977 = vmul.f32 %v1973, 1.442695
        %v1978 = vpow.pop %v1977
        %v1979 = vmul.f32 %v1974, 1.442695
        %v1980 = vpow.pop %v1979
        %v1981 = vmul.f32 %v1975, 1.442695
        %v1982 = vpow.pop %v1981
        %v1983 = vmul.f32 %v1976, 1.442695
        %v1984 = vpow.pop %v1983
        %v1985 = vsub.f32 %v1978, 1.0
        %v1986 = vsub.f32 %v1980, 1.0
        %v1987 = vsub.f32 %v1982, 1.0
        %v1988 = vsub.f32 %v1984, 1.0
        %v1989 = vsel %vm1969, %v1955, %v1985
        %v1990 = vsel %vm1970, %v1958, %v1986
        %v1991 = vsel %vm1971, %v1963, %v1987
        %v1992 = vsel %vm1972, %v1966, %v1988
        %v1993 = vpack.c.bf16 %v1990, %v1989
        %v1994 = vpack.c.bf16 %v1992, %v1991
        %s1995 = scalar_lea.vmem [#allocation2], 512
        %v1996 = vld [vmem:[%s1995] sm:$0xf]
        %v1997 = vld [vmem:[%s1995 + $0x4] sm:$0xf]
        %v1998 = vld [vmem:[%s1995 + $0x8] sm:$0xf]
        %v1999 = vld [vmem:[%s1995 + $0xc] sm:$0xf]
        %v2000 = vld [vmem:[%s1995 + $0x10] sm:$0xf]
        %v2001 = vld [vmem:[%s1995 + $0x14] sm:$0xf]
        %v2002 = vld [vmem:[%s1995 + $0x18] sm:$0xf]
        %v2003 = vld [vmem:[%s1995 + $0x1c] sm:$0xf]
        %v2004 = vld [vmem:[%s1995 + $0x20] sm:$0xf]
        %v2005 = vld [vmem:[%s1995 + $0x24] sm:$0xf]
        %v2006 = vld [vmem:[%s1995 + $0x28] sm:$0xf]
        %v2007 = vld [vmem:[%s1995 + $0x2c] sm:$0xf]
        %v2008 = vld [vmem:[%s1995 + $0x30] sm:$0xf]
        %v2009 = vld [vmem:[%s1995 + $0x34] sm:$0xf]
        %v2010 = vld [vmem:[%s1995 + $0x38] sm:$0xf]
        %v2011 = vld [vmem:[%s1995 + $0x3c] sm:$0xf]
        %s2012 = scalar_lea.vmem %s4, 8
        %v2013 = vld [vmem:[%s2012] sm:$0x1]
        %v2015 = vlaneseq
        %v2016 = vshrl.u32 %v2015, 7
        %v2017 = vsub.s32 0, %v2016
        %v2018 = vrot.slane %v2013, %v2017
        %v2036 = vunpack.c.l.b16 %v1996
        %v2037 = vunpack.c.l.b16 %v1997
        %v2038 = vunpack.c.l.b16 %v1998
        %v2039 = vunpack.c.l.b16 %v1999
        %v2040 = vunpack.c.l.b16 %v2000
        %v2041 = vunpack.c.l.b16 %v2001
        %v2042 = vunpack.c.l.b16 %v2002
        %v2043 = vunpack.c.l.b16 %v2003
        %v2044 = vunpack.c.l.b16 %v2004
        %v2045 = vunpack.c.l.b16 %v2005
        %v2046 = vunpack.c.l.b16 %v2006
        %v2047 = vunpack.c.l.b16 %v2007
        %v2048 = vunpack.c.l.b16 %v2008
        %v2049 = vunpack.c.l.b16 %v2009
        %v2050 = vunpack.c.l.b16 %v2010
        %v2051 = vunpack.c.l.b16 %v2011
        %v2052 = vpack.c.b16 %v2037, %v2036
        %v2053 = vpack.c.b16 %v2039, %v2038
        %v2054 = vpack.c.b16 %v2041, %v2040
        %v2055 = vpack.c.b16 %v2043, %v2042
        %v2056 = vpack.c.b16 %v2045, %v2044
        %v2057 = vpack.c.b16 %v2047, %v2046
        %v2058 = vpack.c.b16 %v2049, %v2048
        %v2059 = vpack.c.b16 %v2051, %v2050
        %2068 = vmatprep.subr.bf16.mxu0 0
        %2069 = vmatpush1.bf16.msra.mxu0 %v2059
        %2070 = vmatprep.subr.bf16.mxu0 0
        %2071 = vmatpush1.bf16.msra.mxu0 %v2058
        %2072 = vmatprep.subr.bf16.mxu0 0
        %2073 = vmatpush1.bf16.msra.mxu0 %v2057
        %2074 = vmatprep.subr.bf16.mxu0 0
        %2075 = vmatpush1.bf16.msra.mxu0 %v2056
        %2076 = vmatprep.subr.bf16.mxu0 0
        %2077 = vmatpush1.bf16.msra.mxu0 %v2055
        %2078 = vmatprep.subr.bf16.mxu0 0
        %2079 = vmatpush1.bf16.msra.mxu0 %v2054
        %2080 = vmatprep.subr.bf16.mxu0 0
        %2081 = vmatpush1.bf16.msra.mxu0 %v2053
        %2082 = vmatprep.subr.bf16.mxu0 0
        %2083 = vmatpush1.bf16.msra.mxu0 %v2052
        %2084 = vmatprep.subr.bf16.mxu0 0
        %2085 = vmatpush2.bf16.msra.mxu0 0
        %2086 = vmatprep.subr.bf16.mxu0 0
        %2087 = vmatpush2.bf16.msra.mxu0 0
        %2088 = vmatprep.subr.bf16.mxu0 0
        %2089 = vmatpush2.bf16.msra.mxu0 0
        %2090 = vmatprep.subr.bf16.mxu0 0
        %2091 = vmatpush2.bf16.msra.mxu0 0
        %2092 = vmatprep.subr.bf16.mxu0 0
        %2093 = vmatpush2.bf16.msra.mxu0 0
        %2094 = vmatprep.subr.bf16.mxu0 0
        %2095 = vmatpush2.bf16.msra.mxu0 0
        %2096 = vmatprep.subr.bf16.mxu0 0
        %2097 = vmatpush2.bf16.msra.mxu0 0
        %2098 = vmatprep.subr.bf16.mxu0 0
        %2099 = vmatpush2.bf16.msra.mxu0 0
        %2100 = vmatprep.mubr.bf16.mxu0 0
        %2101 = vmatmul.mubr.bf16.gmra.mxu0 %v1993
        %v2102 = vpop.f32.mrf.mxu0
        %v2103 = vadd.f32 %v2018, %v2102
        %v2104 = vpop.f32.mrf.mxu0
        %v2105 = vpop.f32.mrf.mxu0
        %v2106 = vadd.f32 %v2018, %v2105
        %v2107 = vpop.f32.mrf.mxu0
        %2108 = vmatprep.mubr.bf16.mxu0 0
        %2109 = vmatmul.mubr.bf16.gmra.mxu0 %v1994
        %v2110 = vpop.f32.mrf.mxu0
        %v2111 = vadd.f32 %v2018, %v2110
        %v2112 = vpop.f32.mrf.mxu0
        %v2113 = vpop.f32.mrf.mxu0
        %v2114 = vadd.f32 %v2018, %v2113
        %v2115 = vpop.f32.mrf.mxu0
        %2116 = vdwg.mxu0
        %vm2117 = vcmp.gt.f32.partialorder %v2103, 0.0
        %vm2118 = vcmp.gt.f32.partialorder %v2106, 0.0
        %vm2119 = vcmp.gt.f32.partialorder %v2111, 0.0
        %vm2120 = vcmp.gt.f32.partialorder %v2114, 0.0
        %v2121 = vmin.f32 %v2103, 0.0
        %v2122 = vmin.f32 %v2106, 0.0
        %v2123 = vmin.f32 %v2111, 0.0
        %v2124 = vmin.f32 %v2114, 0.0
        %v2125 = vmul.f32 %v2121, 1.442695
        %v2126 = vpow.pop %v2125
        %v2127 = vmul.f32 %v2122, 1.442695
        %v2128 = vpow.pop %v2127
        %v2129 = vmul.f32 %v2123, 1.442695
        %v2130 = vpow.pop %v2129
        %v2131 = vmul.f32 %v2124, 1.442695
        %v2132 = vpow.pop %v2131
        %v2133 = vsub.f32 %v2126, 1.0
        %v2134 = vsub.f32 %v2128, 1.0
        %v2135 = vsub.f32 %v2130, 1.0
        %v2136 = vsub.f32 %v2132, 1.0
        %v2137 = vsel %vm2117, %v2103, %v2133
        %v2138 = vsel %vm2118, %v2106, %v2134
        %v2139 = vsel %vm2119, %v2111, %v2135
        %v2140 = vsel %vm2120, %v2114, %v2136
        %v2141 = vpack.c.bf16 %v2138, %v2137
        %v2142 = vpack.c.bf16 %v2140, %v2139
        %s2143 = scalar_lea.vmem [#allocation2], 576
        %v2144 = vld [vmem:[%s2143] sm:$0xf]
        %v2145 = vld [vmem:[%s2143 + $0x4] sm:$0xf]
        %v2146 = vld [vmem:[%s2143 + $0x8] sm:$0xf]
        %v2147 = vld [vmem:[%s2143 + $0xc] sm:$0xf]
        %v2148 = vld [vmem:[%s2143 + $0x10] sm:$0xf]
        %v2149 = vld [vmem:[%s2143 + $0x14] sm:$0xf]
        %v2150 = vld [vmem:[%s2143 + $0x18] sm:$0xf]
        %v2151 = vld [vmem:[%s2143 + $0x1c] sm:$0xf]
        %v2152 = vld [vmem:[%s2143 + $0x20] sm:$0xf]
        %v2153 = vld [vmem:[%s2143 + $0x24] sm:$0xf]
        %v2154 = vld [vmem:[%s2143 + $0x28] sm:$0xf]
        %v2155 = vld [vmem:[%s2143 + $0x2c] sm:$0xf]
        %v2156 = vld [vmem:[%s2143 + $0x30] sm:$0xf]
        %v2157 = vld [vmem:[%s2143 + $0x34] sm:$0xf]
        %v2158 = vld [vmem:[%s2143 + $0x38] sm:$0xf]
        %v2159 = vld [vmem:[%s2143 + $0x3c] sm:$0xf]
        %s2160 = scalar_lea.vmem %s4, 9
        %v2161 = vld [vmem:[%s2160] sm:$0x1]
        %v2163 = vlaneseq
        %v2164 = vshrl.u32 %v2163, 7
        %v2165 = vsub.s32 0, %v2164
        %v2166 = vrot.slane %v2161, %v2165
        %v2184 = vunpack.c.l.b16 %v2144
        %v2185 = vunpack.c.l.b16 %v2145
        %v2186 = vunpack.c.l.b16 %v2146
        %v2187 = vunpack.c.l.b16 %v2147
        %v2188 = vunpack.c.l.b16 %v2148
        %v2189 = vunpack.c.l.b16 %v2149
        %v2190 = vunpack.c.l.b16 %v2150
        %v2191 = vunpack.c.l.b16 %v2151
        %v2192 = vunpack.c.l.b16 %v2152
        %v2193 = vunpack.c.l.b16 %v2153
        %v2194 = vunpack.c.l.b16 %v2154
        %v2195 = vunpack.c.l.b16 %v2155
        %v2196 = vunpack.c.l.b16 %v2156
        %v2197 = vunpack.c.l.b16 %v2157
        %v2198 = vunpack.c.l.b16 %v2158
        %v2199 = vunpack.c.l.b16 %v2159
        %v2200 = vpack.c.b16 %v2185, %v2184
        %v2201 = vpack.c.b16 %v2187, %v2186
        %v2202 = vpack.c.b16 %v2189, %v2188
        %v2203 = vpack.c.b16 %v2191, %v2190
        %v2204 = vpack.c.b16 %v2193, %v2192
        %v2205 = vpack.c.b16 %v2195, %v2194
        %v2206 = vpack.c.b16 %v2197, %v2196
        %v2207 = vpack.c.b16 %v2199, %v2198
        %2216 = vmatprep.subr.bf16.mxu0 0
        %2217 = vmatpush1.bf16.msra.mxu0 %v2207
        %2218 = vmatprep.subr.bf16.mxu0 0
        %2219 = vmatpush1.bf16.msra.mxu0 %v2206
        %2220 = vmatprep.subr.bf16.mxu0 0
        %2221 = vmatpush1.bf16.msra.mxu0 %v2205
        %2222 = vmatprep.subr.bf16.mxu0 0
        %2223 = vmatpush1.bf16.msra.mxu0 %v2204
        %2224 = vmatprep.subr.bf16.mxu0 0
        %2225 = vmatpush1.bf16.msra.mxu0 %v2203
        %2226 = vmatprep.subr.bf16.mxu0 0
        %2227 = vmatpush1.bf16.msra.mxu0 %v2202
        %2228 = vmatprep.subr.bf16.mxu0 0
        %2229 = vmatpush1.bf16.msra.mxu0 %v2201
        %2230 = vmatprep.subr.bf16.mxu0 0
        %2231 = vmatpush1.bf16.msra.mxu0 %v2200
        %2232 = vmatprep.subr.bf16.mxu0 0
        %2233 = vmatpush2.bf16.msra.mxu0 0
        %2234 = vmatprep.subr.bf16.mxu0 0
        %2235 = vmatpush2.bf16.msra.mxu0 0
        %2236 = vmatprep.subr.bf16.mxu0 0
        %2237 = vmatpush2.bf16.msra.mxu0 0
        %2238 = vmatprep.subr.bf16.mxu0 0
        %2239 = vmatpush2.bf16.msra.mxu0 0
        %2240 = vmatprep.subr.bf16.mxu0 0
        %2241 = vmatpush2.bf16.msra.mxu0 0
        %2242 = vmatprep.subr.bf16.mxu0 0
        %2243 = vmatpush2.bf16.msra.mxu0 0
        %2244 = vmatprep.subr.bf16.mxu0 0
        %2245 = vmatpush2.bf16.msra.mxu0 0
        %2246 = vmatprep.subr.bf16.mxu0 0
        %2247 = vmatpush2.bf16.msra.mxu0 0
        %2248 = vmatprep.mubr.bf16.mxu0 0
        %2249 = vmatmul.mubr.bf16.gmra.mxu0 %v2141
        %v2250 = vpop.f32.mrf.mxu0
        %v2251 = vadd.f32 %v2166, %v2250
        %v2252 = vpop.f32.mrf.mxu0
        %v2253 = vpop.f32.mrf.mxu0
        %v2254 = vadd.f32 %v2166, %v2253
        %v2255 = vpop.f32.mrf.mxu0
        %2256 = vmatprep.mubr.bf16.mxu0 0
        %2257 = vmatmul.mubr.bf16.gmra.mxu0 %v2142
        %v2258 = vpop.f32.mrf.mxu0
        %v2259 = vadd.f32 %v2166, %v2258
        %v2260 = vpop.f32.mrf.mxu0
        %v2261 = vpop.f32.mrf.mxu0
        %v2262 = vadd.f32 %v2166, %v2261
        %v2263 = vpop.f32.mrf.mxu0
        %2264 = vdwg.mxu0
        %v2265 = vadd.f32 %v1955, %v2251
        %v2266 = vadd.f32 %v1958, %v2254
        %v2267 = vadd.f32 %v1963, %v2259
        %v2268 = vadd.f32 %v1966, %v2262
        %vm2269 = vcmp.gt.f32.partialorder %v2265, 0.0
        %vm2270 = vcmp.gt.f32.partialorder %v2266, 0.0
        %vm2271 = vcmp.gt.f32.partialorder %v2267, 0.0
        %vm2272 = vcmp.gt.f32.partialorder %v2268, 0.0
        %v2273 = vmin.f32 %v2265, 0.0
        %v2274 = vmin.f32 %v2266, 0.0
        %v2275 = vmin.f32 %v2267, 0.0
        %v2276 = vmin.f32 %v2268, 0.0
        %v2277 = vmul.f32 %v2273, 1.442695
        %v2278 = vpow.pop %v2277
        %v2279 = vmul.f32 %v2274, 1.442695
        %v2280 = vpow.pop %v2279
        %v2281 = vmul.f32 %v2275, 1.442695
        %v2282 = vpow.pop %v2281
        %v2283 = vmul.f32 %v2276, 1.442695
        %v2284 = vpow.pop %v2283
        %v2285 = vsub.f32 %v2278, 1.0
        %v2286 = vsub.f32 %v2280, 1.0
        %v2287 = vsub.f32 %v2282, 1.0
        %v2288 = vsub.f32 %v2284, 1.0
        %v2289 = vsel %vm2269, %v2265, %v2285
        %v2290 = vsel %vm2270, %v2266, %v2286
        %v2291 = vsel %vm2271, %v2267, %v2287
        %v2292 = vsel %vm2272, %v2268, %v2288
        %v2293 = vpack.c.bf16 %v2290, %v2289
        %v2294 = vpack.c.bf16 %v2292, %v2291
        %s2295 = scalar_lea.vmem [#allocation2], 640
        %v2296 = vld [vmem:[%s2295] sm:$0xf]
        %v2297 = vld [vmem:[%s2295 + $0x4] sm:$0xf]
        %v2298 = vld [vmem:[%s2295 + $0x8] sm:$0xf]
        %v2299 = vld [vmem:[%s2295 + $0xc] sm:$0xf]
        %v2300 = vld [vmem:[%s2295 + $0x10] sm:$0xf]
        %v2301 = vld [vmem:[%s2295 + $0x14] sm:$0xf]
        %v2302 = vld [vmem:[%s2295 + $0x18] sm:$0xf]
        %v2303 = vld [vmem:[%s2295 + $0x1c] sm:$0xf]
        %v2304 = vld [vmem:[%s2295 + $0x20] sm:$0xf]
        %v2305 = vld [vmem:[%s2295 + $0x24] sm:$0xf]
        %v2306 = vld [vmem:[%s2295 + $0x28] sm:$0xf]
        %v2307 = vld [vmem:[%s2295 + $0x2c] sm:$0xf]
        %v2308 = vld [vmem:[%s2295 + $0x30] sm:$0xf]
        %v2309 = vld [vmem:[%s2295 + $0x34] sm:$0xf]
        %v2310 = vld [vmem:[%s2295 + $0x38] sm:$0xf]
        %v2311 = vld [vmem:[%s2295 + $0x3c] sm:$0xf]
        %s2312 = scalar_lea.vmem %s4, 10
        %v2313 = vld [vmem:[%s2312] sm:$0x1]
        %v2315 = vlaneseq
        %v2316 = vshrl.u32 %v2315, 7
        %v2317 = vsub.s32 0, %v2316
        %v2318 = vrot.slane %v2313, %v2317
        %v2336 = vunpack.c.l.b16 %v2296
        %v2337 = vunpack.c.l.b16 %v2297
        %v2338 = vunpack.c.l.b16 %v2298
        %v2339 = vunpack.c.l.b16 %v2299
        %v2340 = vunpack.c.l.b16 %v2300
        %v2341 = vunpack.c.l.b16 %v2301
        %v2342 = vunpack.c.l.b16 %v2302
        %v2343 = vunpack.c.l.b16 %v2303
        %v2344 = vunpack.c.l.b16 %v2304
        %v2345 = vunpack.c.l.b16 %v2305
        %v2346 = vunpack.c.l.b16 %v2306
        %v2347 = vunpack.c.l.b16 %v2307
        %v2348 = vunpack.c.l.b16 %v2308
        %v2349 = vunpack.c.l.b16 %v2309
        %v2350 = vunpack.c.l.b16 %v2310
        %v2351 = vunpack.c.l.b16 %v2311
        %v2352 = vpack.c.b16 %v2337, %v2336
        %v2353 = vpack.c.b16 %v2339, %v2338
        %v2354 = vpack.c.b16 %v2341, %v2340
        %v2355 = vpack.c.b16 %v2343, %v2342
        %v2356 = vpack.c.b16 %v2345, %v2344
        %v2357 = vpack.c.b16 %v2347, %v2346
        %v2358 = vpack.c.b16 %v2349, %v2348
        %v2359 = vpack.c.b16 %v2351, %v2350
        %2368 = vmatprep.subr.bf16.mxu0 0
        %2369 = vmatpush1.bf16.msra.mxu0 %v2359
        %2370 = vmatprep.subr.bf16.mxu0 0
        %2371 = vmatpush1.bf16.msra.mxu0 %v2358
        %2372 = vmatprep.subr.bf16.mxu0 0
        %2373 = vmatpush1.bf16.msra.mxu0 %v2357
        %2374 = vmatprep.subr.bf16.mxu0 0
        %2375 = vmatpush1.bf16.msra.mxu0 %v2356
        %2376 = vmatprep.subr.bf16.mxu0 0
        %2377 = vmatpush1.bf16.msra.mxu0 %v2355
        %2378 = vmatprep.subr.bf16.mxu0 0
        %2379 = vmatpush1.bf16.msra.mxu0 %v2354
        %2380 = vmatprep.subr.bf16.mxu0 0
        %2381 = vmatpush1.bf16.msra.mxu0 %v2353
        %2382 = vmatprep.subr.bf16.mxu0 0
        %2383 = vmatpush1.bf16.msra.mxu0 %v2352
        %2384 = vmatprep.subr.bf16.mxu0 0
        %2385 = vmatpush2.bf16.msra.mxu0 0
        %2386 = vmatprep.subr.bf16.mxu0 0
        %2387 = vmatpush2.bf16.msra.mxu0 0
        %2388 = vmatprep.subr.bf16.mxu0 0
        %2389 = vmatpush2.bf16.msra.mxu0 0
        %2390 = vmatprep.subr.bf16.mxu0 0
        %2391 = vmatpush2.bf16.msra.mxu0 0
        %2392 = vmatprep.subr.bf16.mxu0 0
        %2393 = vmatpush2.bf16.msra.mxu0 0
        %2394 = vmatprep.subr.bf16.mxu0 0
        %2395 = vmatpush2.bf16.msra.mxu0 0
        %2396 = vmatprep.subr.bf16.mxu0 0
        %2397 = vmatpush2.bf16.msra.mxu0 0
        %2398 = vmatprep.subr.bf16.mxu0 0
        %2399 = vmatpush2.bf16.msra.mxu0 0
        %2400 = vmatprep.mubr.bf16.mxu0 0
        %2401 = vmatmul.mubr.bf16.gmra.mxu0 %v2293
        %v2402 = vpop.f32.mrf.mxu0
        %v2403 = vadd.f32 %v2318, %v2402
        %v2404 = vpop.f32.mrf.mxu0
        %v2405 = vpop.f32.mrf.mxu0
        %v2406 = vadd.f32 %v2318, %v2405
        %v2407 = vpop.f32.mrf.mxu0
        %2408 = vmatprep.mubr.bf16.mxu0 0
        %2409 = vmatmul.mubr.bf16.gmra.mxu0 %v2294
        %v2410 = vpop.f32.mrf.mxu0
        %v2411 = vadd.f32 %v2318, %v2410
        %v2412 = vpop.f32.mrf.mxu0
        %v2413 = vpop.f32.mrf.mxu0
        %v2414 = vadd.f32 %v2318, %v2413
        %v2415 = vpop.f32.mrf.mxu0
        %2416 = vdwg.mxu0
        %vm2417 = vcmp.gt.f32.partialorder %v2403, 0.0
        %vm2418 = vcmp.gt.f32.partialorder %v2406, 0.0
        %vm2419 = vcmp.gt.f32.partialorder %v2411, 0.0
        %vm2420 = vcmp.gt.f32.partialorder %v2414, 0.0
        %v2421 = vmin.f32 %v2403, 0.0
        %v2422 = vmin.f32 %v2406, 0.0
        %v2423 = vmin.f32 %v2411, 0.0
        %v2424 = vmin.f32 %v2414, 0.0
        %v2425 = vmul.f32 %v2421, 1.442695
        %v2426 = vpow.pop %v2425
        %v2427 = vmul.f32 %v2422, 1.442695
        %v2428 = vpow.pop %v2427
        %v2429 = vmul.f32 %v2423, 1.442695
        %v2430 = vpow.pop %v2429
        %v2431 = vmul.f32 %v2424, 1.442695
        %v2432 = vpow.pop %v2431
        %v2433 = vsub.f32 %v2426, 1.0
        %v2434 = vsub.f32 %v2428, 1.0
        %v2435 = vsub.f32 %v2430, 1.0
        %v2436 = vsub.f32 %v2432, 1.0
        %v2437 = vsel %vm2417, %v2403, %v2433
        %v2438 = vsel %vm2418, %v2406, %v2434
        %v2439 = vsel %vm2419, %v2411, %v2435
        %v2440 = vsel %vm2420, %v2414, %v2436
        %v2441 = vpack.c.bf16 %v2438, %v2437
        %v2442 = vpack.c.bf16 %v2440, %v2439
        %s2443 = scalar_lea.vmem [#allocation2], 704
        %v2444 = vld [vmem:[%s2443] sm:$0xf]
        %v2445 = vld [vmem:[%s2443 + $0x4] sm:$0xf]
        %v2446 = vld [vmem:[%s2443 + $0x8] sm:$0xf]
        %v2447 = vld [vmem:[%s2443 + $0xc] sm:$0xf]
        %v2448 = vld [vmem:[%s2443 + $0x10] sm:$0xf]
        %v2449 = vld [vmem:[%s2443 + $0x14] sm:$0xf]
        %v2450 = vld [vmem:[%s2443 + $0x18] sm:$0xf]
        %v2451 = vld [vmem:[%s2443 + $0x1c] sm:$0xf]
        %v2452 = vld [vmem:[%s2443 + $0x20] sm:$0xf]
        %v2453 = vld [vmem:[%s2443 + $0x24] sm:$0xf]
        %v2454 = vld [vmem:[%s2443 + $0x28] sm:$0xf]
        %v2455 = vld [vmem:[%s2443 + $0x2c] sm:$0xf]
        %v2456 = vld [vmem:[%s2443 + $0x30] sm:$0xf]
        %v2457 = vld [vmem:[%s2443 + $0x34] sm:$0xf]
        %v2458 = vld [vmem:[%s2443 + $0x38] sm:$0xf]
        %v2459 = vld [vmem:[%s2443 + $0x3c] sm:$0xf]
        %s2460 = scalar_lea.vmem %s4, 11
        %v2461 = vld [vmem:[%s2460] sm:$0x1]
        %v2463 = vlaneseq
        %v2464 = vshrl.u32 %v2463, 7
        %v2465 = vsub.s32 0, %v2464
        %v2466 = vrot.slane %v2461, %v2465
        %v2484 = vunpack.c.l.b16 %v2444
        %v2485 = vunpack.c.l.b16 %v2445
        %v2486 = vunpack.c.l.b16 %v2446
        %v2487 = vunpack.c.l.b16 %v2447
        %v2488 = vunpack.c.l.b16 %v2448
        %v2489 = vunpack.c.l.b16 %v2449
        %v2490 = vunpack.c.l.b16 %v2450
        %v2491 = vunpack.c.l.b16 %v2451
        %v2492 = vunpack.c.l.b16 %v2452
        %v2493 = vunpack.c.l.b16 %v2453
        %v2494 = vunpack.c.l.b16 %v2454
        %v2495 = vunpack.c.l.b16 %v2455
        %v2496 = vunpack.c.l.b16 %v2456
        %v2497 = vunpack.c.l.b16 %v2457
        %v2498 = vunpack.c.l.b16 %v2458
        %v2499 = vunpack.c.l.b16 %v2459
        %v2500 = vpack.c.b16 %v2485, %v2484
        %v2501 = vpack.c.b16 %v2487, %v2486
        %v2502 = vpack.c.b16 %v2489, %v2488
        %v2503 = vpack.c.b16 %v2491, %v2490
        %v2504 = vpack.c.b16 %v2493, %v2492
        %v2505 = vpack.c.b16 %v2495, %v2494
        %v2506 = vpack.c.b16 %v2497, %v2496
        %v2507 = vpack.c.b16 %v2499, %v2498
        %2516 = vmatprep.subr.bf16.mxu0 0
        %2517 = vmatpush1.bf16.msra.mxu0 %v2507
        %2518 = vmatprep.subr.bf16.mxu0 0
        %2519 = vmatpush1.bf16.msra.mxu0 %v2506
        %2520 = vmatprep.subr.bf16.mxu0 0
        %2521 = vmatpush1.bf16.msra.mxu0 %v2505
        %2522 = vmatprep.subr.bf16.mxu0 0
        %2523 = vmatpush1.bf16.msra.mxu0 %v2504
        %2524 = vmatprep.subr.bf16.mxu0 0
        %2525 = vmatpush1.bf16.msra.mxu0 %v2503
        %2526 = vmatprep.subr.bf16.mxu0 0
        %2527 = vmatpush1.bf16.msra.mxu0 %v2502
        %2528 = vmatprep.subr.bf16.mxu0 0
        %2529 = vmatpush1.bf16.msra.mxu0 %v2501
        %2530 = vmatprep.subr.bf16.mxu0 0
        %2531 = vmatpush1.bf16.msra.mxu0 %v2500
        %2532 = vmatprep.subr.bf16.mxu0 0
        %2533 = vmatpush2.bf16.msra.mxu0 0
        %2534 = vmatprep.subr.bf16.mxu0 0
        %2535 = vmatpush2.bf16.msra.mxu0 0
        %2536 = vmatprep.subr.bf16.mxu0 0
        %2537 = vmatpush2.bf16.msra.mxu0 0
        %2538 = vmatprep.subr.bf16.mxu0 0
        %2539 = vmatpush2.bf16.msra.mxu0 0
        %2540 = vmatprep.subr.bf16.mxu0 0
        %2541 = vmatpush2.bf16.msra.mxu0 0
        %2542 = vmatprep.subr.bf16.mxu0 0
        %2543 = vmatpush2.bf16.msra.mxu0 0
        %2544 = vmatprep.subr.bf16.mxu0 0
        %2545 = vmatpush2.bf16.msra.mxu0 0
        %2546 = vmatprep.subr.bf16.mxu0 0
        %2547 = vmatpush2.bf16.msra.mxu0 0
        %2548 = vmatprep.mubr.bf16.mxu0 0
        %2549 = vmatmul.mubr.bf16.gmra.mxu0 %v2441
        %v2550 = vpop.f32.mrf.mxu0
        %v2551 = vadd.f32 %v2466, %v2550
        %v2552 = vpop.f32.mrf.mxu0
        %v2553 = vpop.f32.mrf.mxu0
        %v2554 = vadd.f32 %v2466, %v2553
        %v2555 = vpop.f32.mrf.mxu0
        %2556 = vmatprep.mubr.bf16.mxu0 0
        %2557 = vmatmul.mubr.bf16.gmra.mxu0 %v2442
        %v2558 = vpop.f32.mrf.mxu0
        %v2559 = vadd.f32 %v2466, %v2558
        %v2560 = vpop.f32.mrf.mxu0
        %v2561 = vpop.f32.mrf.mxu0
        %v2562 = vadd.f32 %v2466, %v2561
        %v2563 = vpop.f32.mrf.mxu0
        %2564 = vdwg.mxu0
        %v2565 = vadd.f32 %v2265, %v2551
        %v2566 = vadd.f32 %v2266, %v2554
        %v2567 = vadd.f32 %v2267, %v2559
        %v2568 = vadd.f32 %v2268, %v2562
        %v2569 = vpack.c.bf16 %v2566, %v2565
        %v2570 = vpack.c.bf16 %v2568, %v2567
        %s2571 = scalar_lea.vmem [#allocation5], 128
        %v2572 = vld [vmem:[%s2571] sm:$0xf]
        %v2573 = vld [vmem:[%s2571 + $0x4] sm:$0xf]
        %v2574 = vld [vmem:[%s2571 + $0x8] sm:$0xf]
        %v2575 = vld [vmem:[%s2571 + $0xc] sm:$0xf]
        %v2576 = vld [vmem:[%s2571 + $0x10] sm:$0xf]
        %v2577 = vld [vmem:[%s2571 + $0x14] sm:$0xf]
        %v2578 = vld [vmem:[%s2571 + $0x18] sm:$0xf]
        %v2579 = vld [vmem:[%s2571 + $0x1c] sm:$0xf]
        %v2580 = vld [vmem:[%s2571 + $0x20] sm:$0xf]
        %v2581 = vld [vmem:[%s2571 + $0x24] sm:$0xf]
        %v2582 = vld [vmem:[%s2571 + $0x28] sm:$0xf]
        %v2583 = vld [vmem:[%s2571 + $0x2c] sm:$0xf]
        %v2584 = vld [vmem:[%s2571 + $0x30] sm:$0xf]
        %v2585 = vld [vmem:[%s2571 + $0x34] sm:$0xf]
        %v2586 = vld [vmem:[%s2571 + $0x38] sm:$0xf]
        %v2587 = vld [vmem:[%s2571 + $0x3c] sm:$0xf]
        %s2588 = scalar_lea.vmem %s6, 2
        %v2589 = vld [vmem:[%s2588] sm:$0x1]
        %v2591 = vlaneseq
        %v2592 = vshrl.u32 %v2591, 7
        %v2593 = vsub.s32 0, %v2592
        %v2594 = vrot.slane %v2589, %v2593
        %v2612 = vunpack.c.l.b16 %v2572
        %v2613 = vunpack.c.l.b16 %v2573
        %v2614 = vunpack.c.l.b16 %v2574
        %v2615 = vunpack.c.l.b16 %v2575
        %v2616 = vunpack.c.l.b16 %v2576
        %v2617 = vunpack.c.l.b16 %v2577
        %v2618 = vunpack.c.l.b16 %v2578
        %v2619 = vunpack.c.l.b16 %v2579
        %v2620 = vunpack.c.l.b16 %v2580
        %v2621 = vunpack.c.l.b16 %v2581
        %v2622 = vunpack.c.l.b16 %v2582
        %v2623 = vunpack.c.l.b16 %v2583
        %v2624 = vunpack.c.l.b16 %v2584
        %v2625 = vunpack.c.l.b16 %v2585
        %v2626 = vunpack.c.l.b16 %v2586
        %v2627 = vunpack.c.l.b16 %v2587
        %v2628 = vpack.c.b16 %v2613, %v2612
        %v2629 = vpack.c.b16 %v2615, %v2614
        %v2630 = vpack.c.b16 %v2617, %v2616
        %v2631 = vpack.c.b16 %v2619, %v2618
        %v2632 = vpack.c.b16 %v2621, %v2620
        %v2633 = vpack.c.b16 %v2623, %v2622
        %v2634 = vpack.c.b16 %v2625, %v2624
        %v2635 = vpack.c.b16 %v2627, %v2626
        %2644 = vmatprep.subr.bf16.mxu0 0
        %2645 = vmatpush1.bf16.msra.mxu0 %v2635
        %2646 = vmatprep.subr.bf16.mxu0 0
        %2647 = vmatpush1.bf16.msra.mxu0 %v2634
        %2648 = vmatprep.subr.bf16.mxu0 0
        %2649 = vmatpush1.bf16.msra.mxu0 %v2633
        %2650 = vmatprep.subr.bf16.mxu0 0
        %2651 = vmatpush1.bf16.msra.mxu0 %v2632
        %2652 = vmatprep.subr.bf16.mxu0 0
        %2653 = vmatpush1.bf16.msra.mxu0 %v2631
        %2654 = vmatprep.subr.bf16.mxu0 0
        %2655 = vmatpush1.bf16.msra.mxu0 %v2630
        %2656 = vmatprep.subr.bf16.mxu0 0
        %2657 = vmatpush1.bf16.msra.mxu0 %v2629
        %2658 = vmatprep.subr.bf16.mxu0 0
        %2659 = vmatpush1.bf16.msra.mxu0 %v2628
        %2660 = vmatprep.subr.bf16.mxu0 0
        %2661 = vmatpush2.bf16.msra.mxu0 0
        %2662 = vmatprep.subr.bf16.mxu0 0
        %2663 = vmatpush2.bf16.msra.mxu0 0
        %2664 = vmatprep.subr.bf16.mxu0 0
        %2665 = vmatpush2.bf16.msra.mxu0 0
        %2666 = vmatprep.subr.bf16.mxu0 0
        %2667 = vmatpush2.bf16.msra.mxu0 0
        %2668 = vmatprep.subr.bf16.mxu0 0
        %2669 = vmatpush2.bf16.msra.mxu0 0
        %2670 = vmatprep.subr.bf16.mxu0 0
        %2671 = vmatpush2.bf16.msra.mxu0 0
        %2672 = vmatprep.subr.bf16.mxu0 0
        %2673 = vmatpush2.bf16.msra.mxu0 0
        %2674 = vmatprep.subr.bf16.mxu0 0
        %2675 = vmatpush2.bf16.msra.mxu0 0
        %2676 = vmatprep.mubr.bf16.mxu0 0
        %2677 = vmatmul.mubr.bf16.gmra.mxu0 %v2569
        %v2678 = vpop.f32.mrf.mxu0
        %v2679 = vadd.f32 %v2594, %v2678
        %v2680 = vpop.f32.mrf.mxu0
        %v2681 = vpop.f32.mrf.mxu0
        %v2682 = vadd.f32 %v2594, %v2681
        %v2683 = vpop.f32.mrf.mxu0
        %2684 = vmatprep.mubr.bf16.mxu0 0
        %2685 = vmatmul.mubr.bf16.gmra.mxu0 %v2570
        %v2686 = vpop.f32.mrf.mxu0
        %v2687 = vadd.f32 %v2594, %v2686
        %v2688 = vpop.f32.mrf.mxu0
        %v2689 = vpop.f32.mrf.mxu0
        %v2690 = vadd.f32 %v2594, %v2689
        %v2691 = vpop.f32.mrf.mxu0
        %2692 = vdwg.mxu0
        %v2693 = vadd.f32 %v1903, %v2679
        %v2694 = vadd.f32 %v1904, %v2682
        %v2695 = vadd.f32 %v1905, %v2687
        %v2696 = vadd.f32 %v1906, %v2690
        %v2697 = vmul.f32 %v2693, 0.33333334
        %v2698 = vmul.f32 %v2694, 0.33333334
        %v2699 = vmul.f32 %v2695, 0.33333334
        %v2700 = vmul.f32 %v2696, 0.33333334
        %2701 = vst [vmem:[%s302] sm:$0xff] %v2697
        %2702 = vst [vmem:[%s302 + $0x8] sm:$0xff] %v2698
        %2703 = vst [vmem:[%s302 + $0x10] sm:$0xff] %v2699
        %2704 = vst [vmem:[%s302 + $0x18] sm:$0xff] %v2700
        %s2705 = sand.u32 %s183, 1
        %s2706 = scalar_lea.sflag [#allocation4], %s2705
        %s2707 = sand.u32 %s183, 1
        %s2708 = smul.addr %s2707, 32
        %s2709 = scalar_lea.vmem [#allocation7], %s2708
        // Predicated region
        $region57: #{tpu_custom_call.1} parent=47 // pred_check
          %p2710 = pneg %p193
        $region58: #{tpu_custom_call.1} parent=47 // pred_check_branch
          %2712 = sbr.rel (%p2710) target = $region60
        $region59: #{tpu_custom_call.1} parent=47 // pred_region
          %s2713 = smul.u32 4, %s23
          %s2715 = ssub.s32 512, 512
          %2716 = vsyncadd %s2706, %s2715
          %s2717 = smul.addr %s2713, 128
          %s2718 = scalar_lea.hbm %s7, %s2717
          %s2719 = sshll.u32 %s2709, 4
          %s2720 = int_to_ptr.vmem [resolvable:$true] %s2719
          %2725 = dma.vmem_to_hbm [thread:$0]  %s2720, 512, %s2718, %s2706, 128, 128, 8
        $region60: #{tpu_custom_call.1} parent=47 // pred_fallthru
          _
      $region48: #{tpu_custom_call.1} parent=5 // pred_fallthru
        _
      %p2726 = scmp.le.s32.totalorder 2, %s18
      // Predicated region
      $region61: #{tpu_custom_call.1} parent=5 // pred_check
        %p2727 = pneg %p2726
      $region62: #{tpu_custom_call.1} parent=5 // pred_check_branch
        %2729 = sbr.rel (%p2727) target = $region64
      $region63: #{tpu_custom_call.1} parent=5 // pred_region
        %s2730 = ssub.s32 %s18, 2
        // Predicated region
        $region65: #{tpu_custom_call.1} parent=63 // pred_check
          %p2731 = pneg %p199
        $region66: #{tpu_custom_call.1} parent=63 // pred_check_branch
          %2733 = sbr.rel (%p2731) target = $region68
        $region67: #{tpu_custom_call.1} parent=63 // pred_region
          %s2734 = sand.u32 %s184, 1
          %s2735 = scalar_lea.sflag [#allocation4], %s2734
          %s2736 = sand.u32 %s184, 1
          %s2737 = smul.addr %s2736, 32
          %s2738 = scalar_lea.vmem [#allocation7], %s2737
          %2739 = dma.done %s2735, 512
        $region68: #{tpu_custom_call.1} parent=63 // pred_fallthru
          _
      $region64: #{tpu_custom_call.1} parent=5 // pred_fallthru
        _
    $region6: #{tpu_custom_call.1} parent=1 // loop_footer
      %s22 = sadd.s32 1, %s18
    $region7: #{tpu_custom_call.1} parent=1 // loop_footer_branch
      %17 = sbr.rel target = $region3
    $region8: #{tpu_custom_call.1} parent=1 // loop_exit
      _
    %2740 = vsyncpa [#allocation3], 1
    %s2741 = scalar_lea.sflag [#allocation3], 1
    %2742 = vsyncpa %s2741, 1
    %2743 = vsyncpa [#allocation6], 1
    %2744 = vsyncpa [#allocation4], 1
    %s2745 = scalar_lea.sflag [#allocation4], 1
    %2746 = vsyncpa %s2745, 1

</llo_original>
